<compile_context>
chip_gen: v7x
topology: tpu7x:2x2x1
jax: 0.10.0
libtpu: 0.0.40
codegen_flags: <defaults>
</compile_context>

<pallas_src>
import functools

import jax
import jax.numpy as jnp
from jax.experimental import pallas as pl
from jax.experimental.pallas import tpu as pltpu

HIDDEN = 512


def _round_up(x, m):
    return (x + m - 1) // m * m


def _pad2(a, rows, cols):
    r, c = a.shape
    return jnp.pad(a, ((0, rows - r), (0, cols - c)))


def _default_batch_tile(B):
    # Aim for >= 2 grid steps when the batch allows it (keeps the x/out DMA
    # pipeline fed and lets v7x's two TensorCores split the parallel axis),
    # but cap at 1024 rows so fixed per-step overhead is well amortized.
    half = _round_up(max(-(-B // 2), 16), 16)  # multiple of 16 (bf16 sublanes)
    return min(1024, half)


def _autoencoder_kernel(x_ref,
                        w1_ref, b1_ref,
                        w2_ref, b2_ref,
                        w3_ref, b3_ref,
                        w4_ref, b4_ref,
                        o_ref):
    # Cast MXU operands to bf16 in-kernel; accumulate in f32; bias/ReLU in f32.
    x = x_ref[...].astype(jnp.bfloat16)

    h1 = jnp.dot(x, w1_ref[...], preferred_element_type=jnp.float32) + b1_ref[...]
    h1 = jnp.maximum(h1, 0.0).astype(jnp.bfloat16)

    z = jnp.dot(h1, w2_ref[...], preferred_element_type=jnp.float32) + b2_ref[...]
    z = jnp.maximum(z, 0.0).astype(jnp.bfloat16)

    h2 = jnp.dot(z, w3_ref[...], preferred_element_type=jnp.float32) + b3_ref[...]
    h2 = jnp.maximum(h2, 0.0).astype(jnp.bfloat16)

    y = jnp.dot(h2, w4_ref[...], preferred_element_type=jnp.float32) + b4_ref[...]
    # sigmoid(y) = 1 / (1 + exp(-y)): exp on the EUP, approx reciprocal on the
    # EUP as well -> no VPU divide sequence in the epilogue.
    o_ref[...] = pl.reciprocal(1.0 + jnp.exp(-y), approx=True).astype(o_ref.dtype)


def prepare_params(params):
    """One-time weight/bias prep (pad encoding dim to a lane multiple, cast
    matmul operands to bf16). Cache the result and reuse it across forward
    calls so the hot path carries no pad/cast XLA passes."""
    D_in, H = params["w1"].shape
    E = params["w2"].shape[1]
    Ep = _round_up(E, 128)  # lane-dense bottleneck; zero padding is exact.
    return dict(
        w1=params["w1"].astype(jnp.bfloat16),                # (D_in, H)
        b1=params["b1"].astype(jnp.float32),                 # (1, H)
        w2=_pad2(params["w2"], H, Ep).astype(jnp.bfloat16),  # (H, Ep)
        b2=_pad2(params["b2"], 1, Ep).astype(jnp.float32),   # (1, Ep)
        w3=_pad2(params["w3"], Ep, H).astype(jnp.bfloat16),  # (Ep, H)
        b3=params["b3"].astype(jnp.float32),                 # (1, H)
        w4=params["w4"].astype(jnp.bfloat16),                # (H, D_in)
        b4=params["b4"].astype(jnp.float32),                 # (1, D_in)
    )


@functools.partial(jax.jit, static_argnames=("batch_tile",))
def autoencoder_forward(x, prepared, *, batch_tile=None):
    """x: (B, input_dim) float32. prepared: output of prepare_params()."""
    B, D_in = x.shape
    H = prepared["w1"].shape[1]
    assert prepared["w1"].shape[0] == D_in and prepared["w4"].shape[1] == D_in

    if batch_tile is None:
        batch_tile = _default_batch_tile(B)
    assert batch_tile % 16 == 0, "batch_tile must be a multiple of 16 for bf16 tiles"
    B_pad = _round_up(B, batch_tile)
    n_steps = B_pad // batch_tile

    # Only the batch dim ever needs padding (zero rows -> discarded below).
    x_p = x if B_pad == B else jnp.pad(x, ((0, B_pad - B), (0, 0)))

    w1, b1 = prepared["w1"], prepared["b1"]
    w2, b2 = prepared["w2"], prepared["b2"]
    w3, b3 = prepared["w3"], prepared["b3"]
    w4, b4 = prepared["w4"], prepared["b4"]
    Ep = w2.shape[1]

    full = lambda i: (0, 0)  # weights/biases: single full-array block, VMEM-resident

    flops = 2 * B_pad * (D_in * H + H * Ep + Ep * H + H * D_in)
    transcendentals = B_pad * D_in  # exp in the sigmoid
    bytes_accessed = (
        x_p.size * 4
        + (w1.size + w2.size + w3.size + w4.size) * 2
        + (b1.size + b2.size + b3.size + b4.size) * 4
        + B_pad * D_in * 2
    )

    out = pl.pallas_call(
        _autoencoder_kernel,
        # bf16 output: halves the largest HBM stream; emitted at the true
        # feature width so no padded slab / extra XLA slice pass is needed.
        out_shape=jax.ShapeDtypeStruct((B_pad, D_in), jnp.bfloat16),
        grid_spec=pltpu.PrefetchScalarGridSpec(
            num_scalar_prefetch=0,
            grid=(n_steps,),
            in_specs=[
                # x tile: last dim equals the full array dim -> legal without
                # 128-padding; cast to bf16 inside the kernel.
                pl.BlockSpec((batch_tile, D_in), lambda i: (i, 0)),
                pl.BlockSpec(w1.shape, full), pl.BlockSpec(b1.shape, full),
                pl.BlockSpec(w2.shape, full), pl.BlockSpec(b2.shape, full),
                pl.BlockSpec(w3.shape, full), pl.BlockSpec(b3.shape, full),
                pl.BlockSpec(w4.shape, full), pl.BlockSpec(b4.shape, full),
            ],
            out_specs=pl.BlockSpec((batch_tile, D_in), lambda i: (i, 0)),
        ),
        compiler_params=pltpu.CompilerParams(
            dimension_semantics=("parallel",),
            # Footprint (x/out double-buffers + resident weights + f32
            # intermediates) stays well under 32 MiB even at 1024-row tiles;
            # re-check against v7x's 64 MiB VMEM before pushing past ~2048.
            vmem_limit_bytes=32 * 1024 * 1024,
        ),
        cost_estimate=pl.CostEstimate(
            flops=flops,
            transcendentals=transcendentals,
            bytes_accessed=bytes_accessed,
        ),
    )(x_p, w1, b1, w2, b2, w3, b3, w4, b4)

    return out if B_pad == B else out[:B]


def init_params(key, input_dim, encoding_dim, hidden=HIDDEN):
    """PyTorch nn.Linear-style init (U[-1/sqrt(fan_in), 1/sqrt(fan_in)]).
    Weights stored as (in_features, out_features), biases as (1, out_features)."""
    def linear(k, fan_in, fan_out):
        kw, kb = jax.random.split(k)
        bound = 1.0 / jnp.sqrt(fan_in)
        w = jax.random.uniform(kw, (fan_in, fan_out), jnp.float32, -bound, bound)
        b = jax.random.uniform(kb, (1, fan_out), jnp.float32, -bound, bound)
        return w, b

    k1, k2, k3, k4 = jax.random.split(key, 4)
    w1, b1 = linear(k1, input_dim, hidden)        # encoder layer 0
    w2, b2 = linear(k2, hidden, encoding_dim)     # encoder layer 2
    w3, b3 = linear(k3, encoding_dim, hidden)     # decoder layer 0
    w4, b4 = linear(k4, hidden, input_dim)        # decoder layer 2
    return dict(w1=w1, b1=b1, w2=w2, b2=b2, w3=w3, b3=b3, w4=w4, b4=b4)


def reference_forward(x, p):
    h1 = jnp.maximum(x @ p["w1"] + p["b1"], 0.0)
    z = jnp.maximum(h1 @ p["w2"] + p["b2"], 0.0)
    h2 = jnp.maximum(z @ p["w3"] + p["b3"], 0.0)
    return jax.nn.sigmoid(h2 @ p["w4"] + p["b4"])


if __name__ == "__main__":
    # Tabular autoencoder shapes: 512-row batch, 64 input features,
    # encoding_dim=100 (as in the original script), hidden=512.
    # batch=512 -> 256-row tile, 2 grid steps (pipelined, megacore-shardable).
    batch = 512
    input_dim = 64
    encoding_dim = 100

    key = jax.random.PRNGKey(0)
    kx, kp = jax.random.split(key)
    # MinMaxScaler output lies in [0, 1]; emulate that for the input.
    x = jax.random.uniform(kx, (batch, input_dim), jnp.float32, 0.0, 1.0)
    params = init_params(kp, input_dim, encoding_dim)

    prepared = prepare_params(params)              # one-time pad/cast, cached
    out = autoencoder_forward(x, prepared)
    out = jax.block_until_ready(out)

    ref = reference_forward(x, params)
    assert out.shape == (batch, input_dim)
    # bf16 MXU operands + bf16 output + approx reciprocal -> relaxed tolerance.
    err = float(jnp.max(jnp.abs(out.astype(jnp.float32) - ref)))
    assert jnp.allclose(out.astype(jnp.float32), ref, atol=2.5e-2, rtol=2.5e-2), err

    print("KERNEL_OK")
</pallas_src>

<mosaic_0001>
module attributes {stable_mosaic.version = 11 : i64} {
  func.func @_autoencoder_kernel(%arg0: i32, %arg1: memref<256x64xf32, #tpu.memory_space<vmem>>, %arg2: memref<64x512xbf16, #tpu.memory_space<vmem>>, %arg3: memref<1x512xf32, #tpu.memory_space<vmem>>, %arg4: memref<512x128xbf16, #tpu.memory_space<vmem>>, %arg5: memref<1x128xf32, #tpu.memory_space<vmem>>, %arg6: memref<128x512xbf16, #tpu.memory_space<vmem>>, %arg7: memref<1x512xf32, #tpu.memory_space<vmem>>, %arg8: memref<512x64xbf16, #tpu.memory_space<vmem>>, %arg9: memref<1x64xf32, #tpu.memory_space<vmem>>, %arg10: memref<256x64xbf16, #tpu.memory_space<vmem>>) attributes {dimension_semantics = [#tpu.dimension_semantics<parallel>], iteration_bounds = array<i64: 2>, scalar_prefetch = 0 : i64, scratch_operands = 0 : i64, tpu.core_type = #tpu.core_type<tc>, window_params = [{transform_indices = @transform_0, window_bounds = array<i64: 256, 64>}, {pipeline_mode = #tpu.pipeline_mode<synchronous>, transform_indices = @transform_1, window_bounds = array<i64: 64, 512>}, {pipeline_mode = #tpu.pipeline_mode<synchronous>, transform_indices = @transform_2, window_bounds = array<i64: 1, 512>}, {pipeline_mode = #tpu.pipeline_mode<synchronous>, transform_indices = @transform_3, window_bounds = array<i64: 512, 128>}, {pipeline_mode = #tpu.pipeline_mode<synchronous>, transform_indices = @transform_4, window_bounds = array<i64: 1, 128>}, {pipeline_mode = #tpu.pipeline_mode<synchronous>, transform_indices = @transform_5, window_bounds = array<i64: 128, 512>}, {pipeline_mode = #tpu.pipeline_mode<synchronous>, transform_indices = @transform_6, window_bounds = array<i64: 1, 512>}, {pipeline_mode = #tpu.pipeline_mode<synchronous>, transform_indices = @transform_7, window_bounds = array<i64: 512, 64>}, {pipeline_mode = #tpu.pipeline_mode<synchronous>, transform_indices = @transform_8, window_bounds = array<i64: 1, 64>}, {transform_indices = @transform_9, window_bounds = array<i64: 256, 64>}]} {
    %c0 = arith.constant 0 : index
    %c0_0 = arith.constant 0 : index
    %0 = vector.load %arg1[%c0, %c0_0] : memref<256x64xf32, #tpu.memory_space<vmem>>, vector<256x64xf32>
    %1 = arith.truncf %0 : vector<256x64xf32> to vector<256x64xbf16>
    %c0_1 = arith.constant 0 : index
    %c0_2 = arith.constant 0 : index
    %2 = vector.load %arg2[%c0_1, %c0_2] : memref<64x512xbf16, #tpu.memory_space<vmem>>, vector<64x512xbf16>
    %cst = arith.constant dense<0.000000e+00> : vector<256x512xf32>
    %3 = tpu.matmul %1, %2, %cst {dimension_numbers = #tpu.dot_dimension_numbers<[1], [0], [0], [1], [0, 0, 1, 1], [], []>} : vector<256x64xbf16>, vector<64x512xbf16>, vector<256x512xf32> -> vector<256x512xf32>
    %c0_3 = arith.constant 0 : index
    %c0_4 = arith.constant 0 : index
    %4 = vector.load %arg3[%c0_3, %c0_4] : memref<1x512xf32, #tpu.memory_space<vmem>>, vector<1x512xf32>
    %5 = vector.broadcast %4 : vector<1x512xf32> to vector<256x512xf32>
    %6 = arith.addf %3, %5 : vector<256x512xf32>
    %cst_5 = arith.constant 0.000000e+00 : f32
    %7 = vector.broadcast %cst_5 : f32 to vector<256x512xf32>
    %8 = arith.maximumf %6, %7 : vector<256x512xf32>
    %9 = arith.truncf %8 : vector<256x512xf32> to vector<256x512xbf16>
    %c0_6 = arith.constant 0 : index
    %c0_7 = arith.constant 0 : index
    %10 = vector.load %arg4[%c0_6, %c0_7] : memref<512x128xbf16, #tpu.memory_space<vmem>>, vector<512x128xbf16>
    %cst_8 = arith.constant dense<0.000000e+00> : vector<256x128xf32>
    %11 = tpu.matmul %9, %10, %cst_8 {dimension_numbers = #tpu.dot_dimension_numbers<[1], [0], [0], [1], [0, 0, 1, 1], [], []>} : vector<256x512xbf16>, vector<512x128xbf16>, vector<256x128xf32> -> vector<256x128xf32>
    %c0_9 = arith.constant 0 : index
    %c0_10 = arith.constant 0 : index
    %12 = vector.load %arg5[%c0_9, %c0_10] : memref<1x128xf32, #tpu.memory_space<vmem>>, vector<1x128xf32>
    %13 = vector.broadcast %12 : vector<1x128xf32> to vector<256x128xf32>
    %14 = arith.addf %11, %13 : vector<256x128xf32>
    %cst_11 = arith.constant 0.000000e+00 : f32
    %15 = vector.broadcast %cst_11 : f32 to vector<256x128xf32>
    %16 = arith.maximumf %14, %15 : vector<256x128xf32>
    %17 = arith.truncf %16 : vector<256x128xf32> to vector<256x128xbf16>
    %c0_12 = arith.constant 0 : index
    %c0_13 = arith.constant 0 : index
    %18 = vector.load %arg6[%c0_12, %c0_13] : memref<128x512xbf16, #tpu.memory_space<vmem>>, vector<128x512xbf16>
    %cst_14 = arith.constant dense<0.000000e+00> : vector<256x512xf32>
    %19 = tpu.matmul %17, %18, %cst_14 {dimension_numbers = #tpu.dot_dimension_numbers<[1], [0], [0], [1], [0, 0, 1, 1], [], []>} : vector<256x128xbf16>, vector<128x512xbf16>, vector<256x512xf32> -> vector<256x512xf32>
    %c0_15 = arith.constant 0 : index
    %c0_16 = arith.constant 0 : index
    %20 = vector.load %arg7[%c0_15, %c0_16] : memref<1x512xf32, #tpu.memory_space<vmem>>, vector<1x512xf32>
    %21 = vector.broadcast %20 : vector<1x512xf32> to vector<256x512xf32>
    %22 = arith.addf %19, %21 : vector<256x512xf32>
    %cst_17 = arith.constant 0.000000e+00 : f32
    %23 = vector.broadcast %cst_17 : f32 to vector<256x512xf32>
    %24 = arith.maximumf %22, %23 : vector<256x512xf32>
    %25 = arith.truncf %24 : vector<256x512xf32> to vector<256x512xbf16>
    %c0_18 = arith.constant 0 : index
    %c0_19 = arith.constant 0 : index
    %26 = vector.load %arg8[%c0_18, %c0_19] : memref<512x64xbf16, #tpu.memory_space<vmem>>, vector<512x64xbf16>
    %cst_20 = arith.constant dense<0.000000e+00> : vector<256x64xf32>
    %27 = tpu.matmul %25, %26, %cst_20 {dimension_numbers = #tpu.dot_dimension_numbers<[1], [0], [0], [1], [0, 0, 1, 1], [], []>} : vector<256x512xbf16>, vector<512x64xbf16>, vector<256x64xf32> -> vector<256x64xf32>
    %c0_21 = arith.constant 0 : index
    %c0_22 = arith.constant 0 : index
    %28 = vector.load %arg9[%c0_21, %c0_22] : memref<1x64xf32, #tpu.memory_space<vmem>>, vector<1x64xf32>
    %29 = vector.broadcast %28 : vector<1x64xf32> to vector<256x64xf32>
    %30 = arith.addf %27, %29 : vector<256x64xf32>
    %cst_23 = arith.constant 0.000000e+00 : f32
    %31 = vector.broadcast %cst_23 : f32 to vector<256x64xf32>
    %32 = arith.subf %31, %30 : vector<256x64xf32>
    %33 = math.exp %32 : vector<256x64xf32>
    %cst_24 = arith.constant 1.000000e+00 : f32
    %34 = vector.broadcast %cst_24 : f32 to vector<256x64xf32>
    %35 = arith.addf %34, %33 : vector<256x64xf32>
    %36 = tpu.reciprocal %35 {approx = true} : vector<256x64xf32> -> vector<256x64xf32>
    %37 = arith.truncf %36 : vector<256x64xf32> to vector<256x64xbf16>
    %c0_25 = arith.constant 0 : index
    %c0_26 = arith.constant 0 : index
    %38 = vector.load %arg10[%c0_25, %c0_26] : memref<256x64xbf16, #tpu.memory_space<vmem>>, vector<256x64xbf16>
    tpu.vector_store %arg10[%c0_25, %c0_26], %37 {strides = array<i32>} : memref<256x64xbf16, #tpu.memory_space<vmem>>, vector<256x64xbf16>,
    return
  }
  func.func @transform_0(%arg0: i32) -> (i32, i32) {
    %c0_i32 = arith.constant 0 : i32
    %c0_i32_0 = arith.constant 0 : i32
    return %arg0, %c0_i32 : i32, i32
  }
  func.func @transform_1(%arg0: i32) -> (i32, i32) {
    %c0_i32 = arith.constant 0 : i32
    %c0_i32_0 = arith.constant 0 : i32
    %c0_i32_1 = arith.constant 0 : i32
    return %c0_i32, %c0_i32_0 : i32, i32
  }
  func.func @transform_2(%arg0: i32) -> (i32, i32) {
    %c0_i32 = arith.constant 0 : i32
    %c0_i32_0 = arith.constant 0 : i32
    %c0_i32_1 = arith.constant 0 : i32
    return %c0_i32, %c0_i32_0 : i32, i32
  }
  func.func @transform_3(%arg0: i32) -> (i32, i32) {
    %c0_i32 = arith.constant 0 : i32
    %c0_i32_0 = arith.constant 0 : i32
    %c0_i32_1 = arith.constant 0 : i32
    return %c0_i32, %c0_i32_0 : i32, i32
  }
  func.func @transform_4(%arg0: i32) -> (i32, i32) {
    %c0_i32 = arith.constant 0 : i32
    %c0_i32_0 = arith.constant 0 : i32
    %c0_i32_1 = arith.constant 0 : i32
    return %c0_i32, %c0_i32_0 : i32, i32
  }
  func.func @transform_5(%arg0: i32) -> (i32, i32) {
    %c0_i32 = arith.constant 0 : i32
    %c0_i32_0 = arith.constant 0 : i32
    %c0_i32_1 = arith.constant 0 : i32
    return %c0_i32, %c0_i32_0 : i32, i32
  }
  func.func @transform_6(%arg0: i32) -> (i32, i32) {
    %c0_i32 = arith.constant 0 : i32
    %c0_i32_0 = arith.constant 0 : i32
    %c0_i32_1 = arith.constant 0 : i32
    return %c0_i32, %c0_i32_0 : i32, i32
  }
  func.func @transform_7(%arg0: i32) -> (i32, i32) {
    %c0_i32 = arith.constant 0 : i32
    %c0_i32_0 = arith.constant 0 : i32
    %c0_i32_1 = arith.constant 0 : i32
    return %c0_i32, %c0_i32_0 : i32, i32
  }
  func.func @transform_8(%arg0: i32) -> (i32, i32) {
    %c0_i32 = arith.constant 0 : i32
    %c0_i32_0 = arith.constant 0 : i32
    %c0_i32_1 = arith.constant 0 : i32
    return %c0_i32, %c0_i32_0 : i32, i32
  }
  func.func @transform_9(%arg0: i32) -> (i32, i32) {
    %c0_i32 = arith.constant 0 : i32
    %c0_i32_0 = arith.constant 0 : i32
    return %arg0, %c0_i32 : i32, i32
  }
}

</mosaic_0001>

<llo_original>
// kernel: autoencoder_forward.1
$region0: #{autoencoder_forward.1}
  #allocation0 [shape = 'u32[]', space=smem, size = 0x4, offset = 0x4, fixed_abs, tag = 'smem constant byte address 0x4 - core index']
  #allocation1 [shape = 'u32[144,128]{1,0:T(1,128)}', space=vmem, size = 0x12000, scoped, tag = 'internal scratch']
  %s0 = inlined_call_operand.vmem [shape: f32[512,64], index: 0, kind: input, shape index: {}]
  %s1 = inlined_call_operand.vmem [shape: bf16[64,512], index: 1, kind: input, shape index: {}]
  %s2 = inlined_call_operand.vmem [shape: f32[1,512], index: 2, kind: input, shape index: {}]
  %s3 = inlined_call_operand.vmem [shape: bf16[512,128], index: 3, kind: input, shape index: {}]
  %s4 = inlined_call_operand.vmem [shape: f32[1,128], index: 4, kind: input, shape index: {}]
  %s5 = inlined_call_operand.vmem [shape: bf16[128,512], index: 5, kind: input, shape index: {}]
  %s6 = inlined_call_operand.vmem [shape: f32[1,512], index: 6, kind: input, shape index: {}]
  %s7 = inlined_call_operand.vmem [shape: bf16[512,64], index: 7, kind: input, shape index: {}]
  %s8 = inlined_call_operand.vmem [shape: f32[1,64], index: 8, kind: input, shape index: {}]
  %s9 = inlined_call_operand.vmem [shape: bf16[512,64], index: 9, kind: output, shape index: {}]
  %s10 = sld [smem:[#allocation0]]
  $region69: #{autoencoder_forward.1} parent=0
    _
  %s12 = ssub.s32 1, %s10
  %s13 = scalar_select 0, %s12, %s10
  loop: start=0, step=1, limit=4
  $region2: #{autoencoder_forward.1} parent=0 // loop_pre_header
    _
  $region3: #{autoencoder_forward.1} parent=0 // loop_header
    %s15 = sphi 0, %s19
    %p16 = scmp.ge.s32.totalorder %s15, 4
    %s25 = sphi 0, %s27
    %s28 = sphi 0, %s25
    %s29 = sphi 0, %s28
    %s45 = sphi 0, %s29
    %s49 = sphi 0, %s49
    %s51 = sphi 0, %s49
    %s52 = sphi 0, %s51
    %s66 = sphi 0, %s52
    %s70 = sphi 0, %s70
    %s72 = sphi 0, %s70
    %s73 = sphi 0, %s72
    %s87 = sphi 0, %s73
    %s91 = sphi 0, %s91
    %s93 = sphi 0, %s91
    %s94 = sphi 0, %s93
    %s108 = sphi 0, %s94
    %s112 = sphi 0, %s112
    %s114 = sphi 0, %s112
    %s115 = sphi 0, %s114
    %s129 = sphi 0, %s115
    %s133 = sphi 0, %s133
    %s135 = sphi 0, %s133
    %s136 = sphi 0, %s135
    %s150 = sphi 0, %s136
    %s154 = sphi 0, %s154
    %s156 = sphi 0, %s154
    %s157 = sphi 0, %s156
    %s171 = sphi 0, %s157
    %s175 = sphi 0, %s175
    %s177 = sphi 0, %s175
    %s178 = sphi 0, %s177
    %s192 = sphi 0, %s178
    %s196 = sphi 0, %s196
    %s198 = sphi 0, %s196
    %s199 = sphi 0, %s198
    %s213 = sphi 0, %s199
    %s219 = sphi 0, %s221
    %s222 = sphi 0, %s219
    %s223 = sphi 0, %s222
    %s239 = sphi 0, %s223
  $region4: #{autoencoder_forward.1} parent=0 // loop_header_branch
    %18 = sbr.rel (%p16) target = $region8
  $region5: #{autoencoder_forward.1} parent=0 // loop_body
    %s20 = ssub.s32 %s15, 1
    %s21 = ssub.s32 %s15, 2
    %s22 = sadd.s32 %s15, 1
    %s23 = ssub.s32 %s15, %s22
    %p24 = scmp.eq.s32.totalorder %s23, 0
    %s26 = sadd.s32 %s25, 1
    %s27 = scalar_select %p24, %s25, %s26
    %p30 = pneg %p24
    %p31 = scmp.eq.s32.totalorder %s15, 1
    %p32 = por %p30, %p31
    %p33 = scmp.ne.s32.totalorder %s25, %s28
    %p34 = scmp.eq.s32.totalorder %s15, 0
    %p35 = por %p33, %p34
    %p36 = scmp.ne.s32.totalorder %s25, %s28
    %p37 = scmp.eq.s32.totalorder %s20, 1
    %p38 = por %p36, %p37
    %p39 = scmp.ne.s32.totalorder %s28, %s29
    %p40 = scmp.eq.s32.totalorder %s20, 0
    %p41 = por %p39, %p40
    %p42 = scmp.ne.s32.totalorder %s28, %s29
    %p43 = scmp.eq.s32.totalorder %s21, 1
    %p44 = por %p42, %p43
    %p46 = scmp.ne.s32.totalorder %s29, %s45
    %p47 = scmp.eq.s32.totalorder %s21, 0
    %p48 = por %p46, %p47
    %s50 = sadd.s32 %s49, 1
    %p53 = scmp.eq.s32.totalorder %s15, 1
    %p54 = scmp.ne.s32.totalorder %s49, %s51
    %p55 = scmp.eq.s32.totalorder %s15, 0
    %p56 = por %p54, %p55
    %p57 = scmp.ne.s32.totalorder %s49, %s51
    %p58 = scmp.eq.s32.totalorder %s20, 1
    %p59 = por %p57, %p58
    %p60 = scmp.ne.s32.totalorder %s51, %s52
    %p61 = scmp.eq.s32.totalorder %s20, 0
    %p62 = por %p60, %p61
    %p63 = scmp.ne.s32.totalorder %s51, %s52
    %p64 = scmp.eq.s32.totalorder %s21, 1
    %p65 = por %p63, %p64
    %p67 = scmp.ne.s32.totalorder %s52, %s66
    %p68 = scmp.eq.s32.totalorder %s21, 0
    %p69 = por %p67, %p68
    %s71 = sadd.s32 %s70, 1
    %p74 = scmp.eq.s32.totalorder %s15, 1
    %p75 = scmp.ne.s32.totalorder %s70, %s72
    %p76 = scmp.eq.s32.totalorder %s15, 0
    %p77 = por %p75, %p76
    %p78 = scmp.ne.s32.totalorder %s70, %s72
    %p79 = scmp.eq.s32.totalorder %s20, 1
    %p80 = por %p78, %p79
    %p81 = scmp.ne.s32.totalorder %s72, %s73
    %p82 = scmp.eq.s32.totalorder %s20, 0
    %p83 = por %p81, %p82
    %p84 = scmp.ne.s32.totalorder %s72, %s73
    %p85 = scmp.eq.s32.totalorder %s21, 1
    %p86 = por %p84, %p85
    %p88 = scmp.ne.s32.totalorder %s73, %s87
    %p89 = scmp.eq.s32.totalorder %s21, 0
    %p90 = por %p88, %p89
    %s92 = sadd.s32 %s91, 1
    %p95 = scmp.eq.s32.totalorder %s15, 1
    %p96 = scmp.ne.s32.totalorder %s91, %s93
    %p97 = scmp.eq.s32.totalorder %s15, 0
    %p98 = por %p96, %p97
    %p99 = scmp.ne.s32.totalorder %s91, %s93
    %p100 = scmp.eq.s32.totalorder %s20, 1
    %p101 = por %p99, %p100
    %p102 = scmp.ne.s32.totalorder %s93, %s94
    %p103 = scmp.eq.s32.totalorder %s20, 0
    %p104 = por %p102, %p103
    %p105 = scmp.ne.s32.totalorder %s93, %s94
    %p106 = scmp.eq.s32.totalorder %s21, 1
    %p107 = por %p105, %p106
    %p109 = scmp.ne.s32.totalorder %s94, %s108
    %p110 = scmp.eq.s32.totalorder %s21, 0
    %p111 = por %p109, %p110
    %s113 = sadd.s32 %s112, 1
    %p116 = scmp.eq.s32.totalorder %s15, 1
    %p117 = scmp.ne.s32.totalorder %s112, %s114
    %p118 = scmp.eq.s32.totalorder %s15, 0
    %p119 = por %p117, %p118
    %p120 = scmp.ne.s32.totalorder %s112, %s114
    %p121 = scmp.eq.s32.totalorder %s20, 1
    %p122 = por %p120, %p121
    %p123 = scmp.ne.s32.totalorder %s114, %s115
    %p124 = scmp.eq.s32.totalorder %s20, 0
    %p125 = por %p123, %p124
    %p126 = scmp.ne.s32.totalorder %s114, %s115
    %p127 = scmp.eq.s32.totalorder %s21, 1
    %p128 = por %p126, %p127
    %p130 = scmp.ne.s32.totalorder %s115, %s129
    %p131 = scmp.eq.s32.totalorder %s21, 0
    %p132 = por %p130, %p131
    %s134 = sadd.s32 %s133, 1
    %p137 = scmp.eq.s32.totalorder %s15, 1
    %p138 = scmp.ne.s32.totalorder %s133, %s135
    %p139 = scmp.eq.s32.totalorder %s15, 0
    %p140 = por %p138, %p139
    %p141 = scmp.ne.s32.totalorder %s133, %s135
    %p142 = scmp.eq.s32.totalorder %s20, 1
    %p143 = por %p141, %p142
    %p144 = scmp.ne.s32.totalorder %s135, %s136
    %p145 = scmp.eq.s32.totalorder %s20, 0
    %p146 = por %p144, %p145
    %p147 = scmp.ne.s32.totalorder %s135, %s136
    %p148 = scmp.eq.s32.totalorder %s21, 1
    %p149 = por %p147, %p148
    %p151 = scmp.ne.s32.totalorder %s136, %s150
    %p152 = scmp.eq.s32.totalorder %s21, 0
    %p153 = por %p151, %p152
    %s155 = sadd.s32 %s154, 1
    %p158 = scmp.eq.s32.totalorder %s15, 1
    %p159 = scmp.ne.s32.totalorder %s154, %s156
    %p160 = scmp.eq.s32.totalorder %s15, 0
    %p161 = por %p159, %p160
    %p162 = scmp.ne.s32.totalorder %s154, %s156
    %p163 = scmp.eq.s32.totalorder %s20, 1
    %p164 = por %p162, %p163
    %p165 = scmp.ne.s32.totalorder %s156, %s157
    %p166 = scmp.eq.s32.totalorder %s20, 0
    %p167 = por %p165, %p166
    %p168 = scmp.ne.s32.totalorder %s156, %s157
    %p169 = scmp.eq.s32.totalorder %s21, 1
    %p170 = por %p168, %p169
    %p172 = scmp.ne.s32.totalorder %s157, %s171
    %p173 = scmp.eq.s32.totalorder %s21, 0
    %p174 = por %p172, %p173
    %s176 = sadd.s32 %s175, 1
    %p179 = scmp.eq.s32.totalorder %s15, 1
    %p180 = scmp.ne.s32.totalorder %s175, %s177
    %p181 = scmp.eq.s32.totalorder %s15, 0
    %p182 = por %p180, %p181
    %p183 = scmp.ne.s32.totalorder %s175, %s177
    %p184 = scmp.eq.s32.totalorder %s20, 1
    %p185 = por %p183, %p184
    %p186 = scmp.ne.s32.totalorder %s177, %s178
    %p187 = scmp.eq.s32.totalorder %s20, 0
    %p188 = por %p186, %p187
    %p189 = scmp.ne.s32.totalorder %s177, %s178
    %p190 = scmp.eq.s32.totalorder %s21, 1
    %p191 = por %p189, %p190
    %p193 = scmp.ne.s32.totalorder %s178, %s192
    %p194 = scmp.eq.s32.totalorder %s21, 0
    %p195 = por %p193, %p194
    %s197 = sadd.s32 %s196, 1
    %p200 = scmp.eq.s32.totalorder %s15, 1
    %p201 = scmp.ne.s32.totalorder %s196, %s198
    %p202 = scmp.eq.s32.totalorder %s15, 0
    %p203 = por %p201, %p202
    %p204 = scmp.ne.s32.totalorder %s196, %s198
    %p205 = scmp.eq.s32.totalorder %s20, 1
    %p206 = por %p204, %p205
    %p207 = scmp.ne.s32.totalorder %s198, %s199
    %p208 = scmp.eq.s32.totalorder %s20, 0
    %p209 = por %p207, %p208
    %p210 = scmp.ne.s32.totalorder %s198, %s199
    %p211 = scmp.eq.s32.totalorder %s21, 1
    %p212 = por %p210, %p211
    %p214 = scmp.ne.s32.totalorder %s199, %s213
    %p215 = scmp.eq.s32.totalorder %s21, 0
    %p216 = por %p214, %p215
    %s217 = ssub.s32 %s15, %s22
    %p218 = scmp.eq.s32.totalorder %s217, 0
    %s220 = sadd.s32 %s219, 1
    %s221 = scalar_select %p218, %s219, %s220
    %p224 = pneg %p218
    %p225 = scmp.eq.s32.totalorder %s15, 1
    %p226 = por %p224, %p225
    %p227 = scmp.ne.s32.totalorder %s219, %s222
    %p228 = scmp.eq.s32.totalorder %s15, 0
    %p229 = por %p227, %p228
    %p230 = scmp.ne.s32.totalorder %s219, %s222
    %p231 = scmp.eq.s32.totalorder %s20, 1
    %p232 = por %p230, %p231
    %p233 = scmp.ne.s32.totalorder %s222, %s223
    %p234 = scmp.eq.s32.totalorder %s20, 0
    %p235 = por %p233, %p234
    %p236 = scmp.ne.s32.totalorder %s222, %s223
    %p237 = scmp.eq.s32.totalorder %s21, 1
    %p238 = por %p236, %p237
    %p240 = scmp.ne.s32.totalorder %s223, %s239
    %p241 = scmp.eq.s32.totalorder %s21, 0
    %p242 = por %p240, %p241
    %p243 = scmp.le.s32.totalorder 1, %s15
    %p244 = scmp.lt.s32.totalorder %s15, 3
    %p245 = pnand %p243, %p244
    %p246 = pneg %p245
    // Predicated region
    $region9: #{autoencoder_forward.1} parent=5 // pred_check
      _
    $region10: #{autoencoder_forward.1} parent=5 // pred_check_branch
      %248 = sbr.rel (%p245) target = $region12
    $region11: #{autoencoder_forward.1} parent=5 // pred_region
      %s249 = ssub.s32 %s15, 1
      // Predicated region
      $region13: #{autoencoder_forward.1} parent=11 // pred_check
        %p250 = pneg %p62
      $region14: #{autoencoder_forward.1} parent=11 // pred_check_branch
        %252 = sbr.rel (%p250) target = $region16
      $region15: #{autoencoder_forward.1} parent=11 // pred_region
        _
      $region16: #{autoencoder_forward.1} parent=11 // pred_fallthru
        _
      // Predicated region
      $region17: #{autoencoder_forward.1} parent=11 // pred_check
        %p253 = pneg %p83
      $region18: #{autoencoder_forward.1} parent=11 // pred_check_branch
        %255 = sbr.rel (%p253) target = $region20
      $region19: #{autoencoder_forward.1} parent=11 // pred_region
        _
      $region20: #{autoencoder_forward.1} parent=11 // pred_fallthru
        _
      // Predicated region
      $region21: #{autoencoder_forward.1} parent=11 // pred_check
        %p256 = pneg %p104
      $region22: #{autoencoder_forward.1} parent=11 // pred_check_branch
        %258 = sbr.rel (%p256) target = $region24
      $region23: #{autoencoder_forward.1} parent=11 // pred_region
        _
      $region24: #{autoencoder_forward.1} parent=11 // pred_fallthru
        _
      // Predicated region
      $region25: #{autoencoder_forward.1} parent=11 // pred_check
        %p259 = pneg %p125
      $region26: #{autoencoder_forward.1} parent=11 // pred_check_branch
        %261 = sbr.rel (%p259) target = $region28
      $region27: #{autoencoder_forward.1} parent=11 // pred_region
        _
      $region28: #{autoencoder_forward.1} parent=11 // pred_fallthru
        _
      // Predicated region
      $region29: #{autoencoder_forward.1} parent=11 // pred_check
        %p262 = pneg %p146
      $region30: #{autoencoder_forward.1} parent=11 // pred_check_branch
        %264 = sbr.rel (%p262) target = $region32
      $region31: #{autoencoder_forward.1} parent=11 // pred_region
        _
      $region32: #{autoencoder_forward.1} parent=11 // pred_fallthru
        _
      // Predicated region
      $region33: #{autoencoder_forward.1} parent=11 // pred_check
        %p265 = pneg %p167
      $region34: #{autoencoder_forward.1} parent=11 // pred_check_branch
        %267 = sbr.rel (%p265) target = $region36
      $region35: #{autoencoder_forward.1} parent=11 // pred_region
        _
      $region36: #{autoencoder_forward.1} parent=11 // pred_fallthru
        _
      // Predicated region
      $region37: #{autoencoder_forward.1} parent=11 // pred_check
        %p268 = pneg %p188
      $region38: #{autoencoder_forward.1} parent=11 // pred_check_branch
        %270 = sbr.rel (%p268) target = $region40
      $region39: #{autoencoder_forward.1} parent=11 // pred_region
        _
      $region40: #{autoencoder_forward.1} parent=11 // pred_fallthru
        _
      // Predicated region
      $region41: #{autoencoder_forward.1} parent=11 // pred_check
        %p271 = pneg %p209
      $region42: #{autoencoder_forward.1} parent=11 // pred_check_branch
        %273 = sbr.rel (%p271) target = $region44
      $region43: #{autoencoder_forward.1} parent=11 // pred_region
        _
      $region44: #{autoencoder_forward.1} parent=11 // pred_fallthru
        _
    $region12: #{autoencoder_forward.1} parent=5 // pred_fallthru
      _
    %p274 = scmp.lt.s32.totalorder %s15, 2
    // Predicated region
    $region45: #{autoencoder_forward.1} parent=5 // pred_check
      %p275 = pneg %p274
    $region46: #{autoencoder_forward.1} parent=5 // pred_check_branch
      %277 = sbr.rel (%p275) target = $region48
    $region47: #{autoencoder_forward.1} parent=5 // pred_region
      // Predicated region
      $region49: #{autoencoder_forward.1} parent=47 // pred_check
        %p278 = pneg %p35
      $region50: #{autoencoder_forward.1} parent=47 // pred_check_branch
        %280 = sbr.rel (%p278) target = $region52
      $region51: #{autoencoder_forward.1} parent=47 // pred_region
        %s281 = smul.u32 32, %s15
        %p282 = scmp.lt.s32.totalorder %s281, 63
        %s283 = scalar_select %p282, %s281, 63
        %s284 = smul.addr %s283, 8
        %s285 = scalar_lea.vmem %s0, %s284
        %s286 = smul.u32 32, %s15
      $region52: #{autoencoder_forward.1} parent=47 // pred_fallthru
        _
    $region48: #{autoencoder_forward.1} parent=5 // pred_fallthru
      _
    %p287 = scmp.le.s32.totalorder 1, %s15
    %p288 = scmp.lt.s32.totalorder %s15, 3
    %p289 = pnand %p287, %p288
    %p290 = pneg %p289
    // Predicated region
    $region53: #{autoencoder_forward.1} parent=5 // pred_check
      _
    $region54: #{autoencoder_forward.1} parent=5 // pred_check_branch
      %292 = sbr.rel (%p289) target = $region56
    $region55: #{autoencoder_forward.1} parent=5 // pred_region
      %s293 = ssub.s32 %s15, 1
      %s294 = smul.u32 32, %s20
      %p295 = scmp.lt.s32.totalorder %s294, 63
      %s296 = scalar_select %p295, %s294, 63
      %s297 = smul.addr %s296, 8
      %s298 = scalar_lea.vmem %s0, %s297
      %p299 = pneg %p41
      %p300 = pneg %p38
      %p301 = pneg %p62
      %p302 = pneg %p59
      %p303 = pneg %p83
      %p304 = pneg %p80
      %p305 = pneg %p104
      %p306 = pneg %p101
      %p307 = pneg %p125
      %p308 = pneg %p122
      %p309 = pneg %p146
      %p310 = pneg %p143
      %p311 = pneg %p167
      %p312 = pneg %p164
      %p313 = pneg %p188
      %p314 = pneg %p185
      %p315 = pneg %p209
      %p316 = pneg %p206
      %p317 = pneg %p235
      %p318 = pneg %p232
      %s319 = smul.u32 32, %s20
      %p320 = scmp.lt.s32.totalorder %s319, 63
      %s321 = scalar_select %p320, %s319, 63
      %s322 = smul.addr %s321, 4
      %s323 = scalar_lea.vmem %s9, %s322
      %s324 = smul.u32 32, %s20
      %p325 = scmp.lt.s32.totalorder %s324, 63
      %s326 = scalar_select %p325, %s324, 63
      %s327 = smul.addr %s326, 8
      %s328 = scalar_lea.vmem %s0, %s327
      %s329 = smul.u32 32, %s20
      %s330 = smul.u32 32, %s20
      %p331 = scmp.lt.s32.totalorder %s330, 63
      %s332 = scalar_select %p331, %s330, 63
      %s333 = smul.addr %s332, 4
      %s334 = scalar_lea.vmem %s9, %s333
      %s335 = smul.u32 32, %s20
      %v337 = vld [vmem:[%s328] sm:$0xff]
      %v338 = vld [vmem:[%s328 + $0x8] sm:$0xff]
      %v339 = vld [vmem:[%s328 + $0x10] sm:$0xff]
      %v340 = vld [vmem:[%s328 + $0x18] sm:$0xff]
      %v341 = vld [vmem:[%s328 + $0x20] sm:$0xff]
      %v342 = vld [vmem:[%s328 + $0x28] sm:$0xff]
      %v343 = vld [vmem:[%s328 + $0x30] sm:$0xff]
      %v344 = vld [vmem:[%s328 + $0x38] sm:$0xff]
      %v345 = vld [vmem:[%s328 + $0x40] sm:$0xff]
      %v346 = vld [vmem:[%s328 + $0x48] sm:$0xff]
      %v347 = vld [vmem:[%s328 + $0x50] sm:$0xff]
      %v348 = vld [vmem:[%s328 + $0x58] sm:$0xff]
      %v349 = vld [vmem:[%s328 + $0x60] sm:$0xff]
      %v350 = vld [vmem:[%s328 + $0x68] sm:$0xff]
      %v351 = vld [vmem:[%s328 + $0x70] sm:$0xff]
      %v352 = vld [vmem:[%s328 + $0x78] sm:$0xff]
      %v353 = vld [vmem:[%s328 + $0x80] sm:$0xff]
      %v354 = vld [vmem:[%s328 + $0x88] sm:$0xff]
      %v355 = vld [vmem:[%s328 + $0x90] sm:$0xff]
      %v356 = vld [vmem:[%s328 + $0x98] sm:$0xff]
      %v357 = vld [vmem:[%s328 + $0xa0] sm:$0xff]
      %v358 = vld [vmem:[%s328 + $0xa8] sm:$0xff]
      %v359 = vld [vmem:[%s328 + $0xb0] sm:$0xff]
      %v360 = vld [vmem:[%s328 + $0xb8] sm:$0xff]
      %v361 = vld [vmem:[%s328 + $0xc0] sm:$0xff]
      %v362 = vld [vmem:[%s328 + $0xc8] sm:$0xff]
      %v363 = vld [vmem:[%s328 + $0xd0] sm:$0xff]
      %v364 = vld [vmem:[%s328 + $0xd8] sm:$0xff]
      %v365 = vld [vmem:[%s328 + $0xe0] sm:$0xff]
      %v366 = vld [vmem:[%s328 + $0xe8] sm:$0xff]
      %v367 = vld [vmem:[%s328 + $0xf0] sm:$0xff]
      %v368 = vld [vmem:[%s328 + $0xf8] sm:$0xff]
      %v369 = vpack.c.bf16 %v338, %v337
      %v370 = vpack.c.bf16 %v340, %v339
      %v371 = vpack.c.bf16 %v342, %v341
      %v372 = vpack.c.bf16 %v344, %v343
      %v373 = vpack.c.bf16 %v346, %v345
      %v374 = vpack.c.bf16 %v348, %v347
      %v375 = vpack.c.bf16 %v350, %v349
      %v376 = vpack.c.bf16 %v352, %v351
      %v377 = vpack.c.bf16 %v354, %v353
      %v378 = vpack.c.bf16 %v356, %v355
      %v379 = vpack.c.bf16 %v358, %v357
      %v380 = vpack.c.bf16 %v360, %v359
      %v381 = vpack.c.bf16 %v362, %v361
      %v382 = vpack.c.bf16 %v364, %v363
      %v383 = vpack.c.bf16 %v366, %v365
      %v384 = vpack.c.bf16 %v368, %v367
      %v385 = vld [vmem:[%s1] sm:$0xff]
      %v386 = vld [vmem:[%s1 + $0x8] sm:$0xff]
      %v387 = vld [vmem:[%s1 + $0x10] sm:$0xff]
      %v388 = vld [vmem:[%s1 + $0x18] sm:$0xff]
      %v389 = vld [vmem:[%s1 + $0x20] sm:$0xff]
      %v390 = vld [vmem:[%s1 + $0x28] sm:$0xff]
      %v391 = vld [vmem:[%s1 + $0x30] sm:$0xff]
      %v392 = vld [vmem:[%s1 + $0x38] sm:$0xff]
      %v393 = vld [vmem:[%s1 + $0x40] sm:$0xff]
      %v394 = vld [vmem:[%s1 + $0x48] sm:$0xff]
      %v395 = vld [vmem:[%s1 + $0x50] sm:$0xff]
      %v396 = vld [vmem:[%s1 + $0x58] sm:$0xff]
      %v397 = vld [vmem:[%s1 + $0x60] sm:$0xff]
      %v398 = vld [vmem:[%s1 + $0x68] sm:$0xff]
      %v399 = vld [vmem:[%s1 + $0x70] sm:$0xff]
      %v400 = vld [vmem:[%s1 + $0x78] sm:$0xff]
      %v401 = vld [vmem:[%s2] sm:$0xf]
      %v403 = vlaneseq
      %v404 = vshrl.u32 %v403, 7
      %v405 = vsub.s32 0, %v404
      %v406 = vrot.slane %v401, %v405
      %v407 = vlaneseq
      %v408 = vshrl.u32 %v407, 7
      %v409 = vsub.s32 1, %v408
      %v410 = vrot.slane %v401, %v409
      %v411 = vlaneseq
      %v412 = vshrl.u32 %v411, 7
      %v413 = vsub.s32 2, %v412
      %v414 = vrot.slane %v401, %v413
      %v415 = vlaneseq
      %v416 = vshrl.u32 %v415, 7
      %v417 = vsub.s32 3, %v416
      %v418 = vrot.slane %v401, %v417
      %v439 = vunpack.c.l.b16 %v385
      %v440 = vunpack.c.h.b16 %v385
      %v441 = vunpack.c.l.b16 %v386
      %v442 = vunpack.c.h.b16 %v386
      %v443 = vunpack.c.l.b16 %v387
      %v444 = vunpack.c.h.b16 %v387
      %v445 = vunpack.c.l.b16 %v388
      %v446 = vunpack.c.h.b16 %v388
      %v447 = vunpack.c.l.b16 %v389
      %v448 = vunpack.c.h.b16 %v389
      %v449 = vunpack.c.l.b16 %v390
      %v450 = vunpack.c.h.b16 %v390
      %v451 = vunpack.c.l.b16 %v391
      %v452 = vunpack.c.h.b16 %v391
      %v453 = vunpack.c.l.b16 %v392
      %v454 = vunpack.c.h.b16 %v392
      %v455 = vunpack.c.l.b16 %v393
      %v456 = vunpack.c.h.b16 %v393
      %v457 = vunpack.c.l.b16 %v394
      %v458 = vunpack.c.h.b16 %v394
      %v459 = vunpack.c.l.b16 %v395
      %v460 = vunpack.c.h.b16 %v395
      %v461 = vunpack.c.l.b16 %v396
      %v462 = vunpack.c.h.b16 %v396
      %v463 = vunpack.c.l.b16 %v397
      %v464 = vunpack.c.h.b16 %v397
      %v465 = vunpack.c.l.b16 %v398
      %v466 = vunpack.c.h.b16 %v398
      %v467 = vunpack.c.l.b16 %v399
      %v468 = vunpack.c.h.b16 %v399
      %v469 = vunpack.c.l.b16 %v400
      %v470 = vunpack.c.h.b16 %v400
      %v471 = vpack.c.b16 %v443, %v439
      %v472 = vpack.c.b16 %v444, %v440
      %v473 = vpack.c.b16 %v445, %v441
      %v474 = vpack.c.b16 %v446, %v442
      %v475 = vpack.c.b16 %v451, %v447
      %v476 = vpack.c.b16 %v452, %v448
      %v477 = vpack.c.b16 %v453, %v449
      %v478 = vpack.c.b16 %v454, %v450
      %v479 = vpack.c.b16 %v459, %v455
      %v480 = vpack.c.b16 %v460, %v456
      %v481 = vpack.c.b16 %v461, %v457
      %v482 = vpack.c.b16 %v462, %v458
      %v483 = vpack.c.b16 %v467, %v463
      %v484 = vpack.c.b16 %v468, %v464
      %v485 = vpack.c.b16 %v469, %v465
      %v486 = vpack.c.b16 %v470, %v466
      %vm503 = vcmask 523264
      %v505 = vsel %vm503, %v369, 0
      %v508 = vsel %vm503, %v370, 0
      %v511 = vsel %vm503, %v371, 0
      %v514 = vsel %vm503, %v372, 0
      %v517 = vsel %vm503, %v373, 0
      %v520 = vsel %vm503, %v374, 0
      %v523 = vsel %vm503, %v375, 0
      %v526 = vsel %vm503, %v376, 0
      %v529 = vsel %vm503, %v377, 0
      %v532 = vsel %vm503, %v378, 0
      %v535 = vsel %vm503, %v379, 0
      %v538 = vsel %vm503, %v380, 0
      %v541 = vsel %vm503, %v381, 0
      %v544 = vsel %vm503, %v382, 0
      %v547 = vsel %vm503, %v383, 0
      %v550 = vsel %vm503, %v384, 0
      %552 = vmatprep.subr.bf16.mxu0 %v472
      %553 = vmatpush1.bf16.msra.mxu0 %v471
      %554 = vmatprep.subr.bf16.mxu0 %v476
      %555 = vmatpush1.bf16.msra.mxu0 %v475
      %556 = vmatprep.subr.bf16.mxu0 %v480
      %557 = vmatpush1.bf16.msra.mxu0 %v479
      %558 = vmatprep.subr.bf16.mxu0 %v484
      %559 = vmatpush1.bf16.msra.mxu0 %v483
      %560 = vmatprep.subr.bf16.mxu0 0
      %561 = vmatpush1.bf16.msra.mxu0 0
      %562 = vmatprep.subr.bf16.mxu0 0
      %563 = vmatpush1.bf16.msra.mxu0 0
      %564 = vmatprep.subr.bf16.mxu0 0
      %565 = vmatpush1.bf16.msra.mxu0 0
      %566 = vmatprep.subr.bf16.mxu0 0
      %567 = vmatpush1.bf16.msra.mxu0 0
      %568 = vmatprep.subr.bf16.mxu0 0
      %569 = vmatpush1.bf16.msra.mxu0 0
      %570 = vmatprep.subr.bf16.mxu0 0
      %571 = vmatpush1.bf16.msra.mxu0 0
      %572 = vmatprep.subr.bf16.mxu0 0
      %573 = vmatpush1.bf16.msra.mxu0 0
      %574 = vmatprep.subr.bf16.mxu0 0
      %575 = vmatpush1.bf16.msra.mxu0 0
      %576 = vmatprep.subr.bf16.mxu0 0
      %577 = vmatpush1.bf16.msra.mxu0 0
      %578 = vmatprep.subr.bf16.mxu0 0
      %579 = vmatpush1.bf16.msra.mxu0 0
      %580 = vmatprep.subr.bf16.mxu0 0
      %581 = vmatpush1.bf16.msra.mxu0 0
      %582 = vmatprep.subr.bf16.mxu0 0
      %583 = vmatpush1.bf16.msra.mxu0 0
      %584 = vmatprep.mubr.bf16.mxu0 0
      %585 = vmatmul.mubr.bf16.gmra.mrb[0].mxu0 %v505
      %v586 = vpop.f32.mrb[0].mxu0
      %v587 = vadd.f32 %v406, %v586
      %v588 = vpop.f32.mrb[0].mxu0
      %v589 = vadd.f32 %v410, %v588
      %v590 = vpop.f32.mrb[0].mxu0
      %v591 = vadd.f32 %v406, %v590
      %v592 = vpop.f32.mrb[0].mxu0
      %v593 = vadd.f32 %v410, %v592
      %594 = vmatprep.mubr.bf16.mxu0 0
      %595 = vmatmul.mubr.bf16.gmra.mrb[0].mxu0 %v508
      %v596 = vpop.f32.mrb[0].mxu0
      %v597 = vadd.f32 %v406, %v596
      %v598 = vpop.f32.mrb[0].mxu0
      %v599 = vadd.f32 %v410, %v598
      %v600 = vpop.f32.mrb[0].mxu0
      %v601 = vadd.f32 %v406, %v600
      %v602 = vpop.f32.mrb[0].mxu0
      %v603 = vadd.f32 %v410, %v602
      %604 = vmatprep.mubr.bf16.mxu0 0
      %605 = vmatmul.mubr.bf16.gmra.mrb[0].mxu0 %v511
      %v606 = vpop.f32.mrb[0].mxu0
      %v607 = vadd.f32 %v406, %v606
      %v608 = vpop.f32.mrb[0].mxu0
      %v609 = vadd.f32 %v410, %v608
      %v610 = vpop.f32.mrb[0].mxu0
      %v611 = vadd.f32 %v406, %v610
      %v612 = vpop.f32.mrb[0].mxu0
      %v613 = vadd.f32 %v410, %v612
      %614 = vmatprep.mubr.bf16.mxu0 0
      %615 = vmatmul.mubr.bf16.gmra.mrb[0].mxu0 %v514
      %v616 = vpop.f32.mrb[0].mxu0
      %v617 = vadd.f32 %v406, %v616
      %v618 = vpop.f32.mrb[0].mxu0
      %v619 = vadd.f32 %v410, %v618
      %v620 = vpop.f32.mrb[0].mxu0
      %v621 = vadd.f32 %v406, %v620
      %v622 = vpop.f32.mrb[0].mxu0
      %v623 = vadd.f32 %v410, %v622
      %624 = vmatprep.mubr.bf16.mxu0 0
      %625 = vmatmul.mubr.bf16.gmra.mrb[0].mxu0 %v517
      %v626 = vpop.f32.mrb[0].mxu0
      %v627 = vadd.f32 %v406, %v626
      %v628 = vpop.f32.mrb[0].mxu0
      %v629 = vadd.f32 %v410, %v628
      %v630 = vpop.f32.mrb[0].mxu0
      %v631 = vadd.f32 %v406, %v630
      %v632 = vpop.f32.mrb[0].mxu0
      %v633 = vadd.f32 %v410, %v632
      %634 = vmatprep.mubr.bf16.mxu0 0
      %635 = vmatmul.mubr.bf16.gmra.mrb[0].mxu0 %v520
      %v636 = vpop.f32.mrb[0].mxu0
      %v637 = vadd.f32 %v406, %v636
      %v638 = vpop.f32.mrb[0].mxu0
      %v639 = vadd.f32 %v410, %v638
      %v640 = vpop.f32.mrb[0].mxu0
      %v641 = vadd.f32 %v406, %v640
      %v642 = vpop.f32.mrb[0].mxu0
      %v643 = vadd.f32 %v410, %v642
      %644 = vmatprep.mubr.bf16.mxu0 0
      %645 = vmatmul.mubr.bf16.gmra.mrb[0].mxu0 %v523
      %v646 = vpop.f32.mrb[0].mxu0
      %v647 = vadd.f32 %v406, %v646
      %v648 = vpop.f32.mrb[0].mxu0
      %v649 = vadd.f32 %v410, %v648
      %v650 = vpop.f32.mrb[0].mxu0
      %v651 = vadd.f32 %v406, %v650
      %v652 = vpop.f32.mrb[0].mxu0
      %v653 = vadd.f32 %v410, %v652
      %654 = vmatprep.mubr.bf16.mxu0 0
      %655 = vmatmul.mubr.bf16.gmra.mrb[0].mxu0 %v526
      %v656 = vpop.f32.mrb[0].mxu0
      %v657 = vadd.f32 %v406, %v656
      %v658 = vpop.f32.mrb[0].mxu0
      %v659 = vadd.f32 %v410, %v658
      %v660 = vpop.f32.mrb[0].mxu0
      %v661 = vadd.f32 %v406, %v660
      %v662 = vpop.f32.mrb[0].mxu0
      %v663 = vadd.f32 %v410, %v662
      %664 = vmatprep.mubr.bf16.mxu0 0
      %665 = vmatmul.mubr.bf16.gmra.mrb[0].mxu0 %v529
      %v666 = vpop.f32.mrb[0].mxu0
      %v667 = vadd.f32 %v406, %v666
      %v668 = vpop.f32.mrb[0].mxu0
      %v669 = vadd.f32 %v410, %v668
      %v670 = vpop.f32.mrb[0].mxu0
      %v671 = vadd.f32 %v406, %v670
      %v672 = vpop.f32.mrb[0].mxu0
      %v673 = vadd.f32 %v410, %v672
      %674 = vmatprep.mubr.bf16.mxu0 0
      %675 = vmatmul.mubr.bf16.gmra.mrb[0].mxu0 %v532
      %v676 = vpop.f32.mrb[0].mxu0
      %v677 = vadd.f32 %v406, %v676
      %v678 = vpop.f32.mrb[0].mxu0
      %v679 = vadd.f32 %v410, %v678
      %v680 = vpop.f32.mrb[0].mxu0
      %v681 = vadd.f32 %v406, %v680
      %v682 = vpop.f32.mrb[0].mxu0
      %v683 = vadd.f32 %v410, %v682
      %684 = vmatprep.mubr.bf16.mxu0 0
      %685 = vmatmul.mubr.bf16.gmra.mrb[0].mxu0 %v535
      %v686 = vpop.f32.mrb[0].mxu0
      %v687 = vadd.f32 %v406, %v686
      %v688 = vpop.f32.mrb[0].mxu0
      %v689 = vadd.f32 %v410, %v688
      %v690 = vpop.f32.mrb[0].mxu0
      %v691 = vadd.f32 %v406, %v690
      %v692 = vpop.f32.mrb[0].mxu0
      %v693 = vadd.f32 %v410, %v692
      %694 = vmatprep.mubr.bf16.mxu0 0
      %695 = vmatmul.mubr.bf16.gmra.mrb[0].mxu0 %v538
      %v696 = vpop.f32.mrb[0].mxu0
      %v697 = vadd.f32 %v406, %v696
      %v698 = vpop.f32.mrb[0].mxu0
      %v699 = vadd.f32 %v410, %v698
      %v700 = vpop.f32.mrb[0].mxu0
      %v701 = vadd.f32 %v406, %v700
      %v702 = vpop.f32.mrb[0].mxu0
      %v703 = vadd.f32 %v410, %v702
      %704 = vmatprep.mubr.bf16.mxu0 0
      %705 = vmatmul.mubr.bf16.gmra.mrb[0].mxu0 %v541
      %v706 = vpop.f32.mrb[0].mxu0
      %v707 = vadd.f32 %v406, %v706
      %v708 = vpop.f32.mrb[0].mxu0
      %v709 = vadd.f32 %v410, %v708
      %v710 = vpop.f32.mrb[0].mxu0
      %v711 = vadd.f32 %v406, %v710
      %v712 = vpop.f32.mrb[0].mxu0
      %v713 = vadd.f32 %v410, %v712
      %714 = vmatprep.mubr.bf16.mxu0 0
      %715 = vmatmul.mubr.bf16.gmra.mrb[0].mxu0 %v544
      %v716 = vpop.f32.mrb[0].mxu0
      %v717 = vadd.f32 %v406, %v716
      %v718 = vpop.f32.mrb[0].mxu0
      %v719 = vadd.f32 %v410, %v718
      %v720 = vpop.f32.mrb[0].mxu0
      %v721 = vadd.f32 %v406, %v720
      %v722 = vpop.f32.mrb[0].mxu0
      %v723 = vadd.f32 %v410, %v722
      %724 = vmatprep.mubr.bf16.mxu0 0
      %725 = vmatmul.mubr.bf16.gmra.mrb[0].mxu0 %v547
      %v726 = vpop.f32.mrb[0].mxu0
      %v727 = vadd.f32 %v406, %v726
      %v728 = vpop.f32.mrb[0].mxu0
      %v729 = vadd.f32 %v410, %v728
      %v730 = vpop.f32.mrb[0].mxu0
      %v731 = vadd.f32 %v406, %v730
      %v732 = vpop.f32.mrb[0].mxu0
      %v733 = vadd.f32 %v410, %v732
      %734 = vmatprep.mubr.bf16.mxu0 0
      %735 = vmatmul.mubr.bf16.gmra.mrb[0].mxu0 %v550
      %v736 = vpop.f32.mrb[0].mxu0
      %v737 = vadd.f32 %v406, %v736
      %v738 = vpop.f32.mrb[0].mxu0
      %v739 = vadd.f32 %v410, %v738
      %v740 = vpop.f32.mrb[0].mxu0
      %v741 = vadd.f32 %v406, %v740
      %v742 = vpop.f32.mrb[0].mxu0
      %v743 = vadd.f32 %v410, %v742
      %744 = vdwg.mxu0
      %745 = vmatprep.subr.bf16.mxu0 %v474
      %746 = vmatpush1.bf16.msra.mxu0 %v473
      %747 = vmatprep.subr.bf16.mxu0 %v478
      %748 = vmatpush1.bf16.msra.mxu0 %v477
      %749 = vmatprep.subr.bf16.mxu0 %v482
      %750 = vmatpush1.bf16.msra.mxu0 %v481
      %751 = vmatprep.subr.bf16.mxu0 %v486
      %752 = vmatpush1.bf16.msra.mxu0 %v485
      %753 = vmatprep.subr.bf16.mxu0 0
      %754 = vmatpush1.bf16.msra.mxu0 0
      %755 = vmatprep.subr.bf16.mxu0 0
      %756 = vmatpush1.bf16.msra.mxu0 0
      %757 = vmatprep.subr.bf16.mxu0 0
      %758 = vmatpush1.bf16.msra.mxu0 0
      %759 = vmatprep.subr.bf16.mxu0 0
      %760 = vmatpush1.bf16.msra.mxu0 0
      %761 = vmatprep.subr.bf16.mxu0 0
      %762 = vmatpush1.bf16.msra.mxu0 0
      %763 = vmatprep.subr.bf16.mxu0 0
      %764 = vmatpush1.bf16.msra.mxu0 0
      %765 = vmatprep.subr.bf16.mxu0 0
      %766 = vmatpush1.bf16.msra.mxu0 0
      %767 = vmatprep.subr.bf16.mxu0 0
      %768 = vmatpush1.bf16.msra.mxu0 0
      %769 = vmatprep.subr.bf16.mxu0 0
      %770 = vmatpush1.bf16.msra.mxu0 0
      %771 = vmatprep.subr.bf16.mxu0 0
      %772 = vmatpush1.bf16.msra.mxu0 0
      %773 = vmatprep.subr.bf16.mxu0 0
      %774 = vmatpush1.bf16.msra.mxu0 0
      %775 = vmatprep.subr.bf16.mxu0 0
      %776 = vmatpush1.bf16.msra.mxu0 0
      %777 = vmatprep.mubr.bf16.mxu0 0
      %778 = vmatmul.mubr.bf16.gmra.mrb[0].mxu0 %v505
      %v779 = vpop.f32.mrb[0].mxu0
      %v780 = vadd.f32 %v414, %v779
      %v781 = vpop.f32.mrb[0].mxu0
      %v782 = vadd.f32 %v418, %v781
      %v783 = vpop.f32.mrb[0].mxu0
      %v784 = vadd.f32 %v414, %v783
      %v785 = vpop.f32.mrb[0].mxu0
      %v786 = vadd.f32 %v418, %v785
      %787 = vmatprep.mubr.bf16.mxu0 0
      %788 = vmatmul.mubr.bf16.gmra.mrb[0].mxu0 %v508
      %v789 = vpop.f32.mrb[0].mxu0
      %v790 = vadd.f32 %v414, %v789
      %v791 = vpop.f32.mrb[0].mxu0
      %v792 = vadd.f32 %v418, %v791
      %v793 = vpop.f32.mrb[0].mxu0
      %v794 = vadd.f32 %v414, %v793
      %v795 = vpop.f32.mrb[0].mxu0
      %v796 = vadd.f32 %v418, %v795
      %797 = vmatprep.mubr.bf16.mxu0 0
      %798 = vmatmul.mubr.bf16.gmra.mrb[0].mxu0 %v511
      %v799 = vpop.f32.mrb[0].mxu0
      %v800 = vadd.f32 %v414, %v799
      %v801 = vpop.f32.mrb[0].mxu0
      %v802 = vadd.f32 %v418, %v801
      %v803 = vpop.f32.mrb[0].mxu0
      %v804 = vadd.f32 %v414, %v803
      %v805 = vpop.f32.mrb[0].mxu0
      %v806 = vadd.f32 %v418, %v805
      %807 = vmatprep.mubr.bf16.mxu0 0
      %808 = vmatmul.mubr.bf16.gmra.mrb[0].mxu0 %v514
      %v809 = vpop.f32.mrb[0].mxu0
      %v810 = vadd.f32 %v414, %v809
      %v811 = vpop.f32.mrb[0].mxu0
      %v812 = vadd.f32 %v418, %v811
      %v813 = vpop.f32.mrb[0].mxu0
      %v814 = vadd.f32 %v414, %v813
      %v815 = vpop.f32.mrb[0].mxu0
      %v816 = vadd.f32 %v418, %v815
      %817 = vmatprep.mubr.bf16.mxu0 0
      %818 = vmatmul.mubr.bf16.gmra.mrb[0].mxu0 %v517
      %v819 = vpop.f32.mrb[0].mxu0
      %v820 = vadd.f32 %v414, %v819
      %v821 = vpop.f32.mrb[0].mxu0
      %v822 = vadd.f32 %v418, %v821
      %v823 = vpop.f32.mrb[0].mxu0
      %v824 = vadd.f32 %v414, %v823
      %v825 = vpop.f32.mrb[0].mxu0
      %v826 = vadd.f32 %v418, %v825
      %827 = vmatprep.mubr.bf16.mxu0 0
      %828 = vmatmul.mubr.bf16.gmra.mrb[0].mxu0 %v520
      %v829 = vpop.f32.mrb[0].mxu0
      %v830 = vadd.f32 %v414, %v829
      %v831 = vpop.f32.mrb[0].mxu0
      %v832 = vadd.f32 %v418, %v831
      %v833 = vpop.f32.mrb[0].mxu0
      %v834 = vadd.f32 %v414, %v833
      %v835 = vpop.f32.mrb[0].mxu0
      %v836 = vadd.f32 %v418, %v835
      %837 = vmatprep.mubr.bf16.mxu0 0
      %838 = vmatmul.mubr.bf16.gmra.mrb[0].mxu0 %v523
      %v839 = vpop.f32.mrb[0].mxu0
      %v840 = vadd.f32 %v414, %v839
      %v841 = vpop.f32.mrb[0].mxu0
      %v842 = vadd.f32 %v418, %v841
      %v843 = vpop.f32.mrb[0].mxu0
      %v844 = vadd.f32 %v414, %v843
      %v845 = vpop.f32.mrb[0].mxu0
      %v846 = vadd.f32 %v418, %v845
      %847 = vmatprep.mubr.bf16.mxu0 0
      %848 = vmatmul.mubr.bf16.gmra.mrb[0].mxu0 %v526
      %v849 = vpop.f32.mrb[0].mxu0
      %v850 = vadd.f32 %v414, %v849
      %v851 = vpop.f32.mrb[0].mxu0
      %v852 = vadd.f32 %v418, %v851
      %v853 = vpop.f32.mrb[0].mxu0
      %v854 = vadd.f32 %v414, %v853
      %v855 = vpop.f32.mrb[0].mxu0
      %v856 = vadd.f32 %v418, %v855
      %857 = vmatprep.mubr.bf16.mxu0 0
      %858 = vmatmul.mubr.bf16.gmra.mrb[0].mxu0 %v529
      %v859 = vpop.f32.mrb[0].mxu0
      %v860 = vadd.f32 %v414, %v859
      %v861 = vpop.f32.mrb[0].mxu0
      %v862 = vadd.f32 %v418, %v861
      %v863 = vpop.f32.mrb[0].mxu0
      %v864 = vadd.f32 %v414, %v863
      %v865 = vpop.f32.mrb[0].mxu0
      %v866 = vadd.f32 %v418, %v865
      %867 = vmatprep.mubr.bf16.mxu0 0
      %868 = vmatmul.mubr.bf16.gmra.mrb[0].mxu0 %v532
      %v869 = vpop.f32.mrb[0].mxu0
      %v870 = vadd.f32 %v414, %v869
      %v871 = vpop.f32.mrb[0].mxu0
      %v872 = vadd.f32 %v418, %v871
      %v873 = vpop.f32.mrb[0].mxu0
      %v874 = vadd.f32 %v414, %v873
      %v875 = vpop.f32.mrb[0].mxu0
      %v876 = vadd.f32 %v418, %v875
      %877 = vmatprep.mubr.bf16.mxu0 0
      %878 = vmatmul.mubr.bf16.gmra.mrb[0].mxu0 %v535
      %v879 = vpop.f32.mrb[0].mxu0
      %v880 = vadd.f32 %v414, %v879
      %v881 = vpop.f32.mrb[0].mxu0
      %v882 = vadd.f32 %v418, %v881
      %v883 = vpop.f32.mrb[0].mxu0
      %v884 = vadd.f32 %v414, %v883
      %v885 = vpop.f32.mrb[0].mxu0
      %v886 = vadd.f32 %v418, %v885
      %887 = vmatprep.mubr.bf16.mxu0 0
      %888 = vmatmul.mubr.bf16.gmra.mrb[0].mxu0 %v538
      %v889 = vpop.f32.mrb[0].mxu0
      %v890 = vadd.f32 %v414, %v889
      %v891 = vpop.f32.mrb[0].mxu0
      %v892 = vadd.f32 %v418, %v891
      %v893 = vpop.f32.mrb[0].mxu0
      %v894 = vadd.f32 %v414, %v893
      %v895 = vpop.f32.mrb[0].mxu0
      %v896 = vadd.f32 %v418, %v895
      %897 = vmatprep.mubr.bf16.mxu0 0
      %898 = vmatmul.mubr.bf16.gmra.mrb[0].mxu0 %v541
      %v899 = vpop.f32.mrb[0].mxu0
      %v900 = vadd.f32 %v414, %v899
      %v901 = vpop.f32.mrb[0].mxu0
      %v902 = vadd.f32 %v418, %v901
      %v903 = vpop.f32.mrb[0].mxu0
      %v904 = vadd.f32 %v414, %v903
      %v905 = vpop.f32.mrb[0].mxu0
      %v906 = vadd.f32 %v418, %v905
      %907 = vmatprep.mubr.bf16.mxu0 0
      %908 = vmatmul.mubr.bf16.gmra.mrb[0].mxu0 %v544
      %v909 = vpop.f32.mrb[0].mxu0
      %v910 = vadd.f32 %v414, %v909
      %v911 = vpop.f32.mrb[0].mxu0
      %v912 = vadd.f32 %v418, %v911
      %v913 = vpop.f32.mrb[0].mxu0
      %v914 = vadd.f32 %v414, %v913
      %v915 = vpop.f32.mrb[0].mxu0
      %v916 = vadd.f32 %v418, %v915
      %917 = vmatprep.mubr.bf16.mxu0 0
      %918 = vmatmul.mubr.bf16.gmra.mrb[0].mxu0 %v547
      %v919 = vpop.f32.mrb[0].mxu0
      %v920 = vadd.f32 %v414, %v919
      %v921 = vpop.f32.mrb[0].mxu0
      %v922 = vadd.f32 %v418, %v921
      %v923 = vpop.f32.mrb[0].mxu0
      %v924 = vadd.f32 %v414, %v923
      %v925 = vpop.f32.mrb[0].mxu0
      %v926 = vadd.f32 %v418, %v925
      %927 = vmatprep.mubr.bf16.mxu0 0
      %928 = vmatmul.mubr.bf16.gmra.mrb[0].mxu0 %v550
      %v929 = vpop.f32.mrb[0].mxu0
      %v930 = vadd.f32 %v414, %v929
      %v931 = vpop.f32.mrb[0].mxu0
      %v932 = vadd.f32 %v418, %v931
      %v933 = vpop.f32.mrb[0].mxu0
      %v934 = vadd.f32 %v414, %v933
      %v935 = vpop.f32.mrb[0].mxu0
      %v936 = vadd.f32 %v418, %v935
      %937 = vdwg.mxu0
      %v938 = vmax.f32 %v587, 0.0
      %v939 = vmax.f32 %v589, 0.0
      %v940 = vmax.f32 %v780, 0.0
      %v941 = vmax.f32 %v782, 0.0
      %v942 = vmax.f32 %v591, 0.0
      %v943 = vmax.f32 %v593, 0.0
      %v944 = vmax.f32 %v784, 0.0
      %v945 = vmax.f32 %v786, 0.0
      %v946 = vmax.f32 %v597, 0.0
      %v947 = vmax.f32 %v599, 0.0
      %v948 = vmax.f32 %v790, 0.0
      %v949 = vmax.f32 %v792, 0.0
      %v950 = vmax.f32 %v601, 0.0
      %v951 = vmax.f32 %v603, 0.0
      %v952 = vmax.f32 %v794, 0.0
      %v953 = vmax.f32 %v796, 0.0
      %v954 = vmax.f32 %v607, 0.0
      %v955 = vmax.f32 %v609, 0.0
      %v956 = vmax.f32 %v800, 0.0
      %v957 = vmax.f32 %v802, 0.0
      %v958 = vmax.f32 %v611, 0.0
      %v959 = vmax.f32 %v613, 0.0
      %v960 = vmax.f32 %v804, 0.0
      %v961 = vmax.f32 %v806, 0.0
      %v962 = vmax.f32 %v617, 0.0
      %v963 = vmax.f32 %v619, 0.0
      %v964 = vmax.f32 %v810, 0.0
      %v965 = vmax.f32 %v812, 0.0
      %v966 = vmax.f32 %v621, 0.0
      %v967 = vmax.f32 %v623, 0.0
      %v968 = vmax.f32 %v814, 0.0
      %v969 = vmax.f32 %v816, 0.0
      %v970 = vmax.f32 %v627, 0.0
      %v971 = vmax.f32 %v629, 0.0
      %v972 = vmax.f32 %v820, 0.0
      %v973 = vmax.f32 %v822, 0.0
      %v974 = vmax.f32 %v631, 0.0
      %v975 = vmax.f32 %v633, 0.0
      %v976 = vmax.f32 %v824, 0.0
      %v977 = vmax.f32 %v826, 0.0
      %v978 = vmax.f32 %v637, 0.0
      %v979 = vmax.f32 %v639, 0.0
      %v980 = vmax.f32 %v830, 0.0
      %v981 = vmax.f32 %v832, 0.0
      %v982 = vmax.f32 %v641, 0.0
      %v983 = vmax.f32 %v643, 0.0
      %v984 = vmax.f32 %v834, 0.0
      %v985 = vmax.f32 %v836, 0.0
      %v986 = vmax.f32 %v647, 0.0
      %v987 = vmax.f32 %v649, 0.0
      %v988 = vmax.f32 %v840, 0.0
      %v989 = vmax.f32 %v842, 0.0
      %v990 = vmax.f32 %v651, 0.0
      %v991 = vmax.f32 %v653, 0.0
      %v992 = vmax.f32 %v844, 0.0
      %v993 = vmax.f32 %v846, 0.0
      %v994 = vmax.f32 %v657, 0.0
      %v995 = vmax.f32 %v659, 0.0
      %v996 = vmax.f32 %v850, 0.0
      %v997 = vmax.f32 %v852, 0.0
      %v998 = vmax.f32 %v661, 0.0
      %v999 = vmax.f32 %v663, 0.0
      %v1000 = vmax.f32 %v854, 0.0
      %v1001 = vmax.f32 %v856, 0.0
      %v1002 = vmax.f32 %v667, 0.0
      %v1003 = vmax.f32 %v669, 0.0
      %v1004 = vmax.f32 %v860, 0.0
      %v1005 = vmax.f32 %v862, 0.0
      %v1006 = vmax.f32 %v671, 0.0
      %v1007 = vmax.f32 %v673, 0.0
      %v1008 = vmax.f32 %v864, 0.0
      %v1009 = vmax.f32 %v866, 0.0
      %v1010 = vmax.f32 %v677, 0.0
      %v1011 = vmax.f32 %v679, 0.0
      %v1012 = vmax.f32 %v870, 0.0
      %v1013 = vmax.f32 %v872, 0.0
      %v1014 = vmax.f32 %v681, 0.0
      %v1015 = vmax.f32 %v683, 0.0
      %v1016 = vmax.f32 %v874, 0.0
      %v1017 = vmax.f32 %v876, 0.0
      %v1018 = vmax.f32 %v687, 0.0
      %v1019 = vmax.f32 %v689, 0.0
      %v1020 = vmax.f32 %v880, 0.0
      %v1021 = vmax.f32 %v882, 0.0
      %v1022 = vmax.f32 %v691, 0.0
      %v1023 = vmax.f32 %v693, 0.0
      %v1024 = vmax.f32 %v884, 0.0
      %v1025 = vmax.f32 %v886, 0.0
      %v1026 = vmax.f32 %v697, 0.0
      %v1027 = vmax.f32 %v699, 0.0
      %v1028 = vmax.f32 %v890, 0.0
      %v1029 = vmax.f32 %v892, 0.0
      %v1030 = vmax.f32 %v701, 0.0
      %v1031 = vmax.f32 %v703, 0.0
      %v1032 = vmax.f32 %v894, 0.0
      %v1033 = vmax.f32 %v896, 0.0
      %v1034 = vmax.f32 %v707, 0.0
      %v1035 = vmax.f32 %v709, 0.0
      %v1036 = vmax.f32 %v900, 0.0
      %v1037 = vmax.f32 %v902, 0.0
      %v1038 = vmax.f32 %v711, 0.0
      %v1039 = vmax.f32 %v713, 0.0
      %v1040 = vmax.f32 %v904, 0.0
      %v1041 = vmax.f32 %v906, 0.0
      %v1042 = vmax.f32 %v717, 0.0
      %v1043 = vmax.f32 %v719, 0.0
      %v1044 = vmax.f32 %v910, 0.0
      %v1045 = vmax.f32 %v912, 0.0
      %v1046 = vmax.f32 %v721, 0.0
      %v1047 = vmax.f32 %v723, 0.0
      %v1048 = vmax.f32 %v914, 0.0
      %v1049 = vmax.f32 %v916, 0.0
      %v1050 = vmax.f32 %v727, 0.0
      %v1051 = vmax.f32 %v729, 0.0
      %v1052 = vmax.f32 %v920, 0.0
      %v1053 = vmax.f32 %v922, 0.0
      %v1054 = vmax.f32 %v731, 0.0
      %v1055 = vmax.f32 %v733, 0.0
      %v1056 = vmax.f32 %v924, 0.0
      %v1057 = vmax.f32 %v926, 0.0
      %v1058 = vmax.f32 %v737, 0.0
      %v1059 = vmax.f32 %v739, 0.0
      %v1060 = vmax.f32 %v930, 0.0
      %v1061 = vmax.f32 %v932, 0.0
      %v1062 = vmax.f32 %v741, 0.0
      %v1063 = vmax.f32 %v743, 0.0
      %v1064 = vmax.f32 %v934, 0.0
      %v1065 = vmax.f32 %v936, 0.0
      %v1066 = vpack.c.bf16 %v942, %v938
      %v1067 = vpack.c.bf16 %v943, %v939
      %v1068 = vpack.c.bf16 %v944, %v940
      %v1069 = vpack.c.bf16 %v945, %v941
      %v1070 = vpack.c.bf16 %v950, %v946
      %v1071 = vpack.c.bf16 %v951, %v947
      %v1072 = vpack.c.bf16 %v952, %v948
      %v1073 = vpack.c.bf16 %v953, %v949
      %v1074 = vpack.c.bf16 %v958, %v954
      %v1075 = vpack.c.bf16 %v959, %v955
      %v1076 = vpack.c.bf16 %v960, %v956
      %v1077 = vpack.c.bf16 %v961, %v957
      %v1078 = vpack.c.bf16 %v966, %v962
      %v1079 = vpack.c.bf16 %v967, %v963
      %v1080 = vpack.c.bf16 %v968, %v964
      %v1081 = vpack.c.bf16 %v969, %v965
      %v1082 = vpack.c.bf16 %v974, %v970
      %v1083 = vpack.c.bf16 %v975, %v971
      %v1084 = vpack.c.bf16 %v976, %v972
      %v1085 = vpack.c.bf16 %v977, %v973
      %v1086 = vpack.c.bf16 %v982, %v978
      %v1087 = vpack.c.bf16 %v983, %v979
      %v1088 = vpack.c.bf16 %v984, %v980
      %v1089 = vpack.c.bf16 %v985, %v981
      %v1090 = vpack.c.bf16 %v990, %v986
      %v1091 = vpack.c.bf16 %v991, %v987
      %v1092 = vpack.c.bf16 %v992, %v988
      %v1093 = vpack.c.bf16 %v993, %v989
      %v1094 = vpack.c.bf16 %v998, %v994
      %v1095 = vpack.c.bf16 %v999, %v995
      %v1096 = vpack.c.bf16 %v1000, %v996
      %v1097 = vpack.c.bf16 %v1001, %v997
      %v1098 = vpack.c.bf16 %v1006, %v1002
      %v1099 = vpack.c.bf16 %v1007, %v1003
      %v1100 = vpack.c.bf16 %v1008, %v1004
      %v1101 = vpack.c.bf16 %v1009, %v1005
      %v1102 = vpack.c.bf16 %v1014, %v1010
      %v1103 = vpack.c.bf16 %v1015, %v1011
      %v1104 = vpack.c.bf16 %v1016, %v1012
      %v1105 = vpack.c.bf16 %v1017, %v1013
      %v1106 = vpack.c.bf16 %v1022, %v1018
      %v1107 = vpack.c.bf16 %v1023, %v1019
      %v1108 = vpack.c.bf16 %v1024, %v1020
      %v1109 = vpack.c.bf16 %v1025, %v1021
      %v1110 = vpack.c.bf16 %v1030, %v1026
      %v1111 = vpack.c.bf16 %v1031, %v1027
      %v1112 = vpack.c.bf16 %v1032, %v1028
      %v1113 = vpack.c.bf16 %v1033, %v1029
      %v1114 = vpack.c.bf16 %v1038, %v1034
      %v1115 = vpack.c.bf16 %v1039, %v1035
      %v1116 = vpack.c.bf16 %v1040, %v1036
      %v1117 = vpack.c.bf16 %v1041, %v1037
      %v1118 = vpack.c.bf16 %v1046, %v1042
      %v1119 = vpack.c.bf16 %v1047, %v1043
      %v1120 = vpack.c.bf16 %v1048, %v1044
      %v1121 = vpack.c.bf16 %v1049, %v1045
      %v1122 = vpack.c.bf16 %v1054, %v1050
      %v1123 = vpack.c.bf16 %v1055, %v1051
      %v1124 = vpack.c.bf16 %v1056, %v1052
      %v1125 = vpack.c.bf16 %v1057, %v1053
      %v1126 = vpack.c.bf16 %v1062, %v1058
      %v1127 = vpack.c.bf16 %v1063, %v1059
      %v1128 = vpack.c.bf16 %v1064, %v1060
      %v1129 = vpack.c.bf16 %v1065, %v1061
      %v1130 = vld [vmem:[%s3] sm:$0xf]
      %v1131 = vld [vmem:[%s3 + $0x4] sm:$0xf]
      %v1132 = vld [vmem:[%s3 + $0x8] sm:$0xf]
      %v1133 = vld [vmem:[%s3 + $0xc] sm:$0xf]
      %v1134 = vld [vmem:[%s3 + $0x10] sm:$0xf]
      %v1135 = vld [vmem:[%s3 + $0x14] sm:$0xf]
      %v1136 = vld [vmem:[%s3 + $0x18] sm:$0xf]
      %v1137 = vld [vmem:[%s3 + $0x1c] sm:$0xf]
      %v1138 = vld [vmem:[%s3 + $0x20] sm:$0xf]
      %v1139 = vld [vmem:[%s3 + $0x24] sm:$0xf]
      %v1140 = vld [vmem:[%s3 + $0x28] sm:$0xf]
      %v1141 = vld [vmem:[%s3 + $0x2c] sm:$0xf]
      %v1142 = vld [vmem:[%s3 + $0x30] sm:$0xf]
      %v1143 = vld [vmem:[%s3 + $0x34] sm:$0xf]
      %v1144 = vld [vmem:[%s3 + $0x38] sm:$0xf]
      %v1145 = vld [vmem:[%s3 + $0x3c] sm:$0xf]
      %v1146 = vld [vmem:[%s3 + $0x40] sm:$0xf]
      %v1147 = vld [vmem:[%s3 + $0x44] sm:$0xf]
      %v1148 = vld [vmem:[%s3 + $0x48] sm:$0xf]
      %v1149 = vld [vmem:[%s3 + $0x4c] sm:$0xf]
      %v1150 = vld [vmem:[%s3 + $0x50] sm:$0xf]
      %v1151 = vld [vmem:[%s3 + $0x54] sm:$0xf]
      %v1152 = vld [vmem:[%s3 + $0x58] sm:$0xf]
      %v1153 = vld [vmem:[%s3 + $0x5c] sm:$0xf]
      %v1154 = vld [vmem:[%s3 + $0x60] sm:$0xf]
      %v1155 = vld [vmem:[%s3 + $0x64] sm:$0xf]
      %v1156 = vld [vmem:[%s3 + $0x68] sm:$0xf]
      %v1157 = vld [vmem:[%s3 + $0x6c] sm:$0xf]
      %v1158 = vld [vmem:[%s3 + $0x70] sm:$0xf]
      %v1159 = vld [vmem:[%s3 + $0x74] sm:$0xf]
      %v1160 = vld [vmem:[%s3 + $0x78] sm:$0xf]
      %v1161 = vld [vmem:[%s3 + $0x7c] sm:$0xf]
      %v1162 = vld [vmem:[%s3 + $0x80] sm:$0xf]
      %v1163 = vld [vmem:[%s3 + $0x84] sm:$0xf]
      %v1164 = vld [vmem:[%s3 + $0x88] sm:$0xf]
      %v1165 = vld [vmem:[%s3 + $0x8c] sm:$0xf]
      %v1166 = vld [vmem:[%s3 + $0x90] sm:$0xf]
      %v1167 = vld [vmem:[%s3 + $0x94] sm:$0xf]
      %v1168 = vld [vmem:[%s3 + $0x98] sm:$0xf]
      %v1169 = vld [vmem:[%s3 + $0x9c] sm:$0xf]
      %v1170 = vld [vmem:[%s3 + $0xa0] sm:$0xf]
      %v1171 = vld [vmem:[%s3 + $0xa4] sm:$0xf]
      %v1172 = vld [vmem:[%s3 + $0xa8] sm:$0xf]
      %v1173 = vld [vmem:[%s3 + $0xac] sm:$0xf]
      %v1174 = vld [vmem:[%s3 + $0xb0] sm:$0xf]
      %v1175 = vld [vmem:[%s3 + $0xb4] sm:$0xf]
      %v1176 = vld [vmem:[%s3 + $0xb8] sm:$0xf]
      %v1177 = vld [vmem:[%s3 + $0xbc] sm:$0xf]
      %v1178 = vld [vmem:[%s3 + $0xc0] sm:$0xf]
      %v1179 = vld [vmem:[%s3 + $0xc4] sm:$0xf]
      %v1180 = vld [vmem:[%s3 + $0xc8] sm:$0xf]
      %v1181 = vld [vmem:[%s3 + $0xcc] sm:$0xf]
      %v1182 = vld [vmem:[%s3 + $0xd0] sm:$0xf]
      %v1183 = vld [vmem:[%s3 + $0xd4] sm:$0xf]
      %v1184 = vld [vmem:[%s3 + $0xd8] sm:$0xf]
      %v1185 = vld [vmem:[%s3 + $0xdc] sm:$0xf]
      %v1186 = vld [vmem:[%s3 + $0xe0] sm:$0xf]
      %v1187 = vld [vmem:[%s3 + $0xe4] sm:$0xf]
      %v1188 = vld [vmem:[%s3 + $0xe8] sm:$0xf]
      %v1189 = vld [vmem:[%s3 + $0xec] sm:$0xf]
      %v1190 = vld [vmem:[%s3 + $0xf0] sm:$0xf]
      %v1191 = vld [vmem:[%s3 + $0xf4] sm:$0xf]
      %v1192 = vld [vmem:[%s3 + $0xf8] sm:$0xf]
      %v1193 = vld [vmem:[%s3 + $0xfc] sm:$0xf]
      %v1194 = vld [vmem:[%s4] sm:$0x1]
      %v1196 = vlaneseq
      %v1197 = vshrl.u32 %v1196, 7
      %v1198 = vsub.s32 0, %v1197
      %v1199 = vrot.slane %v1194, %v1198
      %v1265 = vunpack.c.l.b16 %v1130
      %v1266 = vunpack.c.l.b16 %v1131
      %v1267 = vunpack.c.l.b16 %v1132
      %v1268 = vunpack.c.l.b16 %v1133
      %v1269 = vunpack.c.l.b16 %v1134
      %v1270 = vunpack.c.l.b16 %v1135
      %v1271 = vunpack.c.l.b16 %v1136
      %v1272 = vunpack.c.l.b16 %v1137
      %v1273 = vunpack.c.l.b16 %v1138
      %v1274 = vunpack.c.l.b16 %v1139
      %v1275 = vunpack.c.l.b16 %v1140
      %v1276 = vunpack.c.l.b16 %v1141
      %v1277 = vunpack.c.l.b16 %v1142
      %v1278 = vunpack.c.l.b16 %v1143
      %v1279 = vunpack.c.l.b16 %v1144
      %v1280 = vunpack.c.l.b16 %v1145
      %v1281 = vunpack.c.l.b16 %v1146
      %v1282 = vunpack.c.l.b16 %v1147
      %v1283 = vunpack.c.l.b16 %v1148
      %v1284 = vunpack.c.l.b16 %v1149
      %v1285 = vunpack.c.l.b16 %v1150
      %v1286 = vunpack.c.l.b16 %v1151
      %v1287 = vunpack.c.l.b16 %v1152
      %v1288 = vunpack.c.l.b16 %v1153
      %v1289 = vunpack.c.l.b16 %v1154
      %v1290 = vunpack.c.l.b16 %v1155
      %v1291 = vunpack.c.l.b16 %v1156
      %v1292 = vunpack.c.l.b16 %v1157
      %v1293 = vunpack.c.l.b16 %v1158
      %v1294 = vunpack.c.l.b16 %v1159
      %v1295 = vunpack.c.l.b16 %v1160
      %v1296 = vunpack.c.l.b16 %v1161
      %v1297 = vunpack.c.l.b16 %v1162
      %v1298 = vunpack.c.l.b16 %v1163
      %v1299 = vunpack.c.l.b16 %v1164
      %v1300 = vunpack.c.l.b16 %v1165
      %v1301 = vunpack.c.l.b16 %v1166
      %v1302 = vunpack.c.l.b16 %v1167
      %v1303 = vunpack.c.l.b16 %v1168
      %v1304 = vunpack.c.l.b16 %v1169
      %v1305 = vunpack.c.l.b16 %v1170
      %v1306 = vunpack.c.l.b16 %v1171
      %v1307 = vunpack.c.l.b16 %v1172
      %v1308 = vunpack.c.l.b16 %v1173
      %v1309 = vunpack.c.l.b16 %v1174
      %v1310 = vunpack.c.l.b16 %v1175
      %v1311 = vunpack.c.l.b16 %v1176
      %v1312 = vunpack.c.l.b16 %v1177
      %v1313 = vunpack.c.l.b16 %v1178
      %v1314 = vunpack.c.l.b16 %v1179
      %v1315 = vunpack.c.l.b16 %v1180
      %v1316 = vunpack.c.l.b16 %v1181
      %v1317 = vunpack.c.l.b16 %v1182
      %v1318 = vunpack.c.l.b16 %v1183
      %v1319 = vunpack.c.l.b16 %v1184
      %v1320 = vunpack.c.l.b16 %v1185
      %v1321 = vunpack.c.l.b16 %v1186
      %v1322 = vunpack.c.l.b16 %v1187
      %v1323 = vunpack.c.l.b16 %v1188
      %v1324 = vunpack.c.l.b16 %v1189
      %v1325 = vunpack.c.l.b16 %v1190
      %v1326 = vunpack.c.l.b16 %v1191
      %v1327 = vunpack.c.l.b16 %v1192
      %v1328 = vunpack.c.l.b16 %v1193
      %v1329 = vpack.c.b16 %v1266, %v1265
      %v1330 = vpack.c.b16 %v1268, %v1267
      %v1331 = vpack.c.b16 %v1270, %v1269
      %v1332 = vpack.c.b16 %v1272, %v1271
      %v1333 = vpack.c.b16 %v1274, %v1273
      %v1334 = vpack.c.b16 %v1276, %v1275
      %v1335 = vpack.c.b16 %v1278, %v1277
      %v1336 = vpack.c.b16 %v1280, %v1279
      %v1337 = vpack.c.b16 %v1282, %v1281
      %v1338 = vpack.c.b16 %v1284, %v1283
      %v1339 = vpack.c.b16 %v1286, %v1285
      %v1340 = vpack.c.b16 %v1288, %v1287
      %v1341 = vpack.c.b16 %v1290, %v1289
      %v1342 = vpack.c.b16 %v1292, %v1291
      %v1343 = vpack.c.b16 %v1294, %v1293
      %v1344 = vpack.c.b16 %v1296, %v1295
      %v1345 = vpack.c.b16 %v1298, %v1297
      %v1346 = vpack.c.b16 %v1300, %v1299
      %v1347 = vpack.c.b16 %v1302, %v1301
      %v1348 = vpack.c.b16 %v1304, %v1303
      %v1349 = vpack.c.b16 %v1306, %v1305
      %v1350 = vpack.c.b16 %v1308, %v1307
      %v1351 = vpack.c.b16 %v1310, %v1309
      %v1352 = vpack.c.b16 %v1312, %v1311
      %v1353 = vpack.c.b16 %v1314, %v1313
      %v1354 = vpack.c.b16 %v1316, %v1315
      %v1355 = vpack.c.b16 %v1318, %v1317
      %v1356 = vpack.c.b16 %v1320, %v1319
      %v1357 = vpack.c.b16 %v1322, %v1321
      %v1358 = vpack.c.b16 %v1324, %v1323
      %v1359 = vpack.c.b16 %v1326, %v1325
      %v1360 = vpack.c.b16 %v1328, %v1327
      %1393 = vmatprep.subr.bf16.mxu0 0
      %1394 = vmatpush1.bf16.msra.mxu0 %v1329
      %1395 = vmatprep.subr.bf16.mxu0 0
      %1396 = vmatpush1.bf16.msra.mxu0 %v1330
      %1397 = vmatprep.subr.bf16.mxu0 0
      %1398 = vmatpush1.bf16.msra.mxu0 %v1331
      %1399 = vmatprep.subr.bf16.mxu0 0
      %1400 = vmatpush1.bf16.msra.mxu0 %v1332
      %1401 = vmatprep.subr.bf16.mxu0 0
      %1402 = vmatpush1.bf16.msra.mxu0 %v1333
      %1403 = vmatprep.subr.bf16.mxu0 0
      %1404 = vmatpush1.bf16.msra.mxu0 %v1334
      %1405 = vmatprep.subr.bf16.mxu0 0
      %1406 = vmatpush1.bf16.msra.mxu0 %v1335
      %1407 = vmatprep.subr.bf16.mxu0 0
      %1408 = vmatpush1.bf16.msra.mxu0 %v1336
      %1409 = vmatprep.subr.bf16.mxu0 0
      %1410 = vmatpush1.bf16.msra.mxu0 %v1337
      %1411 = vmatprep.subr.bf16.mxu0 0
      %1412 = vmatpush1.bf16.msra.mxu0 %v1338
      %1413 = vmatprep.subr.bf16.mxu0 0
      %1414 = vmatpush1.bf16.msra.mxu0 %v1339
      %1415 = vmatprep.subr.bf16.mxu0 0
      %1416 = vmatpush1.bf16.msra.mxu0 %v1340
      %1417 = vmatprep.subr.bf16.mxu0 0
      %1418 = vmatpush1.bf16.msra.mxu0 %v1341
      %1419 = vmatprep.subr.bf16.mxu0 0
      %1420 = vmatpush1.bf16.msra.mxu0 %v1342
      %1421 = vmatprep.subr.bf16.mxu0 0
      %1422 = vmatpush1.bf16.msra.mxu0 %v1343
      %1423 = vmatprep.subr.bf16.mxu0 0
      %1424 = vmatpush1.bf16.msra.mxu0 %v1344
      %1425 = vmatprep.mubr.bf16.mxu0 %v1067
      %1426 = vmatmul.mubr.bf16.gmra.mrb[0].mxu0 %v1066
      %v1427 = vpop.f32.mrb[0].mxu0
      %v1428 = vadd.f32 %v1199, %v1427
      %v1429 = vpop.f32.mrb[0].mxu0
      %v1430 = vpop.f32.mrb[0].mxu0
      %v1431 = vadd.f32 %v1199, %v1430
      %v1432 = vpop.f32.mrb[0].mxu0
      %1433 = vmatprep.mubr.bf16.mxu0 %v1071
      %1434 = vmatmul.mubr.bf16.gmra.mrb[0].mxu0 %v1070
      %v1435 = vpop.f32.mrb[0].mxu0
      %v1436 = vadd.f32 %v1199, %v1435
      %v1437 = vpop.f32.mrb[0].mxu0
      %v1438 = vpop.f32.mrb[0].mxu0
      %v1439 = vadd.f32 %v1199, %v1438
      %v1440 = vpop.f32.mrb[0].mxu0
      %1441 = vmatprep.mubr.bf16.mxu0 %v1075
      %1442 = vmatmul.mubr.bf16.gmra.mrb[0].mxu0 %v1074
      %v1443 = vpop.f32.mrb[0].mxu0
      %v1444 = vadd.f32 %v1199, %v1443
      %v1445 = vpop.f32.mrb[0].mxu0
      %v1446 = vpop.f32.mrb[0].mxu0
      %v1447 = vadd.f32 %v1199, %v1446
      %v1448 = vpop.f32.mrb[0].mxu0
      %1449 = vmatprep.mubr.bf16.mxu0 %v1079
      %1450 = vmatmul.mubr.bf16.gmra.mrb[0].mxu0 %v1078
      %v1451 = vpop.f32.mrb[0].mxu0
      %v1452 = vadd.f32 %v1199, %v1451
      %v1453 = vpop.f32.mrb[0].mxu0
      %v1454 = vpop.f32.mrb[0].mxu0
      %v1455 = vadd.f32 %v1199, %v1454
      %v1456 = vpop.f32.mrb[0].mxu0
      %1457 = vmatprep.mubr.bf16.mxu0 %v1083
      %1458 = vmatmul.mubr.bf16.gmra.mrb[0].mxu0 %v1082
      %v1459 = vpop.f32.mrb[0].mxu0
      %v1460 = vadd.f32 %v1199, %v1459
      %v1461 = vpop.f32.mrb[0].mxu0
      %v1462 = vpop.f32.mrb[0].mxu0
      %v1463 = vadd.f32 %v1199, %v1462
      %v1464 = vpop.f32.mrb[0].mxu0
      %1465 = vmatprep.mubr.bf16.mxu0 %v1087
      %1466 = vmatmul.mubr.bf16.gmra.mrb[0].mxu0 %v1086
      %v1467 = vpop.f32.mrb[0].mxu0
      %v1468 = vadd.f32 %v1199, %v1467
      %v1469 = vpop.f32.mrb[0].mxu0
      %v1470 = vpop.f32.mrb[0].mxu0
      %v1471 = vadd.f32 %v1199, %v1470
      %v1472 = vpop.f32.mrb[0].mxu0
      %1473 = vmatprep.mubr.bf16.mxu0 %v1091
      %1474 = vmatmul.mubr.bf16.gmra.mrb[0].mxu0 %v1090
      %v1475 = vpop.f32.mrb[0].mxu0
      %v1476 = vadd.f32 %v1199, %v1475
      %v1477 = vpop.f32.mrb[0].mxu0
      %v1478 = vpop.f32.mrb[0].mxu0
      %v1479 = vadd.f32 %v1199, %v1478
      %v1480 = vpop.f32.mrb[0].mxu0
      %1481 = vmatprep.mubr.bf16.mxu0 %v1095
      %1482 = vmatmul.mubr.bf16.gmra.mrb[0].mxu0 %v1094
      %v1483 = vpop.f32.mrb[0].mxu0
      %v1484 = vadd.f32 %v1199, %v1483
      %v1485 = vpop.f32.mrb[0].mxu0
      %v1486 = vpop.f32.mrb[0].mxu0
      %v1487 = vadd.f32 %v1199, %v1486
      %v1488 = vpop.f32.mrb[0].mxu0
      %1489 = vmatprep.mubr.bf16.mxu0 %v1099
      %1490 = vmatmul.mubr.bf16.gmra.mrb[0].mxu0 %v1098
      %v1491 = vpop.f32.mrb[0].mxu0
      %v1492 = vadd.f32 %v1199, %v1491
      %v1493 = vpop.f32.mrb[0].mxu0
      %v1494 = vpop.f32.mrb[0].mxu0
      %v1495 = vadd.f32 %v1199, %v1494
      %v1496 = vpop.f32.mrb[0].mxu0
      %1497 = vmatprep.mubr.bf16.mxu0 %v1103
      %1498 = vmatmul.mubr.bf16.gmra.mrb[0].mxu0 %v1102
      %v1499 = vpop.f32.mrb[0].mxu0
      %v1500 = vadd.f32 %v1199, %v1499
      %v1501 = vpop.f32.mrb[0].mxu0
      %v1502 = vpop.f32.mrb[0].mxu0
      %v1503 = vadd.f32 %v1199, %v1502
      %v1504 = vpop.f32.mrb[0].mxu0
      %1505 = vmatprep.mubr.bf16.mxu0 %v1107
      %1506 = vmatmul.mubr.bf16.gmra.mrb[0].mxu0 %v1106
      %v1507 = vpop.f32.mrb[0].mxu0
      %v1508 = vadd.f32 %v1199, %v1507
      %v1509 = vpop.f32.mrb[0].mxu0
      %v1510 = vpop.f32.mrb[0].mxu0
      %v1511 = vadd.f32 %v1199, %v1510
      %v1512 = vpop.f32.mrb[0].mxu0
      %1513 = vmatprep.mubr.bf16.mxu0 %v1111
      %1514 = vmatmul.mubr.bf16.gmra.mrb[0].mxu0 %v1110
      %v1515 = vpop.f32.mrb[0].mxu0
      %v1516 = vadd.f32 %v1199, %v1515
      %v1517 = vpop.f32.mrb[0].mxu0
      %v1518 = vpop.f32.mrb[0].mxu0
      %v1519 = vadd.f32 %v1199, %v1518
      %v1520 = vpop.f32.mrb[0].mxu0
      %1521 = vmatprep.mubr.bf16.mxu0 %v1115
      %1522 = vmatmul.mubr.bf16.gmra.mrb[0].mxu0 %v1114
      %v1523 = vpop.f32.mrb[0].mxu0
      %v1524 = vadd.f32 %v1199, %v1523
      %v1525 = vpop.f32.mrb[0].mxu0
      %v1526 = vpop.f32.mrb[0].mxu0
      %v1527 = vadd.f32 %v1199, %v1526
      %v1528 = vpop.f32.mrb[0].mxu0
      %1529 = vmatprep.mubr.bf16.mxu0 %v1119
      %1530 = vmatmul.mubr.bf16.gmra.mrb[0].mxu0 %v1118
      %v1531 = vpop.f32.mrb[0].mxu0
      %v1532 = vadd.f32 %v1199, %v1531
      %v1533 = vpop.f32.mrb[0].mxu0
      %v1534 = vpop.f32.mrb[0].mxu0
      %v1535 = vadd.f32 %v1199, %v1534
      %v1536 = vpop.f32.mrb[0].mxu0
      %1537 = vmatprep.mubr.bf16.mxu0 %v1123
      %1538 = vmatmul.mubr.bf16.gmra.mrb[0].mxu0 %v1122
      %v1539 = vpop.f32.mrb[0].mxu0
      %v1540 = vadd.f32 %v1199, %v1539
      %v1541 = vpop.f32.mrb[0].mxu0
      %v1542 = vpop.f32.mrb[0].mxu0
      %v1543 = vadd.f32 %v1199, %v1542
      %v1544 = vpop.f32.mrb[0].mxu0
      %1545 = vmatprep.mubr.bf16.mxu0 %v1127
      %1546 = vmatmul.mubr.bf16.gmra.mrb[0].mxu0 %v1126
      %v1547 = vpop.f32.mrb[0].mxu0
      %v1548 = vadd.f32 %v1199, %v1547
      %v1549 = vpop.f32.mrb[0].mxu0
      %v1550 = vpop.f32.mrb[0].mxu0
      %v1551 = vadd.f32 %v1199, %v1550
      %v1552 = vpop.f32.mrb[0].mxu0
      %1553 = vdwg.mxu0
      %1554 = vmatprep.subr.bf16.mxu0 0
      %1555 = vmatpush1.bf16.msra.mxu0 %v1345
      %1556 = vmatprep.subr.bf16.mxu0 0
      %1557 = vmatpush1.bf16.msra.mxu0 %v1346
      %1558 = vmatprep.subr.bf16.mxu0 0
      %1559 = vmatpush1.bf16.msra.mxu0 %v1347
      %1560 = vmatprep.subr.bf16.mxu0 0
      %1561 = vmatpush1.bf16.msra.mxu0 %v1348
      %1562 = vmatprep.subr.bf16.mxu0 0
      %1563 = vmatpush1.bf16.msra.mxu0 %v1349
      %1564 = vmatprep.subr.bf16.mxu0 0
      %1565 = vmatpush1.bf16.msra.mxu0 %v1350
      %1566 = vmatprep.subr.bf16.mxu0 0
      %1567 = vmatpush1.bf16.msra.mxu0 %v1351
      %1568 = vmatprep.subr.bf16.mxu0 0
      %1569 = vmatpush1.bf16.msra.mxu0 %v1352
      %1570 = vmatprep.subr.bf16.mxu0 0
      %1571 = vmatpush1.bf16.msra.mxu0 %v1353
      %1572 = vmatprep.subr.bf16.mxu0 0
      %1573 = vmatpush1.bf16.msra.mxu0 %v1354
      %1574 = vmatprep.subr.bf16.mxu0 0
      %1575 = vmatpush1.bf16.msra.mxu0 %v1355
      %1576 = vmatprep.subr.bf16.mxu0 0
      %1577 = vmatpush1.bf16.msra.mxu0 %v1356
      %1578 = vmatprep.subr.bf16.mxu0 0
      %1579 = vmatpush1.bf16.msra.mxu0 %v1357
      %1580 = vmatprep.subr.bf16.mxu0 0
      %1581 = vmatpush1.bf16.msra.mxu0 %v1358
      %1582 = vmatprep.subr.bf16.mxu0 0
      %1583 = vmatpush1.bf16.msra.mxu0 %v1359
      %1584 = vmatprep.subr.bf16.mxu0 0
      %1585 = vmatpush1.bf16.msra.mxu0 %v1360
      %1586 = vmatprep.mubr.bf16.mxu0 %v1069
      %1587 = vmatmul.mubr.bf16.gmra.mrb[0].mxu0 %v1068
      %v1588 = vpop.f32.mrb[0].mxu0
      %v1589 = vadd.f32 %v1428, %v1588
      %v1590 = vpop.f32.mrb[0].mxu0
      %v1591 = vpop.f32.mrb[0].mxu0
      %v1592 = vadd.f32 %v1431, %v1591
      %v1593 = vpop.f32.mrb[0].mxu0
      %1594 = vmatprep.mubr.bf16.mxu0 %v1073
      %1595 = vmatmul.mubr.bf16.gmra.mrb[0].mxu0 %v1072
      %v1596 = vpop.f32.mrb[0].mxu0
      %v1597 = vadd.f32 %v1436, %v1596
      %v1598 = vpop.f32.mrb[0].mxu0
      %v1599 = vpop.f32.mrb[0].mxu0
      %v1600 = vadd.f32 %v1439, %v1599
      %v1601 = vpop.f32.mrb[0].mxu0
      %1602 = vmatprep.mubr.bf16.mxu0 %v1077
      %1603 = vmatmul.mubr.bf16.gmra.mrb[0].mxu0 %v1076
      %v1604 = vpop.f32.mrb[0].mxu0
      %v1605 = vadd.f32 %v1444, %v1604
      %v1606 = vpop.f32.mrb[0].mxu0
      %v1607 = vpop.f32.mrb[0].mxu0
      %v1608 = vadd.f32 %v1447, %v1607
      %v1609 = vpop.f32.mrb[0].mxu0
      %1610 = vmatprep.mubr.bf16.mxu0 %v1081
      %1611 = vmatmul.mubr.bf16.gmra.mrb[0].mxu0 %v1080
      %v1612 = vpop.f32.mrb[0].mxu0
      %v1613 = vadd.f32 %v1452, %v1612
      %v1614 = vpop.f32.mrb[0].mxu0
      %v1615 = vpop.f32.mrb[0].mxu0
      %v1616 = vadd.f32 %v1455, %v1615
      %v1617 = vpop.f32.mrb[0].mxu0
      %1618 = vmatprep.mubr.bf16.mxu0 %v1085
      %1619 = vmatmul.mubr.bf16.gmra.mrb[0].mxu0 %v1084
      %v1620 = vpop.f32.mrb[0].mxu0
      %v1621 = vadd.f32 %v1460, %v1620
      %v1622 = vpop.f32.mrb[0].mxu0
      %v1623 = vpop.f32.mrb[0].mxu0
      %v1624 = vadd.f32 %v1463, %v1623
      %v1625 = vpop.f32.mrb[0].mxu0
      %1626 = vmatprep.mubr.bf16.mxu0 %v1089
      %1627 = vmatmul.mubr.bf16.gmra.mrb[0].mxu0 %v1088
      %v1628 = vpop.f32.mrb[0].mxu0
      %v1629 = vadd.f32 %v1468, %v1628
      %v1630 = vpop.f32.mrb[0].mxu0
      %v1631 = vpop.f32.mrb[0].mxu0
      %v1632 = vadd.f32 %v1471, %v1631
      %v1633 = vpop.f32.mrb[0].mxu0
      %1634 = vmatprep.mubr.bf16.mxu0 %v1093
      %1635 = vmatmul.mubr.bf16.gmra.mrb[0].mxu0 %v1092
      %v1636 = vpop.f32.mrb[0].mxu0
      %v1637 = vadd.f32 %v1476, %v1636
      %v1638 = vpop.f32.mrb[0].mxu0
      %v1639 = vpop.f32.mrb[0].mxu0
      %v1640 = vadd.f32 %v1479, %v1639
      %v1641 = vpop.f32.mrb[0].mxu0
      %1642 = vmatprep.mubr.bf16.mxu0 %v1097
      %1643 = vmatmul.mubr.bf16.gmra.mrb[0].mxu0 %v1096
      %v1644 = vpop.f32.mrb[0].mxu0
      %v1645 = vadd.f32 %v1484, %v1644
      %v1646 = vpop.f32.mrb[0].mxu0
      %v1647 = vpop.f32.mrb[0].mxu0
      %v1648 = vadd.f32 %v1487, %v1647
      %v1649 = vpop.f32.mrb[0].mxu0
      %1650 = vmatprep.mubr.bf16.mxu0 %v1101
      %1651 = vmatmul.mubr.bf16.gmra.mrb[0].mxu0 %v1100
      %v1652 = vpop.f32.mrb[0].mxu0
      %v1653 = vadd.f32 %v1492, %v1652
      %v1654 = vpop.f32.mrb[0].mxu0
      %v1655 = vpop.f32.mrb[0].mxu0
      %v1656 = vadd.f32 %v1495, %v1655
      %v1657 = vpop.f32.mrb[0].mxu0
      %1658 = vmatprep.mubr.bf16.mxu0 %v1105
      %1659 = vmatmul.mubr.bf16.gmra.mrb[0].mxu0 %v1104
      %v1660 = vpop.f32.mrb[0].mxu0
      %v1661 = vadd.f32 %v1500, %v1660
      %v1662 = vpop.f32.mrb[0].mxu0
      %v1663 = vpop.f32.mrb[0].mxu0
      %v1664 = vadd.f32 %v1503, %v1663
      %v1665 = vpop.f32.mrb[0].mxu0
      %1666 = vmatprep.mubr.bf16.mxu0 %v1109
      %1667 = vmatmul.mubr.bf16.gmra.mrb[0].mxu0 %v1108
      %v1668 = vpop.f32.mrb[0].mxu0
      %v1669 = vadd.f32 %v1508, %v1668
      %v1670 = vpop.f32.mrb[0].mxu0
      %v1671 = vpop.f32.mrb[0].mxu0
      %v1672 = vadd.f32 %v1511, %v1671
      %v1673 = vpop.f32.mrb[0].mxu0
      %1674 = vmatprep.mubr.bf16.mxu0 %v1113
      %1675 = vmatmul.mubr.bf16.gmra.mrb[0].mxu0 %v1112
      %v1676 = vpop.f32.mrb[0].mxu0
      %v1677 = vadd.f32 %v1516, %v1676
      %v1678 = vpop.f32.mrb[0].mxu0
      %v1679 = vpop.f32.mrb[0].mxu0
      %v1680 = vadd.f32 %v1519, %v1679
      %v1681 = vpop.f32.mrb[0].mxu0
      %1682 = vmatprep.mubr.bf16.mxu0 %v1117
      %1683 = vmatmul.mubr.bf16.gmra.mrb[0].mxu0 %v1116
      %v1684 = vpop.f32.mrb[0].mxu0
      %v1685 = vadd.f32 %v1524, %v1684
      %v1686 = vpop.f32.mrb[0].mxu0
      %v1687 = vpop.f32.mrb[0].mxu0
      %v1688 = vadd.f32 %v1527, %v1687
      %v1689 = vpop.f32.mrb[0].mxu0
      %1690 = vmatprep.mubr.bf16.mxu0 %v1121
      %1691 = vmatmul.mubr.bf16.gmra.mrb[0].mxu0 %v1120
      %v1692 = vpop.f32.mrb[0].mxu0
      %v1693 = vadd.f32 %v1532, %v1692
      %v1694 = vpop.f32.mrb[0].mxu0
      %v1695 = vpop.f32.mrb[0].mxu0
      %v1696 = vadd.f32 %v1535, %v1695
      %v1697 = vpop.f32.mrb[0].mxu0
      %1698 = vmatprep.mubr.bf16.mxu0 %v1125
      %1699 = vmatmul.mubr.bf16.gmra.mrb[0].mxu0 %v1124
      %v1700 = vpop.f32.mrb[0].mxu0
      %v1701 = vadd.f32 %v1540, %v1700
      %v1702 = vpop.f32.mrb[0].mxu0
      %v1703 = vpop.f32.mrb[0].mxu0
      %v1704 = vadd.f32 %v1543, %v1703
      %v1705 = vpop.f32.mrb[0].mxu0
      %1706 = vmatprep.mubr.bf16.mxu0 %v1129
      %1707 = vmatmul.mubr.bf16.gmra.mrb[0].mxu0 %v1128
      %v1708 = vpop.f32.mrb[0].mxu0
      %v1709 = vadd.f32 %v1548, %v1708
      %v1710 = vpop.f32.mrb[0].mxu0
      %v1711 = vpop.f32.mrb[0].mxu0
      %v1712 = vadd.f32 %v1551, %v1711
      %v1713 = vpop.f32.mrb[0].mxu0
      %1714 = vdwg.mxu0
      %v1715 = vmax.f32 %v1589, 0.0
      %v1716 = vmax.f32 %v1592, 0.0
      %v1717 = vmax.f32 %v1597, 0.0
      %v1718 = vmax.f32 %v1600, 0.0
      %v1719 = vmax.f32 %v1605, 0.0
      %v1720 = vmax.f32 %v1608, 0.0
      %v1721 = vmax.f32 %v1613, 0.0
      %v1722 = vmax.f32 %v1616, 0.0
      %v1723 = vmax.f32 %v1621, 0.0
      %v1724 = vmax.f32 %v1624, 0.0
      %v1725 = vmax.f32 %v1629, 0.0
      %v1726 = vmax.f32 %v1632, 0.0
      %v1727 = vmax.f32 %v1637, 0.0
      %v1728 = vmax.f32 %v1640, 0.0
      %v1729 = vmax.f32 %v1645, 0.0
      %v1730 = vmax.f32 %v1648, 0.0
      %v1731 = vmax.f32 %v1653, 0.0
      %v1732 = vmax.f32 %v1656, 0.0
      %v1733 = vmax.f32 %v1661, 0.0
      %v1734 = vmax.f32 %v1664, 0.0
      %v1735 = vmax.f32 %v1669, 0.0
      %v1736 = vmax.f32 %v1672, 0.0
      %v1737 = vmax.f32 %v1677, 0.0
      %v1738 = vmax.f32 %v1680, 0.0
      %v1739 = vmax.f32 %v1685, 0.0
      %v1740 = vmax.f32 %v1688, 0.0
      %v1741 = vmax.f32 %v1693, 0.0
      %v1742 = vmax.f32 %v1696, 0.0
      %v1743 = vmax.f32 %v1701, 0.0
      %v1744 = vmax.f32 %v1704, 0.0
      %v1745 = vmax.f32 %v1709, 0.0
      %v1746 = vmax.f32 %v1712, 0.0
      %v1747 = vpack.c.bf16 %v1716, %v1715
      %v1748 = vpack.c.bf16 %v1718, %v1717
      %v1749 = vpack.c.bf16 %v1720, %v1719
      %v1750 = vpack.c.bf16 %v1722, %v1721
      %v1751 = vpack.c.bf16 %v1724, %v1723
      %v1752 = vpack.c.bf16 %v1726, %v1725
      %v1753 = vpack.c.bf16 %v1728, %v1727
      %v1754 = vpack.c.bf16 %v1730, %v1729
      %v1755 = vpack.c.bf16 %v1732, %v1731
      %v1756 = vpack.c.bf16 %v1734, %v1733
      %v1757 = vpack.c.bf16 %v1736, %v1735
      %v1758 = vpack.c.bf16 %v1738, %v1737
      %v1759 = vpack.c.bf16 %v1740, %v1739
      %v1760 = vpack.c.bf16 %v1742, %v1741
      %v1761 = vpack.c.bf16 %v1744, %v1743
      %v1762 = vpack.c.bf16 %v1746, %v1745
      %v1763 = vld [vmem:[%s5] sm:$0xff]
      %v1764 = vld [vmem:[%s5 + $0x8] sm:$0xff]
      %v1765 = vld [vmem:[%s5 + $0x10] sm:$0xff]
      %v1766 = vld [vmem:[%s5 + $0x18] sm:$0xff]
      %v1767 = vld [vmem:[%s5 + $0x20] sm:$0xff]
      %v1768 = vld [vmem:[%s5 + $0x28] sm:$0xff]
      %v1769 = vld [vmem:[%s5 + $0x30] sm:$0xff]
      %v1770 = vld [vmem:[%s5 + $0x38] sm:$0xff]
      %v1771 = vld [vmem:[%s5 + $0x40] sm:$0xff]
      %v1772 = vld [vmem:[%s5 + $0x48] sm:$0xff]
      %v1773 = vld [vmem:[%s5 + $0x50] sm:$0xff]
      %v1774 = vld [vmem:[%s5 + $0x58] sm:$0xff]
      %v1775 = vld [vmem:[%s5 + $0x60] sm:$0xff]
      %v1776 = vld [vmem:[%s5 + $0x68] sm:$0xff]
      %v1777 = vld [vmem:[%s5 + $0x70] sm:$0xff]
      %v1778 = vld [vmem:[%s5 + $0x78] sm:$0xff]
      %v1779 = vld [vmem:[%s5 + $0x80] sm:$0xff]
      %v1780 = vld [vmem:[%s5 + $0x88] sm:$0xff]
      %v1781 = vld [vmem:[%s5 + $0x90] sm:$0xff]
      %v1782 = vld [vmem:[%s5 + $0x98] sm:$0xff]
      %v1783 = vld [vmem:[%s5 + $0xa0] sm:$0xff]
      %v1784 = vld [vmem:[%s5 + $0xa8] sm:$0xff]
      %v1785 = vld [vmem:[%s5 + $0xb0] sm:$0xff]
      %v1786 = vld [vmem:[%s5 + $0xb8] sm:$0xff]
      %v1787 = vld [vmem:[%s5 + $0xc0] sm:$0xff]
      %v1788 = vld [vmem:[%s5 + $0xc8] sm:$0xff]
      %v1789 = vld [vmem:[%s5 + $0xd0] sm:$0xff]
      %v1790 = vld [vmem:[%s5 + $0xd8] sm:$0xff]
      %v1791 = vld [vmem:[%s5 + $0xe0] sm:$0xff]
      %v1792 = vld [vmem:[%s5 + $0xe8] sm:$0xff]
      %v1793 = vld [vmem:[%s5 + $0xf0] sm:$0xff]
      %v1794 = vld [vmem:[%s5 + $0xf8] sm:$0xff]
      %v1795 = vld [vmem:[%s6] sm:$0xf]
      %v1797 = vlaneseq
      %v1798 = vshrl.u32 %v1797, 7
      %v1799 = vsub.s32 0, %v1798
      %v1800 = vrot.slane %v1795, %v1799
      %v1801 = vlaneseq
      %v1802 = vshrl.u32 %v1801, 7
      %v1803 = vsub.s32 1, %v1802
      %v1804 = vrot.slane %v1795, %v1803
      %v1805 = vlaneseq
      %v1806 = vshrl.u32 %v1805, 7
      %v1807 = vsub.s32 2, %v1806
      %v1808 = vrot.slane %v1795, %v1807
      %v1809 = vlaneseq
      %v1810 = vshrl.u32 %v1809, 7
      %v1811 = vsub.s32 3, %v1810
      %v1812 = vrot.slane %v1795, %v1811
      %v1849 = vunpack.c.l.b16 %v1763
      %v1850 = vunpack.c.h.b16 %v1763
      %v1851 = vunpack.c.l.b16 %v1764
      %v1852 = vunpack.c.h.b16 %v1764
      %v1853 = vunpack.c.l.b16 %v1765
      %v1854 = vunpack.c.h.b16 %v1765
      %v1855 = vunpack.c.l.b16 %v1766
      %v1856 = vunpack.c.h.b16 %v1766
      %v1857 = vunpack.c.l.b16 %v1767
      %v1858 = vunpack.c.h.b16 %v1767
      %v1859 = vunpack.c.l.b16 %v1768
      %v1860 = vunpack.c.h.b16 %v1768
      %v1861 = vunpack.c.l.b16 %v1769
      %v1862 = vunpack.c.h.b16 %v1769
      %v1863 = vunpack.c.l.b16 %v1770
      %v1864 = vunpack.c.h.b16 %v1770
      %v1865 = vunpack.c.l.b16 %v1771
      %v1866 = vunpack.c.h.b16 %v1771
      %v1867 = vunpack.c.l.b16 %v1772
      %v1868 = vunpack.c.h.b16 %v1772
      %v1869 = vunpack.c.l.b16 %v1773
      %v1870 = vunpack.c.h.b16 %v1773
      %v1871 = vunpack.c.l.b16 %v1774
      %v1872 = vunpack.c.h.b16 %v1774
      %v1873 = vunpack.c.l.b16 %v1775
      %v1874 = vunpack.c.h.b16 %v1775
      %v1875 = vunpack.c.l.b16 %v1776
      %v1876 = vunpack.c.h.b16 %v1776
      %v1877 = vunpack.c.l.b16 %v1777
      %v1878 = vunpack.c.h.b16 %v1777
      %v1879 = vunpack.c.l.b16 %v1778
      %v1880 = vunpack.c.h.b16 %v1778
      %v1881 = vunpack.c.l.b16 %v1779
      %v1882 = vunpack.c.h.b16 %v1779
      %v1883 = vunpack.c.l.b16 %v1780
      %v1884 = vunpack.c.h.b16 %v1780
      %v1885 = vunpack.c.l.b16 %v1781
      %v1886 = vunpack.c.h.b16 %v1781
      %v1887 = vunpack.c.l.b16 %v1782
      %v1888 = vunpack.c.h.b16 %v1782
      %v1889 = vunpack.c.l.b16 %v1783
      %v1890 = vunpack.c.h.b16 %v1783
      %v1891 = vunpack.c.l.b16 %v1784
      %v1892 = vunpack.c.h.b16 %v1784
      %v1893 = vunpack.c.l.b16 %v1785
      %v1894 = vunpack.c.h.b16 %v1785
      %v1895 = vunpack.c.l.b16 %v1786
      %v1896 = vunpack.c.h.b16 %v1786
      %v1897 = vunpack.c.l.b16 %v1787
      %v1898 = vunpack.c.h.b16 %v1787
      %v1899 = vunpack.c.l.b16 %v1788
      %v1900 = vunpack.c.h.b16 %v1788
      %v1901 = vunpack.c.l.b16 %v1789
      %v1902 = vunpack.c.h.b16 %v1789
      %v1903 = vunpack.c.l.b16 %v1790
      %v1904 = vunpack.c.h.b16 %v1790
      %v1905 = vunpack.c.l.b16 %v1791
      %v1906 = vunpack.c.h.b16 %v1791
      %v1907 = vunpack.c.l.b16 %v1792
      %v1908 = vunpack.c.h.b16 %v1792
      %v1909 = vunpack.c.l.b16 %v1793
      %v1910 = vunpack.c.h.b16 %v1793
      %v1911 = vunpack.c.l.b16 %v1794
      %v1912 = vunpack.c.h.b16 %v1794
      %v1913 = vpack.c.b16 %v1853, %v1849
      %v1914 = vpack.c.b16 %v1854, %v1850
      %v1915 = vpack.c.b16 %v1855, %v1851
      %v1916 = vpack.c.b16 %v1856, %v1852
      %v1917 = vpack.c.b16 %v1861, %v1857
      %v1918 = vpack.c.b16 %v1862, %v1858
      %v1919 = vpack.c.b16 %v1863, %v1859
      %v1920 = vpack.c.b16 %v1864, %v1860
      %v1921 = vpack.c.b16 %v1869, %v1865
      %v1922 = vpack.c.b16 %v1870, %v1866
      %v1923 = vpack.c.b16 %v1871, %v1867
      %v1924 = vpack.c.b16 %v1872, %v1868
      %v1925 = vpack.c.b16 %v1877, %v1873
      %v1926 = vpack.c.b16 %v1878, %v1874
      %v1927 = vpack.c.b16 %v1879, %v1875
      %v1928 = vpack.c.b16 %v1880, %v1876
      %v1929 = vpack.c.b16 %v1885, %v1881
      %v1930 = vpack.c.b16 %v1886, %v1882
      %v1931 = vpack.c.b16 %v1887, %v1883
      %v1932 = vpack.c.b16 %v1888, %v1884
      %v1933 = vpack.c.b16 %v1893, %v1889
      %v1934 = vpack.c.b16 %v1894, %v1890
      %v1935 = vpack.c.b16 %v1895, %v1891
      %v1936 = vpack.c.b16 %v1896, %v1892
      %v1937 = vpack.c.b16 %v1901, %v1897
      %v1938 = vpack.c.b16 %v1902, %v1898
      %v1939 = vpack.c.b16 %v1903, %v1899
      %v1940 = vpack.c.b16 %v1904, %v1900
      %v1941 = vpack.c.b16 %v1909, %v1905
      %v1942 = vpack.c.b16 %v1910, %v1906
      %v1943 = vpack.c.b16 %v1911, %v1907
      %v1944 = vpack.c.b16 %v1912, %v1908
      %1977 = vmatprep.subr.bf16.mxu0 %v1914
      %1978 = vmatpush1.bf16.msra.mxu0 %v1913
      %1979 = vmatprep.subr.bf16.mxu0 %v1918
      %1980 = vmatpush1.bf16.msra.mxu0 %v1917
      %1981 = vmatprep.subr.bf16.mxu0 %v1922
      %1982 = vmatpush1.bf16.msra.mxu0 %v1921
      %1983 = vmatprep.subr.bf16.mxu0 %v1926
      %1984 = vmatpush1.bf16.msra.mxu0 %v1925
      %1985 = vmatprep.subr.bf16.mxu0 %v1930
      %1986 = vmatpush1.bf16.msra.mxu0 %v1929
      %1987 = vmatprep.subr.bf16.mxu0 %v1934
      %1988 = vmatpush1.bf16.msra.mxu0 %v1933
      %1989 = vmatprep.subr.bf16.mxu0 %v1938
      %1990 = vmatpush1.bf16.msra.mxu0 %v1937
      %1991 = vmatprep.subr.bf16.mxu0 %v1942
      %1992 = vmatpush1.bf16.msra.mxu0 %v1941
      %1993 = vmatprep.subr.bf16.mxu0 0
      %1994 = vmatpush1.bf16.msra.mxu0 0
      %1995 = vmatprep.subr.bf16.mxu0 0
      %1996 = vmatpush1.bf16.msra.mxu0 0
      %1997 = vmatprep.subr.bf16.mxu0 0
      %1998 = vmatpush1.bf16.msra.mxu0 0
      %1999 = vmatprep.subr.bf16.mxu0 0
      %2000 = vmatpush1.bf16.msra.mxu0 0
      %2001 = vmatprep.subr.bf16.mxu0 0
      %2002 = vmatpush1.bf16.msra.mxu0 0
      %2003 = vmatprep.subr.bf16.mxu0 0
      %2004 = vmatpush1.bf16.msra.mxu0 0
      %2005 = vmatprep.subr.bf16.mxu0 0
      %2006 = vmatpush1.bf16.msra.mxu0 0
      %2007 = vmatprep.subr.bf16.mxu0 0
      %2008 = vmatpush1.bf16.msra.mxu0 0
      %2009 = vmatprep.mubr.bf16.mxu0 0
      %2010 = vmatmul.mubr.bf16.gmra.mrb[0].mxu0 %v1747
      %v2011 = vpop.f32.mrb[0].mxu0
      %v2012 = vadd.f32 %v1800, %v2011
      %v2013 = vpop.f32.mrb[0].mxu0
      %v2014 = vadd.f32 %v1804, %v2013
      %v2015 = vpop.f32.mrb[0].mxu0
      %v2016 = vadd.f32 %v1800, %v2015
      %v2017 = vpop.f32.mrb[0].mxu0
      %v2018 = vadd.f32 %v1804, %v2017
      %2019 = vmatprep.mubr.bf16.mxu0 0
      %2020 = vmatmul.mubr.bf16.gmra.mrb[0].mxu0 %v1748
      %v2021 = vpop.f32.mrb[0].mxu0
      %v2022 = vadd.f32 %v1800, %v2021
      %v2023 = vpop.f32.mrb[0].mxu0
      %v2024 = vadd.f32 %v1804, %v2023
      %v2025 = vpop.f32.mrb[0].mxu0
      %v2026 = vadd.f32 %v1800, %v2025
      %v2027 = vpop.f32.mrb[0].mxu0
      %v2028 = vadd.f32 %v1804, %v2027
      %2029 = vmatprep.mubr.bf16.mxu0 0
      %2030 = vmatmul.mubr.bf16.gmra.mrb[0].mxu0 %v1749
      %v2031 = vpop.f32.mrb[0].mxu0
      %v2032 = vadd.f32 %v1800, %v2031
      %v2033 = vpop.f32.mrb[0].mxu0
      %v2034 = vadd.f32 %v1804, %v2033
      %v2035 = vpop.f32.mrb[0].mxu0
      %v2036 = vadd.f32 %v1800, %v2035
      %v2037 = vpop.f32.mrb[0].mxu0
      %v2038 = vadd.f32 %v1804, %v2037
      %2039 = vmatprep.mubr.bf16.mxu0 0
      %2040 = vmatmul.mubr.bf16.gmra.mrb[0].mxu0 %v1750
      %v2041 = vpop.f32.mrb[0].mxu0
      %v2042 = vadd.f32 %v1800, %v2041
      %v2043 = vpop.f32.mrb[0].mxu0
      %v2044 = vadd.f32 %v1804, %v2043
      %v2045 = vpop.f32.mrb[0].mxu0
      %v2046 = vadd.f32 %v1800, %v2045
      %v2047 = vpop.f32.mrb[0].mxu0
      %v2048 = vadd.f32 %v1804, %v2047
      %2049 = vmatprep.mubr.bf16.mxu0 0
      %2050 = vmatmul.mubr.bf16.gmra.mrb[0].mxu0 %v1751
      %v2051 = vpop.f32.mrb[0].mxu0
      %v2052 = vadd.f32 %v1800, %v2051
      %v2053 = vpop.f32.mrb[0].mxu0
      %v2054 = vadd.f32 %v1804, %v2053
      %v2055 = vpop.f32.mrb[0].mxu0
      %v2056 = vadd.f32 %v1800, %v2055
      %v2057 = vpop.f32.mrb[0].mxu0
      %v2058 = vadd.f32 %v1804, %v2057
      %2059 = vmatprep.mubr.bf16.mxu0 0
      %2060 = vmatmul.mubr.bf16.gmra.mrb[0].mxu0 %v1752
      %v2061 = vpop.f32.mrb[0].mxu0
      %v2062 = vadd.f32 %v1800, %v2061
      %v2063 = vpop.f32.mrb[0].mxu0
      %v2064 = vadd.f32 %v1804, %v2063
      %v2065 = vpop.f32.mrb[0].mxu0
      %v2066 = vadd.f32 %v1800, %v2065
      %v2067 = vpop.f32.mrb[0].mxu0
      %v2068 = vadd.f32 %v1804, %v2067
      %2069 = vmatprep.mubr.bf16.mxu0 0
      %2070 = vmatmul.mubr.bf16.gmra.mrb[0].mxu0 %v1753
      %v2071 = vpop.f32.mrb[0].mxu0
      %v2072 = vadd.f32 %v1800, %v2071
      %v2073 = vpop.f32.mrb[0].mxu0
      %v2074 = vadd.f32 %v1804, %v2073
      %v2075 = vpop.f32.mrb[0].mxu0
      %v2076 = vadd.f32 %v1800, %v2075
      %v2077 = vpop.f32.mrb[0].mxu0
      %v2078 = vadd.f32 %v1804, %v2077
      %2079 = vmatprep.mubr.bf16.mxu0 0
      %2080 = vmatmul.mubr.bf16.gmra.mrb[0].mxu0 %v1754
      %v2081 = vpop.f32.mrb[0].mxu0
      %v2082 = vadd.f32 %v1800, %v2081
      %v2083 = vpop.f32.mrb[0].mxu0
      %v2084 = vadd.f32 %v1804, %v2083
      %v2085 = vpop.f32.mrb[0].mxu0
      %v2086 = vadd.f32 %v1800, %v2085
      %v2087 = vpop.f32.mrb[0].mxu0
      %v2088 = vadd.f32 %v1804, %v2087
      %2089 = vmatprep.mubr.bf16.mxu0 0
      %2090 = vmatmul.mubr.bf16.gmra.mrb[0].mxu0 %v1755
      %v2091 = vpop.f32.mrb[0].mxu0
      %v2092 = vadd.f32 %v1800, %v2091
      %v2093 = vpop.f32.mrb[0].mxu0
      %v2094 = vadd.f32 %v1804, %v2093
      %v2095 = vpop.f32.mrb[0].mxu0
      %v2096 = vadd.f32 %v1800, %v2095
      %v2097 = vpop.f32.mrb[0].mxu0
      %v2098 = vadd.f32 %v1804, %v2097
      %2099 = vmatprep.mubr.bf16.mxu0 0
      %2100 = vmatmul.mubr.bf16.gmra.mrb[0].mxu0 %v1756
      %v2101 = vpop.f32.mrb[0].mxu0
      %v2102 = vadd.f32 %v1800, %v2101
      %v2103 = vpop.f32.mrb[0].mxu0
      %v2104 = vadd.f32 %v1804, %v2103
      %v2105 = vpop.f32.mrb[0].mxu0
      %v2106 = vadd.f32 %v1800, %v2105
      %v2107 = vpop.f32.mrb[0].mxu0
      %v2108 = vadd.f32 %v1804, %v2107
      %2109 = vmatprep.mubr.bf16.mxu0 0
      %2110 = vmatmul.mubr.bf16.gmra.mrb[0].mxu0 %v1757
      %v2111 = vpop.f32.mrb[0].mxu0
      %v2112 = vadd.f32 %v1800, %v2111
      %v2113 = vpop.f32.mrb[0].mxu0
      %v2114 = vadd.f32 %v1804, %v2113
      %v2115 = vpop.f32.mrb[0].mxu0
      %v2116 = vadd.f32 %v1800, %v2115
      %v2117 = vpop.f32.mrb[0].mxu0
      %v2118 = vadd.f32 %v1804, %v2117
      %2119 = vmatprep.mubr.bf16.mxu0 0
      %2120 = vmatmul.mubr.bf16.gmra.mrb[0].mxu0 %v1758
      %v2121 = vpop.f32.mrb[0].mxu0
      %v2122 = vadd.f32 %v1800, %v2121
      %v2123 = vpop.f32.mrb[0].mxu0
      %v2124 = vadd.f32 %v1804, %v2123
      %v2125 = vpop.f32.mrb[0].mxu0
      %v2126 = vadd.f32 %v1800, %v2125
      %v2127 = vpop.f32.mrb[0].mxu0
      %v2128 = vadd.f32 %v1804, %v2127
      %2129 = vmatprep.mubr.bf16.mxu0 0
      %2130 = vmatmul.mubr.bf16.gmra.mrb[0].mxu0 %v1759
      %v2131 = vpop.f32.mrb[0].mxu0
      %v2132 = vadd.f32 %v1800, %v2131
      %v2133 = vpop.f32.mrb[0].mxu0
      %v2134 = vadd.f32 %v1804, %v2133
      %v2135 = vpop.f32.mrb[0].mxu0
      %v2136 = vadd.f32 %v1800, %v2135
      %v2137 = vpop.f32.mrb[0].mxu0
      %v2138 = vadd.f32 %v1804, %v2137
      %2139 = vmatprep.mubr.bf16.mxu0 0
      %2140 = vmatmul.mubr.bf16.gmra.mrb[0].mxu0 %v1760
      %v2141 = vpop.f32.mrb[0].mxu0
      %v2142 = vadd.f32 %v1800, %v2141
      %v2143 = vpop.f32.mrb[0].mxu0
      %v2144 = vadd.f32 %v1804, %v2143
      %v2145 = vpop.f32.mrb[0].mxu0
      %v2146 = vadd.f32 %v1800, %v2145
      %v2147 = vpop.f32.mrb[0].mxu0
      %v2148 = vadd.f32 %v1804, %v2147
      %2149 = vmatprep.mubr.bf16.mxu0 0
      %2150 = vmatmul.mubr.bf16.gmra.mrb[0].mxu0 %v1761
      %v2151 = vpop.f32.mrb[0].mxu0
      %v2152 = vadd.f32 %v1800, %v2151
      %v2153 = vpop.f32.mrb[0].mxu0
      %v2154 = vadd.f32 %v1804, %v2153
      %v2155 = vpop.f32.mrb[0].mxu0
      %v2156 = vadd.f32 %v1800, %v2155
      %v2157 = vpop.f32.mrb[0].mxu0
      %v2158 = vadd.f32 %v1804, %v2157
      %2159 = vmatprep.mubr.bf16.mxu0 0
      %2160 = vmatmul.mubr.bf16.gmra.mrb[0].mxu0 %v1762
      %v2161 = vpop.f32.mrb[0].mxu0
      %v2162 = vadd.f32 %v1800, %v2161
      %v2163 = vpop.f32.mrb[0].mxu0
      %v2164 = vadd.f32 %v1804, %v2163
      %v2165 = vpop.f32.mrb[0].mxu0
      %v2166 = vadd.f32 %v1800, %v2165
      %v2167 = vpop.f32.mrb[0].mxu0
      %v2168 = vadd.f32 %v1804, %v2167
      %2169 = vdwg.mxu0
      %2170 = vmatprep.subr.bf16.mxu0 %v1916
      %2171 = vmatpush1.bf16.msra.mxu0 %v1915
      %2172 = vmatprep.subr.bf16.mxu0 %v1920
      %2173 = vmatpush1.bf16.msra.mxu0 %v1919
      %2174 = vmatprep.subr.bf16.mxu0 %v1924
      %2175 = vmatpush1.bf16.msra.mxu0 %v1923
      %2176 = vmatprep.subr.bf16.mxu0 %v1928
      %2177 = vmatpush1.bf16.msra.mxu0 %v1927
      %2178 = vmatprep.subr.bf16.mxu0 %v1932
      %2179 = vmatpush1.bf16.msra.mxu0 %v1931
      %2180 = vmatprep.subr.bf16.mxu0 %v1936
      %2181 = vmatpush1.bf16.msra.mxu0 %v1935
      %2182 = vmatprep.subr.bf16.mxu0 %v1940
      %2183 = vmatpush1.bf16.msra.mxu0 %v1939
      %2184 = vmatprep.subr.bf16.mxu0 %v1944
      %2185 = vmatpush1.bf16.msra.mxu0 %v1943
      %2186 = vmatprep.subr.bf16.mxu0 0
      %2187 = vmatpush1.bf16.msra.mxu0 0
      %2188 = vmatprep.subr.bf16.mxu0 0
      %2189 = vmatpush1.bf16.msra.mxu0 0
      %2190 = vmatprep.subr.bf16.mxu0 0
      %2191 = vmatpush1.bf16.msra.mxu0 0
      %2192 = vmatprep.subr.bf16.mxu0 0
      %2193 = vmatpush1.bf16.msra.mxu0 0
      %2194 = vmatprep.subr.bf16.mxu0 0
      %2195 = vmatpush1.bf16.msra.mxu0 0
      %2196 = vmatprep.subr.bf16.mxu0 0
      %2197 = vmatpush1.bf16.msra.mxu0 0
      %2198 = vmatprep.subr.bf16.mxu0 0
      %2199 = vmatpush1.bf16.msra.mxu0 0
      %2200 = vmatprep.subr.bf16.mxu0 0
      %2201 = vmatpush1.bf16.msra.mxu0 0
      %2202 = vmatprep.mubr.bf16.mxu0 0
      %2203 = vmatmul.mubr.bf16.gmra.mrb[0].mxu0 %v1747
      %v2204 = vpop.f32.mrb[0].mxu0
      %v2205 = vadd.f32 %v1808, %v2204
      %v2206 = vpop.f32.mrb[0].mxu0
      %v2207 = vadd.f32 %v1812, %v2206
      %v2208 = vpop.f32.mrb[0].mxu0
      %v2209 = vadd.f32 %v1808, %v2208
      %v2210 = vpop.f32.mrb[0].mxu0
      %v2211 = vadd.f32 %v1812, %v2210
      %2212 = vmatprep.mubr.bf16.mxu0 0
      %2213 = vmatmul.mubr.bf16.gmra.mrb[0].mxu0 %v1748
      %v2214 = vpop.f32.mrb[0].mxu0
      %v2215 = vadd.f32 %v1808, %v2214
      %v2216 = vpop.f32.mrb[0].mxu0
      %v2217 = vadd.f32 %v1812, %v2216
      %v2218 = vpop.f32.mrb[0].mxu0
      %v2219 = vadd.f32 %v1808, %v2218
      %v2220 = vpop.f32.mrb[0].mxu0
      %v2221 = vadd.f32 %v1812, %v2220
      %2222 = vmatprep.mubr.bf16.mxu0 0
      %2223 = vmatmul.mubr.bf16.gmra.mrb[0].mxu0 %v1749
      %v2224 = vpop.f32.mrb[0].mxu0
      %v2225 = vadd.f32 %v1808, %v2224
      %v2226 = vpop.f32.mrb[0].mxu0
      %v2227 = vadd.f32 %v1812, %v2226
      %v2228 = vpop.f32.mrb[0].mxu0
      %v2229 = vadd.f32 %v1808, %v2228
      %v2230 = vpop.f32.mrb[0].mxu0
      %v2231 = vadd.f32 %v1812, %v2230
      %2232 = vmatprep.mubr.bf16.mxu0 0
      %2233 = vmatmul.mubr.bf16.gmra.mrb[0].mxu0 %v1750
      %v2234 = vpop.f32.mrb[0].mxu0
      %v2235 = vadd.f32 %v1808, %v2234
      %v2236 = vpop.f32.mrb[0].mxu0
      %v2237 = vadd.f32 %v1812, %v2236
      %v2238 = vpop.f32.mrb[0].mxu0
      %v2239 = vadd.f32 %v1808, %v2238
      %v2240 = vpop.f32.mrb[0].mxu0
      %v2241 = vadd.f32 %v1812, %v2240
      %2242 = vmatprep.mubr.bf16.mxu0 0
      %2243 = vmatmul.mubr.bf16.gmra.mrb[0].mxu0 %v1751
      %v2244 = vpop.f32.mrb[0].mxu0
      %v2245 = vadd.f32 %v1808, %v2244
      %v2246 = vpop.f32.mrb[0].mxu0
      %v2247 = vadd.f32 %v1812, %v2246
      %v2248 = vpop.f32.mrb[0].mxu0
      %v2249 = vadd.f32 %v1808, %v2248
      %v2250 = vpop.f32.mrb[0].mxu0
      %v2251 = vadd.f32 %v1812, %v2250
      %2252 = vmatprep.mubr.bf16.mxu0 0
      %2253 = vmatmul.mubr.bf16.gmra.mrb[0].mxu0 %v1752
      %v2254 = vpop.f32.mrb[0].mxu0
      %v2255 = vadd.f32 %v1808, %v2254
      %v2256 = vpop.f32.mrb[0].mxu0
      %v2257 = vadd.f32 %v1812, %v2256
      %v2258 = vpop.f32.mrb[0].mxu0
      %v2259 = vadd.f32 %v1808, %v2258
      %v2260 = vpop.f32.mrb[0].mxu0
      %v2261 = vadd.f32 %v1812, %v2260
      %2262 = vmatprep.mubr.bf16.mxu0 0
      %2263 = vmatmul.mubr.bf16.gmra.mrb[0].mxu0 %v1753
      %v2264 = vpop.f32.mrb[0].mxu0
      %v2265 = vadd.f32 %v1808, %v2264
      %v2266 = vpop.f32.mrb[0].mxu0
      %v2267 = vadd.f32 %v1812, %v2266
      %v2268 = vpop.f32.mrb[0].mxu0
      %v2269 = vadd.f32 %v1808, %v2268
      %v2270 = vpop.f32.mrb[0].mxu0
      %v2271 = vadd.f32 %v1812, %v2270
      %2272 = vmatprep.mubr.bf16.mxu0 0
      %2273 = vmatmul.mubr.bf16.gmra.mrb[0].mxu0 %v1754
      %v2274 = vpop.f32.mrb[0].mxu0
      %v2275 = vadd.f32 %v1808, %v2274
      %v2276 = vpop.f32.mrb[0].mxu0
      %v2277 = vadd.f32 %v1812, %v2276
      %v2278 = vpop.f32.mrb[0].mxu0
      %v2279 = vadd.f32 %v1808, %v2278
      %v2280 = vpop.f32.mrb[0].mxu0
      %v2281 = vadd.f32 %v1812, %v2280
      %2282 = vmatprep.mubr.bf16.mxu0 0
      %2283 = vmatmul.mubr.bf16.gmra.mrb[0].mxu0 %v1755
      %v2284 = vpop.f32.mrb[0].mxu0
      %v2285 = vadd.f32 %v1808, %v2284
      %v2286 = vpop.f32.mrb[0].mxu0
      %v2287 = vadd.f32 %v1812, %v2286
      %v2288 = vpop.f32.mrb[0].mxu0
      %v2289 = vadd.f32 %v1808, %v2288
      %v2290 = vpop.f32.mrb[0].mxu0
      %v2291 = vadd.f32 %v1812, %v2290
      %2292 = vmatprep.mubr.bf16.mxu0 0
      %2293 = vmatmul.mubr.bf16.gmra.mrb[0].mxu0 %v1756
      %v2294 = vpop.f32.mrb[0].mxu0
      %v2295 = vadd.f32 %v1808, %v2294
      %v2296 = vpop.f32.mrb[0].mxu0
      %v2297 = vadd.f32 %v1812, %v2296
      %v2298 = vpop.f32.mrb[0].mxu0
      %v2299 = vadd.f32 %v1808, %v2298
      %v2300 = vpop.f32.mrb[0].mxu0
      %v2301 = vadd.f32 %v1812, %v2300
      %2302 = vmatprep.mubr.bf16.mxu0 0
      %2303 = vmatmul.mubr.bf16.gmra.mrb[0].mxu0 %v1757
      %v2304 = vpop.f32.mrb[0].mxu0
      %v2305 = vadd.f32 %v1808, %v2304
      %v2306 = vpop.f32.mrb[0].mxu0
      %v2307 = vadd.f32 %v1812, %v2306
      %v2308 = vpop.f32.mrb[0].mxu0
      %v2309 = vadd.f32 %v1808, %v2308
      %v2310 = vpop.f32.mrb[0].mxu0
      %v2311 = vadd.f32 %v1812, %v2310
      %2312 = vmatprep.mubr.bf16.mxu0 0
      %2313 = vmatmul.mubr.bf16.gmra.mrb[0].mxu0 %v1758
      %v2314 = vpop.f32.mrb[0].mxu0
      %v2315 = vadd.f32 %v1808, %v2314
      %v2316 = vpop.f32.mrb[0].mxu0
      %v2317 = vadd.f32 %v1812, %v2316
      %v2318 = vpop.f32.mrb[0].mxu0
      %v2319 = vadd.f32 %v1808, %v2318
      %v2320 = vpop.f32.mrb[0].mxu0
      %v2321 = vadd.f32 %v1812, %v2320
      %2322 = vmatprep.mubr.bf16.mxu0 0
      %2323 = vmatmul.mubr.bf16.gmra.mrb[0].mxu0 %v1759
      %v2324 = vpop.f32.mrb[0].mxu0
      %v2325 = vadd.f32 %v1808, %v2324
      %v2326 = vpop.f32.mrb[0].mxu0
      %v2327 = vadd.f32 %v1812, %v2326
      %v2328 = vpop.f32.mrb[0].mxu0
      %v2329 = vadd.f32 %v1808, %v2328
      %v2330 = vpop.f32.mrb[0].mxu0
      %v2331 = vadd.f32 %v1812, %v2330
      %2332 = vmatprep.mubr.bf16.mxu0 0
      %2333 = vmatmul.mubr.bf16.gmra.mrb[0].mxu0 %v1760
      %v2334 = vpop.f32.mrb[0].mxu0
      %v2335 = vadd.f32 %v1808, %v2334
      %v2336 = vpop.f32.mrb[0].mxu0
      %v2337 = vadd.f32 %v1812, %v2336
      %v2338 = vpop.f32.mrb[0].mxu0
      %v2339 = vadd.f32 %v1808, %v2338
      %v2340 = vpop.f32.mrb[0].mxu0
      %v2341 = vadd.f32 %v1812, %v2340
      %2342 = vmatprep.mubr.bf16.mxu0 0
      %2343 = vmatmul.mubr.bf16.gmra.mrb[0].mxu0 %v1761
      %v2344 = vpop.f32.mrb[0].mxu0
      %v2345 = vadd.f32 %v1808, %v2344
      %v2346 = vpop.f32.mrb[0].mxu0
      %v2347 = vadd.f32 %v1812, %v2346
      %v2348 = vpop.f32.mrb[0].mxu0
      %v2349 = vadd.f32 %v1808, %v2348
      %v2350 = vpop.f32.mrb[0].mxu0
      %v2351 = vadd.f32 %v1812, %v2350
      %2352 = vmatprep.mubr.bf16.mxu0 0
      %2353 = vmatmul.mubr.bf16.gmra.mrb[0].mxu0 %v1762
      %v2354 = vpop.f32.mrb[0].mxu0
      %v2355 = vadd.f32 %v1808, %v2354
      %v2356 = vpop.f32.mrb[0].mxu0
      %v2357 = vadd.f32 %v1812, %v2356
      %v2358 = vpop.f32.mrb[0].mxu0
      %v2359 = vadd.f32 %v1808, %v2358
      %v2360 = vpop.f32.mrb[0].mxu0
      %v2361 = vadd.f32 %v1812, %v2360
      %2362 = vdwg.mxu0
      %v2363 = vmax.f32 %v2012, 0.0
      %v2364 = vmax.f32 %v2014, 0.0
      %v2365 = vmax.f32 %v2205, 0.0
      %v2366 = vmax.f32 %v2207, 0.0
      %v2367 = vmax.f32 %v2016, 0.0
      %v2368 = vmax.f32 %v2018, 0.0
      %v2369 = vmax.f32 %v2209, 0.0
      %v2370 = vmax.f32 %v2211, 0.0
      %v2371 = vmax.f32 %v2022, 0.0
      %v2372 = vmax.f32 %v2024, 0.0
      %v2373 = vmax.f32 %v2215, 0.0
      %v2374 = vmax.f32 %v2217, 0.0
      %v2375 = vmax.f32 %v2026, 0.0
      %v2376 = vmax.f32 %v2028, 0.0
      %v2377 = vmax.f32 %v2219, 0.0
      %v2378 = vmax.f32 %v2221, 0.0
      %v2379 = vmax.f32 %v2032, 0.0
      %v2380 = vmax.f32 %v2034, 0.0
      %v2381 = vmax.f32 %v2225, 0.0
      %v2382 = vmax.f32 %v2227, 0.0
      %v2383 = vmax.f32 %v2036, 0.0
      %v2384 = vmax.f32 %v2038, 0.0
      %v2385 = vmax.f32 %v2229, 0.0
      %v2386 = vmax.f32 %v2231, 0.0
      %v2387 = vmax.f32 %v2042, 0.0
      %v2388 = vmax.f32 %v2044, 0.0
      %v2389 = vmax.f32 %v2235, 0.0
      %v2390 = vmax.f32 %v2237, 0.0
      %v2391 = vmax.f32 %v2046, 0.0
      %v2392 = vmax.f32 %v2048, 0.0
      %v2393 = vmax.f32 %v2239, 0.0
      %v2394 = vmax.f32 %v2241, 0.0
      %v2395 = vmax.f32 %v2052, 0.0
      %v2396 = vmax.f32 %v2054, 0.0
      %v2397 = vmax.f32 %v2245, 0.0
      %v2398 = vmax.f32 %v2247, 0.0
      %v2399 = vmax.f32 %v2056, 0.0
      %v2400 = vmax.f32 %v2058, 0.0
      %v2401 = vmax.f32 %v2249, 0.0
      %v2402 = vmax.f32 %v2251, 0.0
      %v2403 = vmax.f32 %v2062, 0.0
      %v2404 = vmax.f32 %v2064, 0.0
      %v2405 = vmax.f32 %v2255, 0.0
      %v2406 = vmax.f32 %v2257, 0.0
      %v2407 = vmax.f32 %v2066, 0.0
      %v2408 = vmax.f32 %v2068, 0.0
      %v2409 = vmax.f32 %v2259, 0.0
      %v2410 = vmax.f32 %v2261, 0.0
      %v2411 = vmax.f32 %v2072, 0.0
      %v2412 = vmax.f32 %v2074, 0.0
      %v2413 = vmax.f32 %v2265, 0.0
      %v2414 = vmax.f32 %v2267, 0.0
      %v2415 = vmax.f32 %v2076, 0.0
      %v2416 = vmax.f32 %v2078, 0.0
      %v2417 = vmax.f32 %v2269, 0.0
      %v2418 = vmax.f32 %v2271, 0.0
      %v2419 = vmax.f32 %v2082, 0.0
      %v2420 = vmax.f32 %v2084, 0.0
      %v2421 = vmax.f32 %v2275, 0.0
      %v2422 = vmax.f32 %v2277, 0.0
      %v2423 = vmax.f32 %v2086, 0.0
      %v2424 = vmax.f32 %v2088, 0.0
      %v2425 = vmax.f32 %v2279, 0.0
      %v2426 = vmax.f32 %v2281, 0.0
      %v2427 = vmax.f32 %v2092, 0.0
      %v2428 = vmax.f32 %v2094, 0.0
      %v2429 = vmax.f32 %v2285, 0.0
      %v2430 = vmax.f32 %v2287, 0.0
      %v2431 = vmax.f32 %v2096, 0.0
      %v2432 = vmax.f32 %v2098, 0.0
      %v2433 = vmax.f32 %v2289, 0.0
      %v2434 = vmax.f32 %v2291, 0.0
      %v2435 = vmax.f32 %v2102, 0.0
      %v2436 = vmax.f32 %v2104, 0.0
      %v2437 = vmax.f32 %v2295, 0.0
      %v2438 = vmax.f32 %v2297, 0.0
      %v2439 = vmax.f32 %v2106, 0.0
      %v2440 = vmax.f32 %v2108, 0.0
      %v2441 = vmax.f32 %v2299, 0.0
      %v2442 = vmax.f32 %v2301, 0.0
      %v2443 = vmax.f32 %v2112, 0.0
      %v2444 = vmax.f32 %v2114, 0.0
      %v2445 = vmax.f32 %v2305, 0.0
      %v2446 = vmax.f32 %v2307, 0.0
      %v2447 = vmax.f32 %v2116, 0.0
      %v2448 = vmax.f32 %v2118, 0.0
      %v2449 = vmax.f32 %v2309, 0.0
      %v2450 = vmax.f32 %v2311, 0.0
      %v2451 = vmax.f32 %v2122, 0.0
      %v2452 = vmax.f32 %v2124, 0.0
      %v2453 = vmax.f32 %v2315, 0.0
      %v2454 = vmax.f32 %v2317, 0.0
      %v2455 = vmax.f32 %v2126, 0.0
      %v2456 = vmax.f32 %v2128, 0.0
      %v2457 = vmax.f32 %v2319, 0.0
      %v2458 = vmax.f32 %v2321, 0.0
      %v2459 = vmax.f32 %v2132, 0.0
      %v2460 = vmax.f32 %v2134, 0.0
      %v2461 = vmax.f32 %v2325, 0.0
      %v2462 = vmax.f32 %v2327, 0.0
      %v2463 = vmax.f32 %v2136, 0.0
      %v2464 = vmax.f32 %v2138, 0.0
      %v2465 = vmax.f32 %v2329, 0.0
      %v2466 = vmax.f32 %v2331, 0.0
      %v2467 = vmax.f32 %v2142, 0.0
      %v2468 = vmax.f32 %v2144, 0.0
      %v2469 = vmax.f32 %v2335, 0.0
      %v2470 = vmax.f32 %v2337, 0.0
      %v2471 = vmax.f32 %v2146, 0.0
      %v2472 = vmax.f32 %v2148, 0.0
      %v2473 = vmax.f32 %v2339, 0.0
      %v2474 = vmax.f32 %v2341, 0.0
      %v2475 = vmax.f32 %v2152, 0.0
      %v2476 = vmax.f32 %v2154, 0.0
      %v2477 = vmax.f32 %v2345, 0.0
      %v2478 = vmax.f32 %v2347, 0.0
      %v2479 = vmax.f32 %v2156, 0.0
      %v2480 = vmax.f32 %v2158, 0.0
      %v2481 = vmax.f32 %v2349, 0.0
      %v2482 = vmax.f32 %v2351, 0.0
      %v2483 = vmax.f32 %v2162, 0.0
      %v2484 = vmax.f32 %v2164, 0.0
      %v2485 = vmax.f32 %v2355, 0.0
      %v2486 = vmax.f32 %v2357, 0.0
      %v2487 = vmax.f32 %v2166, 0.0
      %v2488 = vmax.f32 %v2168, 0.0
      %v2489 = vmax.f32 %v2359, 0.0
      %v2490 = vmax.f32 %v2361, 0.0
      %v2491 = vpack.c.bf16 %v2367, %v2363
      %v2492 = vpack.c.bf16 %v2368, %v2364
      %v2493 = vpack.c.bf16 %v2369, %v2365
      %v2494 = vpack.c.bf16 %v2370, %v2366
      %v2495 = vpack.c.bf16 %v2375, %v2371
      %v2496 = vpack.c.bf16 %v2376, %v2372
      %v2497 = vpack.c.bf16 %v2377, %v2373
      %v2498 = vpack.c.bf16 %v2378, %v2374
      %v2499 = vpack.c.bf16 %v2383, %v2379
      %v2500 = vpack.c.bf16 %v2384, %v2380
      %v2501 = vpack.c.bf16 %v2385, %v2381
      %v2502 = vpack.c.bf16 %v2386, %v2382
      %v2503 = vpack.c.bf16 %v2391, %v2387
      %v2504 = vpack.c.bf16 %v2392, %v2388
      %v2505 = vpack.c.bf16 %v2393, %v2389
      %v2506 = vpack.c.bf16 %v2394, %v2390
      %v2507 = vpack.c.bf16 %v2399, %v2395
      %v2508 = vpack.c.bf16 %v2400, %v2396
      %v2509 = vpack.c.bf16 %v2401, %v2397
      %v2510 = vpack.c.bf16 %v2402, %v2398
      %v2511 = vpack.c.bf16 %v2407, %v2403
      %v2512 = vpack.c.bf16 %v2408, %v2404
      %v2513 = vpack.c.bf16 %v2409, %v2405
      %v2514 = vpack.c.bf16 %v2410, %v2406
      %v2515 = vpack.c.bf16 %v2415, %v2411
      %v2516 = vpack.c.bf16 %v2416, %v2412
      %v2517 = vpack.c.bf16 %v2417, %v2413
      %v2518 = vpack.c.bf16 %v2418, %v2414
      %v2519 = vpack.c.bf16 %v2423, %v2419
      %v2520 = vpack.c.bf16 %v2424, %v2420
      %v2521 = vpack.c.bf16 %v2425, %v2421
      %v2522 = vpack.c.bf16 %v2426, %v2422
      %v2523 = vpack.c.bf16 %v2431, %v2427
      %v2524 = vpack.c.bf16 %v2432, %v2428
      %v2525 = vpack.c.bf16 %v2433, %v2429
      %v2526 = vpack.c.bf16 %v2434, %v2430
      %v2527 = vpack.c.bf16 %v2439, %v2435
      %v2528 = vpack.c.bf16 %v2440, %v2436
      %v2529 = vpack.c.bf16 %v2441, %v2437
      %v2530 = vpack.c.bf16 %v2442, %v2438
      %v2531 = vpack.c.bf16 %v2447, %v2443
      %v2532 = vpack.c.bf16 %v2448, %v2444
      %v2533 = vpack.c.bf16 %v2449, %v2445
      %v2534 = vpack.c.bf16 %v2450, %v2446
      %v2535 = vpack.c.bf16 %v2455, %v2451
      %v2536 = vpack.c.bf16 %v2456, %v2452
      %v2537 = vpack.c.bf16 %v2457, %v2453
      %v2538 = vpack.c.bf16 %v2458, %v2454
      %v2539 = vpack.c.bf16 %v2463, %v2459
      %v2540 = vpack.c.bf16 %v2464, %v2460
      %v2541 = vpack.c.bf16 %v2465, %v2461
      %v2542 = vpack.c.bf16 %v2466, %v2462
      %v2543 = vpack.c.bf16 %v2471, %v2467
      %v2544 = vpack.c.bf16 %v2472, %v2468
      %v2545 = vpack.c.bf16 %v2473, %v2469
      %v2546 = vpack.c.bf16 %v2474, %v2470
      %v2547 = vpack.c.bf16 %v2479, %v2475
      %v2548 = vpack.c.bf16 %v2480, %v2476
      %v2549 = vpack.c.bf16 %v2481, %v2477
      %v2550 = vpack.c.bf16 %v2482, %v2478
      %v2551 = vpack.c.bf16 %v2487, %v2483
      %v2552 = vpack.c.bf16 %v2488, %v2484
      %v2553 = vpack.c.bf16 %v2489, %v2485
      %v2554 = vpack.c.bf16 %v2490, %v2486
      %v2555 = vld [vmem:[%s7] sm:$0xf]
      %v2556 = vld [vmem:[%s7 + $0x4] sm:$0xf]
      %v2557 = vld [vmem:[%s7 + $0x8] sm:$0xf]
      %v2558 = vld [vmem:[%s7 + $0xc] sm:$0xf]
      %v2559 = vld [vmem:[%s7 + $0x10] sm:$0xf]
      %v2560 = vld [vmem:[%s7 + $0x14] sm:$0xf]
      %v2561 = vld [vmem:[%s7 + $0x18] sm:$0xf]
      %v2562 = vld [vmem:[%s7 + $0x1c] sm:$0xf]
      %v2563 = vld [vmem:[%s7 + $0x20] sm:$0xf]
      %v2564 = vld [vmem:[%s7 + $0x24] sm:$0xf]
      %v2565 = vld [vmem:[%s7 + $0x28] sm:$0xf]
      %v2566 = vld [vmem:[%s7 + $0x2c] sm:$0xf]
      %v2567 = vld [vmem:[%s7 + $0x30] sm:$0xf]
      %v2568 = vld [vmem:[%s7 + $0x34] sm:$0xf]
      %v2569 = vld [vmem:[%s7 + $0x38] sm:$0xf]
      %v2570 = vld [vmem:[%s7 + $0x3c] sm:$0xf]
      %v2571 = vld [vmem:[%s7 + $0x40] sm:$0xf]
      %v2572 = vld [vmem:[%s7 + $0x44] sm:$0xf]
      %v2573 = vld [vmem:[%s7 + $0x48] sm:$0xf]
      %v2574 = vld [vmem:[%s7 + $0x4c] sm:$0xf]
      %v2575 = vld [vmem:[%s7 + $0x50] sm:$0xf]
      %v2576 = vld [vmem:[%s7 + $0x54] sm:$0xf]
      %v2577 = vld [vmem:[%s7 + $0x58] sm:$0xf]
      %v2578 = vld [vmem:[%s7 + $0x5c] sm:$0xf]
      %v2579 = vld [vmem:[%s7 + $0x60] sm:$0xf]
      %v2580 = vld [vmem:[%s7 + $0x64] sm:$0xf]
      %v2581 = vld [vmem:[%s7 + $0x68] sm:$0xf]
      %v2582 = vld [vmem:[%s7 + $0x6c] sm:$0xf]
      %v2583 = vld [vmem:[%s7 + $0x70] sm:$0xf]
      %v2584 = vld [vmem:[%s7 + $0x74] sm:$0xf]
      %v2585 = vld [vmem:[%s7 + $0x78] sm:$0xf]
      %v2586 = vld [vmem:[%s7 + $0x7c] sm:$0xf]
      %v2587 = vld [vmem:[%s7 + $0x80] sm:$0xf]
      %v2588 = vld [vmem:[%s7 + $0x84] sm:$0xf]
      %v2589 = vld [vmem:[%s7 + $0x88] sm:$0xf]
      %v2590 = vld [vmem:[%s7 + $0x8c] sm:$0xf]
      %v2591 = vld [vmem:[%s7 + $0x90] sm:$0xf]
      %v2592 = vld [vmem:[%s7 + $0x94] sm:$0xf]
      %v2593 = vld [vmem:[%s7 + $0x98] sm:$0xf]
      %v2594 = vld [vmem:[%s7 + $0x9c] sm:$0xf]
      %v2595 = vld [vmem:[%s7 + $0xa0] sm:$0xf]
      %v2596 = vld [vmem:[%s7 + $0xa4] sm:$0xf]
      %v2597 = vld [vmem:[%s7 + $0xa8] sm:$0xf]
      %v2598 = vld [vmem:[%s7 + $0xac] sm:$0xf]
      %v2599 = vld [vmem:[%s7 + $0xb0] sm:$0xf]
      %v2600 = vld [vmem:[%s7 + $0xb4] sm:$0xf]
      %v2601 = vld [vmem:[%s7 + $0xb8] sm:$0xf]
      %v2602 = vld [vmem:[%s7 + $0xbc] sm:$0xf]
      %v2603 = vld [vmem:[%s7 + $0xc0] sm:$0xf]
      %v2604 = vld [vmem:[%s7 + $0xc4] sm:$0xf]
      %v2605 = vld [vmem:[%s7 + $0xc8] sm:$0xf]
      %v2606 = vld [vmem:[%s7 + $0xcc] sm:$0xf]
      %v2607 = vld [vmem:[%s7 + $0xd0] sm:$0xf]
      %v2608 = vld [vmem:[%s7 + $0xd4] sm:$0xf]
      %v2609 = vld [vmem:[%s7 + $0xd8] sm:$0xf]
      %v2610 = vld [vmem:[%s7 + $0xdc] sm:$0xf]
      %v2611 = vld [vmem:[%s7 + $0xe0] sm:$0xf]
      %v2612 = vld [vmem:[%s7 + $0xe4] sm:$0xf]
      %v2613 = vld [vmem:[%s7 + $0xe8] sm:$0xf]
      %v2614 = vld [vmem:[%s7 + $0xec] sm:$0xf]
      %v2615 = vld [vmem:[%s7 + $0xf0] sm:$0xf]
      %v2616 = vld [vmem:[%s7 + $0xf4] sm:$0xf]
      %v2617 = vld [vmem:[%s7 + $0xf8] sm:$0xf]
      %v2618 = vld [vmem:[%s7 + $0xfc] sm:$0xf]
      %v2619 = vld [vmem:[%s8] sm:$0x1]
      %v2621 = vlaneseq
      %v2622 = vshrl.u32 %v2621, 7
      %v2623 = vsub.s32 0, %v2622
      %v2624 = vrot.slane %v2619, %v2623
      %v2690 = vunpack.c.l.b16 %v2555
      %v2691 = vunpack.c.l.b16 %v2556
      %v2692 = vunpack.c.l.b16 %v2557
      %v2693 = vunpack.c.l.b16 %v2558
      %v2694 = vunpack.c.l.b16 %v2559
      %v2695 = vunpack.c.l.b16 %v2560
      %v2696 = vunpack.c.l.b16 %v2561
      %v2697 = vunpack.c.l.b16 %v2562
      %v2698 = vunpack.c.l.b16 %v2563
      %v2699 = vunpack.c.l.b16 %v2564
      %v2700 = vunpack.c.l.b16 %v2565
      %v2701 = vunpack.c.l.b16 %v2566
      %v2702 = vunpack.c.l.b16 %v2567
      %v2703 = vunpack.c.l.b16 %v2568
      %v2704 = vunpack.c.l.b16 %v2569
      %v2705 = vunpack.c.l.b16 %v2570
      %v2706 = vunpack.c.l.b16 %v2571
      %v2707 = vunpack.c.l.b16 %v2572
      %v2708 = vunpack.c.l.b16 %v2573
      %v2709 = vunpack.c.l.b16 %v2574
      %v2710 = vunpack.c.l.b16 %v2575
      %v2711 = vunpack.c.l.b16 %v2576
      %v2712 = vunpack.c.l.b16 %v2577
      %v2713 = vunpack.c.l.b16 %v2578
      %v2714 = vunpack.c.l.b16 %v2579
      %v2715 = vunpack.c.l.b16 %v2580
      %v2716 = vunpack.c.l.b16 %v2581
      %v2717 = vunpack.c.l.b16 %v2582
      %v2718 = vunpack.c.l.b16 %v2583
      %v2719 = vunpack.c.l.b16 %v2584
      %v2720 = vunpack.c.l.b16 %v2585
      %v2721 = vunpack.c.l.b16 %v2586
      %v2722 = vunpack.c.l.b16 %v2587
      %v2723 = vunpack.c.l.b16 %v2588
      %v2724 = vunpack.c.l.b16 %v2589
      %v2725 = vunpack.c.l.b16 %v2590
      %v2726 = vunpack.c.l.b16 %v2591
      %v2727 = vunpack.c.l.b16 %v2592
      %v2728 = vunpack.c.l.b16 %v2593
      %v2729 = vunpack.c.l.b16 %v2594
      %v2730 = vunpack.c.l.b16 %v2595
      %v2731 = vunpack.c.l.b16 %v2596
      %v2732 = vunpack.c.l.b16 %v2597
      %v2733 = vunpack.c.l.b16 %v2598
      %v2734 = vunpack.c.l.b16 %v2599
      %v2735 = vunpack.c.l.b16 %v2600
      %v2736 = vunpack.c.l.b16 %v2601
      %v2737 = vunpack.c.l.b16 %v2602
      %v2738 = vunpack.c.l.b16 %v2603
      %v2739 = vunpack.c.l.b16 %v2604
      %v2740 = vunpack.c.l.b16 %v2605
      %v2741 = vunpack.c.l.b16 %v2606
      %v2742 = vunpack.c.l.b16 %v2607
      %v2743 = vunpack.c.l.b16 %v2608
      %v2744 = vunpack.c.l.b16 %v2609
      %v2745 = vunpack.c.l.b16 %v2610
      %v2746 = vunpack.c.l.b16 %v2611
      %v2747 = vunpack.c.l.b16 %v2612
      %v2748 = vunpack.c.l.b16 %v2613
      %v2749 = vunpack.c.l.b16 %v2614
      %v2750 = vunpack.c.l.b16 %v2615
      %v2751 = vunpack.c.l.b16 %v2616
      %v2752 = vunpack.c.l.b16 %v2617
      %v2753 = vunpack.c.l.b16 %v2618
      %v2754 = vpack.c.b16 %v2691, %v2690
      %v2755 = vpack.c.b16 %v2693, %v2692
      %v2756 = vpack.c.b16 %v2695, %v2694
      %v2757 = vpack.c.b16 %v2697, %v2696
      %v2758 = vpack.c.b16 %v2699, %v2698
      %v2759 = vpack.c.b16 %v2701, %v2700
      %v2760 = vpack.c.b16 %v2703, %v2702
      %v2761 = vpack.c.b16 %v2705, %v2704
      %v2762 = vpack.c.b16 %v2707, %v2706
      %v2763 = vpack.c.b16 %v2709, %v2708
      %v2764 = vpack.c.b16 %v2711, %v2710
      %v2765 = vpack.c.b16 %v2713, %v2712
      %v2766 = vpack.c.b16 %v2715, %v2714
      %v2767 = vpack.c.b16 %v2717, %v2716
      %v2768 = vpack.c.b16 %v2719, %v2718
      %v2769 = vpack.c.b16 %v2721, %v2720
      %v2770 = vpack.c.b16 %v2723, %v2722
      %v2771 = vpack.c.b16 %v2725, %v2724
      %v2772 = vpack.c.b16 %v2727, %v2726
      %v2773 = vpack.c.b16 %v2729, %v2728
      %v2774 = vpack.c.b16 %v2731, %v2730
      %v2775 = vpack.c.b16 %v2733, %v2732
      %v2776 = vpack.c.b16 %v2735, %v2734
      %v2777 = vpack.c.b16 %v2737, %v2736
      %v2778 = vpack.c.b16 %v2739, %v2738
      %v2779 = vpack.c.b16 %v2741, %v2740
      %v2780 = vpack.c.b16 %v2743, %v2742
      %v2781 = vpack.c.b16 %v2745, %v2744
      %v2782 = vpack.c.b16 %v2747, %v2746
      %v2783 = vpack.c.b16 %v2749, %v2748
      %v2784 = vpack.c.b16 %v2751, %v2750
      %v2785 = vpack.c.b16 %v2753, %v2752
      %2818 = vmatprep.subr.bf16.mxu0 0
      %2819 = vmatpush1.bf16.msra.mxu0 %v2754
      %2820 = vmatprep.subr.bf16.mxu0 0
      %2821 = vmatpush1.bf16.msra.mxu0 %v2755
      %2822 = vmatprep.subr.bf16.mxu0 0
      %2823 = vmatpush1.bf16.msra.mxu0 %v2756
      %2824 = vmatprep.subr.bf16.mxu0 0
      %2825 = vmatpush1.bf16.msra.mxu0 %v2757
      %2826 = vmatprep.subr.bf16.mxu0 0
      %2827 = vmatpush1.bf16.msra.mxu0 %v2758
      %2828 = vmatprep.subr.bf16.mxu0 0
      %2829 = vmatpush1.bf16.msra.mxu0 %v2759
      %2830 = vmatprep.subr.bf16.mxu0 0
      %2831 = vmatpush1.bf16.msra.mxu0 %v2760
      %2832 = vmatprep.subr.bf16.mxu0 0
      %2833 = vmatpush1.bf16.msra.mxu0 %v2761
      %2834 = vmatprep.subr.bf16.mxu0 0
      %2835 = vmatpush1.bf16.msra.mxu0 %v2762
      %2836 = vmatprep.subr.bf16.mxu0 0
      %2837 = vmatpush1.bf16.msra.mxu0 %v2763
      %2838 = vmatprep.subr.bf16.mxu0 0
      %2839 = vmatpush1.bf16.msra.mxu0 %v2764
      %2840 = vmatprep.subr.bf16.mxu0 0
      %2841 = vmatpush1.bf16.msra.mxu0 %v2765
      %2842 = vmatprep.subr.bf16.mxu0 0
      %2843 = vmatpush1.bf16.msra.mxu0 %v2766
      %2844 = vmatprep.subr.bf16.mxu0 0
      %2845 = vmatpush1.bf16.msra.mxu0 %v2767
      %2846 = vmatprep.subr.bf16.mxu0 0
      %2847 = vmatpush1.bf16.msra.mxu0 %v2768
      %2848 = vmatprep.subr.bf16.mxu0 0
      %2849 = vmatpush1.bf16.msra.mxu0 %v2769
      %2850 = vmatprep.mubr.bf16.mxu0 %v2492
      %2851 = vmatmul.mubr.bf16.gmra.mrb[0].mxu0 %v2491
      %v2852 = vpop.f32.mrb[0].mxu0
      %v2853 = vadd.f32 %v2624, %v2852
      %v2854 = vpop.f32.mrb[0].mxu0
      %v2855 = vpop.f32.mrb[0].mxu0
      %v2856 = vadd.f32 %v2624, %v2855
      %v2857 = vpop.f32.mrb[0].mxu0
      %2858 = vmatprep.mubr.bf16.mxu0 %v2496
      %2859 = vmatmul.mubr.bf16.gmra.mrb[0].mxu0 %v2495
      %v2860 = vpop.f32.mrb[0].mxu0
      %v2861 = vadd.f32 %v2624, %v2860
      %v2862 = vpop.f32.mrb[0].mxu0
      %v2863 = vpop.f32.mrb[0].mxu0
      %v2864 = vadd.f32 %v2624, %v2863
      %v2865 = vpop.f32.mrb[0].mxu0
      %2866 = vmatprep.mubr.bf16.mxu0 %v2500
      %2867 = vmatmul.mubr.bf16.gmra.mrb[0].mxu0 %v2499
      %v2868 = vpop.f32.mrb[0].mxu0
      %v2869 = vadd.f32 %v2624, %v2868
      %v2870 = vpop.f32.mrb[0].mxu0
      %v2871 = vpop.f32.mrb[0].mxu0
      %v2872 = vadd.f32 %v2624, %v2871
      %v2873 = vpop.f32.mrb[0].mxu0
      %2874 = vmatprep.mubr.bf16.mxu0 %v2504
      %2875 = vmatmul.mubr.bf16.gmra.mrb[0].mxu0 %v2503
      %v2876 = vpop.f32.mrb[0].mxu0
      %v2877 = vadd.f32 %v2624, %v2876
      %v2878 = vpop.f32.mrb[0].mxu0
      %v2879 = vpop.f32.mrb[0].mxu0
      %v2880 = vadd.f32 %v2624, %v2879
      %v2881 = vpop.f32.mrb[0].mxu0
      %2882 = vmatprep.mubr.bf16.mxu0 %v2508
      %2883 = vmatmul.mubr.bf16.gmra.mrb[0].mxu0 %v2507
      %v2884 = vpop.f32.mrb[0].mxu0
      %v2885 = vadd.f32 %v2624, %v2884
      %v2886 = vpop.f32.mrb[0].mxu0
      %v2887 = vpop.f32.mrb[0].mxu0
      %v2888 = vadd.f32 %v2624, %v2887
      %v2889 = vpop.f32.mrb[0].mxu0
      %2890 = vmatprep.mubr.bf16.mxu0 %v2512
      %2891 = vmatmul.mubr.bf16.gmra.mrb[0].mxu0 %v2511
      %v2892 = vpop.f32.mrb[0].mxu0
      %v2893 = vadd.f32 %v2624, %v2892
      %v2894 = vpop.f32.mrb[0].mxu0
      %v2895 = vpop.f32.mrb[0].mxu0
      %v2896 = vadd.f32 %v2624, %v2895
      %v2897 = vpop.f32.mrb[0].mxu0
      %2898 = vmatprep.mubr.bf16.mxu0 %v2516
      %2899 = vmatmul.mubr.bf16.gmra.mrb[0].mxu0 %v2515
      %v2900 = vpop.f32.mrb[0].mxu0
      %v2901 = vadd.f32 %v2624, %v2900
      %v2902 = vpop.f32.mrb[0].mxu0
      %v2903 = vpop.f32.mrb[0].mxu0
      %v2904 = vadd.f32 %v2624, %v2903
      %v2905 = vpop.f32.mrb[0].mxu0
      %2906 = vmatprep.mubr.bf16.mxu0 %v2520
      %2907 = vmatmul.mubr.bf16.gmra.mrb[0].mxu0 %v2519
      %v2908 = vpop.f32.mrb[0].mxu0
      %v2909 = vadd.f32 %v2624, %v2908
      %v2910 = vpop.f32.mrb[0].mxu0
      %v2911 = vpop.f32.mrb[0].mxu0
      %v2912 = vadd.f32 %v2624, %v2911
      %v2913 = vpop.f32.mrb[0].mxu0
      %2914 = vmatprep.mubr.bf16.mxu0 %v2524
      %2915 = vmatmul.mubr.bf16.gmra.mrb[0].mxu0 %v2523
      %v2916 = vpop.f32.mrb[0].mxu0
      %v2917 = vadd.f32 %v2624, %v2916
      %v2918 = vpop.f32.mrb[0].mxu0
      %v2919 = vpop.f32.mrb[0].mxu0
      %v2920 = vadd.f32 %v2624, %v2919
      %v2921 = vpop.f32.mrb[0].mxu0
      %2922 = vmatprep.mubr.bf16.mxu0 %v2528
      %2923 = vmatmul.mubr.bf16.gmra.mrb[0].mxu0 %v2527
      %v2924 = vpop.f32.mrb[0].mxu0
      %v2925 = vadd.f32 %v2624, %v2924
      %v2926 = vpop.f32.mrb[0].mxu0
      %v2927 = vpop.f32.mrb[0].mxu0
      %v2928 = vadd.f32 %v2624, %v2927
      %v2929 = vpop.f32.mrb[0].mxu0
      %2930 = vmatprep.mubr.bf16.mxu0 %v2532
      %2931 = vmatmul.mubr.bf16.gmra.mrb[0].mxu0 %v2531
      %v2932 = vpop.f32.mrb[0].mxu0
      %v2933 = vadd.f32 %v2624, %v2932
      %v2934 = vpop.f32.mrb[0].mxu0
      %v2935 = vpop.f32.mrb[0].mxu0
      %v2936 = vadd.f32 %v2624, %v2935
      %v2937 = vpop.f32.mrb[0].mxu0
      %2938 = vmatprep.mubr.bf16.mxu0 %v2536
      %2939 = vmatmul.mubr.bf16.gmra.mrb[0].mxu0 %v2535
      %v2940 = vpop.f32.mrb[0].mxu0
      %v2941 = vadd.f32 %v2624, %v2940
      %v2942 = vpop.f32.mrb[0].mxu0
      %v2943 = vpop.f32.mrb[0].mxu0
      %v2944 = vadd.f32 %v2624, %v2943
      %v2945 = vpop.f32.mrb[0].mxu0
      %2946 = vmatprep.mubr.bf16.mxu0 %v2540
      %2947 = vmatmul.mubr.bf16.gmra.mrb[0].mxu0 %v2539
      %v2948 = vpop.f32.mrb[0].mxu0
      %v2949 = vadd.f32 %v2624, %v2948
      %v2950 = vpop.f32.mrb[0].mxu0
      %v2951 = vpop.f32.mrb[0].mxu0
      %v2952 = vadd.f32 %v2624, %v2951
      %v2953 = vpop.f32.mrb[0].mxu0
      %2954 = vmatprep.mubr.bf16.mxu0 %v2544
      %2955 = vmatmul.mubr.bf16.gmra.mrb[0].mxu0 %v2543
      %v2956 = vpop.f32.mrb[0].mxu0
      %v2957 = vadd.f32 %v2624, %v2956
      %v2958 = vpop.f32.mrb[0].mxu0
      %v2959 = vpop.f32.mrb[0].mxu0
      %v2960 = vadd.f32 %v2624, %v2959
      %v2961 = vpop.f32.mrb[0].mxu0
      %2962 = vmatprep.mubr.bf16.mxu0 %v2548
      %2963 = vmatmul.mubr.bf16.gmra.mrb[0].mxu0 %v2547
      %v2964 = vpop.f32.mrb[0].mxu0
      %v2965 = vadd.f32 %v2624, %v2964
      %v2966 = vpop.f32.mrb[0].mxu0
      %v2967 = vpop.f32.mrb[0].mxu0
      %v2968 = vadd.f32 %v2624, %v2967
      %v2969 = vpop.f32.mrb[0].mxu0
      %2970 = vmatprep.mubr.bf16.mxu0 %v2552
      %2971 = vmatmul.mubr.bf16.gmra.mrb[0].mxu0 %v2551
      %v2972 = vpop.f32.mrb[0].mxu0
      %v2973 = vadd.f32 %v2624, %v2972
      %v2974 = vpop.f32.mrb[0].mxu0
      %v2975 = vpop.f32.mrb[0].mxu0
      %v2976 = vadd.f32 %v2624, %v2975
      %v2977 = vpop.f32.mrb[0].mxu0
      %2978 = vdwg.mxu0
      %2979 = vmatprep.subr.bf16.mxu0 0
      %2980 = vmatpush1.bf16.msra.mxu0 %v2770
      %2981 = vmatprep.subr.bf16.mxu0 0
      %2982 = vmatpush1.bf16.msra.mxu0 %v2771
      %2983 = vmatprep.subr.bf16.mxu0 0
      %2984 = vmatpush1.bf16.msra.mxu0 %v2772
      %2985 = vmatprep.subr.bf16.mxu0 0
      %2986 = vmatpush1.bf16.msra.mxu0 %v2773
      %2987 = vmatprep.subr.bf16.mxu0 0
      %2988 = vmatpush1.bf16.msra.mxu0 %v2774
      %2989 = vmatprep.subr.bf16.mxu0 0
      %2990 = vmatpush1.bf16.msra.mxu0 %v2775
      %2991 = vmatprep.subr.bf16.mxu0 0
      %2992 = vmatpush1.bf16.msra.mxu0 %v2776
      %2993 = vmatprep.subr.bf16.mxu0 0
      %2994 = vmatpush1.bf16.msra.mxu0 %v2777
      %2995 = vmatprep.subr.bf16.mxu0 0
      %2996 = vmatpush1.bf16.msra.mxu0 %v2778
      %2997 = vmatprep.subr.bf16.mxu0 0
      %2998 = vmatpush1.bf16.msra.mxu0 %v2779
      %2999 = vmatprep.subr.bf16.mxu0 0
      %3000 = vmatpush1.bf16.msra.mxu0 %v2780
      %3001 = vmatprep.subr.bf16.mxu0 0
      %3002 = vmatpush1.bf16.msra.mxu0 %v2781
      %3003 = vmatprep.subr.bf16.mxu0 0
      %3004 = vmatpush1.bf16.msra.mxu0 %v2782
      %3005 = vmatprep.subr.bf16.mxu0 0
      %3006 = vmatpush1.bf16.msra.mxu0 %v2783
      %3007 = vmatprep.subr.bf16.mxu0 0
      %3008 = vmatpush1.bf16.msra.mxu0 %v2784
      %3009 = vmatprep.subr.bf16.mxu0 0
      %3010 = vmatpush1.bf16.msra.mxu0 %v2785
      %3011 = vmatprep.mubr.bf16.mxu0 %v2494
      %3012 = vmatmul.mubr.bf16.gmra.mrb[0].mxu0 %v2493
      %v3013 = vpop.f32.mrb[0].mxu0
      %v3014 = vadd.f32 %v2853, %v3013
      %v3015 = vpop.f32.mrb[0].mxu0
      %v3016 = vpop.f32.mrb[0].mxu0
      %v3017 = vadd.f32 %v2856, %v3016
      %v3018 = vpop.f32.mrb[0].mxu0
      %3019 = vmatprep.mubr.bf16.mxu0 %v2498
      %3020 = vmatmul.mubr.bf16.gmra.mrb[0].mxu0 %v2497
      %v3021 = vpop.f32.mrb[0].mxu0
      %v3022 = vadd.f32 %v2861, %v3021
      %v3023 = vpop.f32.mrb[0].mxu0
      %v3024 = vpop.f32.mrb[0].mxu0
      %v3025 = vadd.f32 %v2864, %v3024
      %v3026 = vpop.f32.mrb[0].mxu0
      %3027 = vmatprep.mubr.bf16.mxu0 %v2502
      %3028 = vmatmul.mubr.bf16.gmra.mrb[0].mxu0 %v2501
      %v3029 = vpop.f32.mrb[0].mxu0
      %v3030 = vadd.f32 %v2869, %v3029
      %v3031 = vpop.f32.mrb[0].mxu0
      %v3032 = vpop.f32.mrb[0].mxu0
      %v3033 = vadd.f32 %v2872, %v3032
      %v3034 = vpop.f32.mrb[0].mxu0
      %3035 = vmatprep.mubr.bf16.mxu0 %v2506
      %3036 = vmatmul.mubr.bf16.gmra.mrb[0].mxu0 %v2505
      %v3037 = vpop.f32.mrb[0].mxu0
      %v3038 = vadd.f32 %v2877, %v3037
      %v3039 = vpop.f32.mrb[0].mxu0
      %v3040 = vpop.f32.mrb[0].mxu0
      %v3041 = vadd.f32 %v2880, %v3040
      %v3042 = vpop.f32.mrb[0].mxu0
      %3043 = vmatprep.mubr.bf16.mxu0 %v2510
      %3044 = vmatmul.mubr.bf16.gmra.mrb[0].mxu0 %v2509
      %v3045 = vpop.f32.mrb[0].mxu0
      %v3046 = vadd.f32 %v2885, %v3045
      %v3047 = vpop.f32.mrb[0].mxu0
      %v3048 = vpop.f32.mrb[0].mxu0
      %v3049 = vadd.f32 %v2888, %v3048
      %v3050 = vpop.f32.mrb[0].mxu0
      %3051 = vmatprep.mubr.bf16.mxu0 %v2514
      %3052 = vmatmul.mubr.bf16.gmra.mrb[0].mxu0 %v2513
      %v3053 = vpop.f32.mrb[0].mxu0
      %v3054 = vadd.f32 %v2893, %v3053
      %v3055 = vpop.f32.mrb[0].mxu0
      %v3056 = vpop.f32.mrb[0].mxu0
      %v3057 = vadd.f32 %v2896, %v3056
      %v3058 = vpop.f32.mrb[0].mxu0
      %3059 = vmatprep.mubr.bf16.mxu0 %v2518
      %3060 = vmatmul.mubr.bf16.gmra.mrb[0].mxu0 %v2517
      %v3061 = vpop.f32.mrb[0].mxu0
      %v3062 = vadd.f32 %v2901, %v3061
      %v3063 = vpop.f32.mrb[0].mxu0
      %v3064 = vpop.f32.mrb[0].mxu0
      %v3065 = vadd.f32 %v2904, %v3064
      %v3066 = vpop.f32.mrb[0].mxu0
      %3067 = vmatprep.mubr.bf16.mxu0 %v2522
      %3068 = vmatmul.mubr.bf16.gmra.mrb[0].mxu0 %v2521
      %v3069 = vpop.f32.mrb[0].mxu0
      %v3070 = vadd.f32 %v2909, %v3069
      %v3071 = vpop.f32.mrb[0].mxu0
      %v3072 = vpop.f32.mrb[0].mxu0
      %v3073 = vadd.f32 %v2912, %v3072
      %v3074 = vpop.f32.mrb[0].mxu0
      %3075 = vmatprep.mubr.bf16.mxu0 %v2526
      %3076 = vmatmul.mubr.bf16.gmra.mrb[0].mxu0 %v2525
      %v3077 = vpop.f32.mrb[0].mxu0
      %v3078 = vadd.f32 %v2917, %v3077
      %v3079 = vpop.f32.mrb[0].mxu0
      %v3080 = vpop.f32.mrb[0].mxu0
      %v3081 = vadd.f32 %v2920, %v3080
      %v3082 = vpop.f32.mrb[0].mxu0
      %3083 = vmatprep.mubr.bf16.mxu0 %v2530
      %3084 = vmatmul.mubr.bf16.gmra.mrb[0].mxu0 %v2529
      %v3085 = vpop.f32.mrb[0].mxu0
      %v3086 = vadd.f32 %v2925, %v3085
      %v3087 = vpop.f32.mrb[0].mxu0
      %v3088 = vpop.f32.mrb[0].mxu0
      %v3089 = vadd.f32 %v2928, %v3088
      %v3090 = vpop.f32.mrb[0].mxu0
      %3091 = vmatprep.mubr.bf16.mxu0 %v2534
      %3092 = vmatmul.mubr.bf16.gmra.mrb[0].mxu0 %v2533
      %v3093 = vpop.f32.mrb[0].mxu0
      %v3094 = vadd.f32 %v2933, %v3093
      %v3095 = vpop.f32.mrb[0].mxu0
      %v3096 = vpop.f32.mrb[0].mxu0
      %v3097 = vadd.f32 %v2936, %v3096
      %v3098 = vpop.f32.mrb[0].mxu0
      %3099 = vmatprep.mubr.bf16.mxu0 %v2538
      %3100 = vmatmul.mubr.bf16.gmra.mrb[0].mxu0 %v2537
      %v3101 = vpop.f32.mrb[0].mxu0
      %v3102 = vadd.f32 %v2941, %v3101
      %v3103 = vpop.f32.mrb[0].mxu0
      %v3104 = vpop.f32.mrb[0].mxu0
      %v3105 = vadd.f32 %v2944, %v3104
      %v3106 = vpop.f32.mrb[0].mxu0
      %3107 = vmatprep.mubr.bf16.mxu0 %v2542
      %3108 = vmatmul.mubr.bf16.gmra.mrb[0].mxu0 %v2541
      %v3109 = vpop.f32.mrb[0].mxu0
      %v3110 = vadd.f32 %v2949, %v3109
      %v3111 = vpop.f32.mrb[0].mxu0
      %v3112 = vpop.f32.mrb[0].mxu0
      %v3113 = vadd.f32 %v2952, %v3112
      %v3114 = vpop.f32.mrb[0].mxu0
      %3115 = vmatprep.mubr.bf16.mxu0 %v2546
      %3116 = vmatmul.mubr.bf16.gmra.mrb[0].mxu0 %v2545
      %v3117 = vpop.f32.mrb[0].mxu0
      %v3118 = vadd.f32 %v2957, %v3117
      %v3119 = vpop.f32.mrb[0].mxu0
      %v3120 = vpop.f32.mrb[0].mxu0
      %v3121 = vadd.f32 %v2960, %v3120
      %v3122 = vpop.f32.mrb[0].mxu0
      %3123 = vmatprep.mubr.bf16.mxu0 %v2550
      %3124 = vmatmul.mubr.bf16.gmra.mrb[0].mxu0 %v2549
      %v3125 = vpop.f32.mrb[0].mxu0
      %v3126 = vadd.f32 %v2965, %v3125
      %v3127 = vpop.f32.mrb[0].mxu0
      %v3128 = vpop.f32.mrb[0].mxu0
      %v3129 = vadd.f32 %v2968, %v3128
      %v3130 = vpop.f32.mrb[0].mxu0
      %3131 = vmatprep.mubr.bf16.mxu0 %v2554
      %3132 = vmatmul.mubr.bf16.gmra.mrb[0].mxu0 %v2553
      %v3133 = vpop.f32.mrb[0].mxu0
      %v3134 = vadd.f32 %v2973, %v3133
      %v3135 = vpop.f32.mrb[0].mxu0
      %v3136 = vpop.f32.mrb[0].mxu0
      %v3137 = vadd.f32 %v2976, %v3136
      %v3138 = vpop.f32.mrb[0].mxu0
      %3139 = vdwg.mxu0
      %v3140 = vsub.f32 0.0, %v3014
      %v3141 = vsub.f32 0.0, %v3017
      %v3142 = vsub.f32 0.0, %v3022
      %v3143 = vsub.f32 0.0, %v3025
      %v3144 = vsub.f32 0.0, %v3030
      %v3145 = vsub.f32 0.0, %v3033
      %v3146 = vsub.f32 0.0, %v3038
      %v3147 = vsub.f32 0.0, %v3041
      %v3148 = vsub.f32 0.0, %v3046
      %v3149 = vsub.f32 0.0, %v3049
      %v3150 = vsub.f32 0.0, %v3054
      %v3151 = vsub.f32 0.0, %v3057
      %v3152 = vsub.f32 0.0, %v3062
      %v3153 = vsub.f32 0.0, %v3065
      %v3154 = vsub.f32 0.0, %v3070
      %v3155 = vsub.f32 0.0, %v3073
      %v3156 = vsub.f32 0.0, %v3078
      %v3157 = vsub.f32 0.0, %v3081
      %v3158 = vsub.f32 0.0, %v3086
      %v3159 = vsub.f32 0.0, %v3089
      %v3160 = vsub.f32 0.0, %v3094
      %v3161 = vsub.f32 0.0, %v3097
      %v3162 = vsub.f32 0.0, %v3102
      %v3163 = vsub.f32 0.0, %v3105
      %v3164 = vsub.f32 0.0, %v3110
      %v3165 = vsub.f32 0.0, %v3113
      %v3166 = vsub.f32 0.0, %v3118
      %v3167 = vsub.f32 0.0, %v3121
      %v3168 = vsub.f32 0.0, %v3126
      %v3169 = vsub.f32 0.0, %v3129
      %v3170 = vsub.f32 0.0, %v3134
      %v3171 = vsub.f32 0.0, %v3137
      %v3172 = vmul.f32 %v3140, 1.442695
      %v3173 = vpow.pop %v3172
      %v3174 = vmul.f32 %v3141, 1.442695
      %v3175 = vpow.pop %v3174
      %v3176 = vmul.f32 %v3142, 1.442695
      %v3177 = vpow.pop %v3176
      %v3178 = vmul.f32 %v3143, 1.442695
      %v3179 = vpow.pop %v3178
      %v3180 = vmul.f32 %v3144, 1.442695
      %v3181 = vpow.pop %v3180
      %v3182 = vmul.f32 %v3145, 1.442695
      %v3183 = vpow.pop %v3182
      %v3184 = vmul.f32 %v3146, 1.442695
      %v3185 = vpow.pop %v3184
      %v3186 = vmul.f32 %v3147, 1.442695
      %v3187 = vpow.pop %v3186
      %v3188 = vmul.f32 %v3148, 1.442695
      %v3189 = vpow.pop %v3188
      %v3190 = vmul.f32 %v3149, 1.442695
      %v3191 = vpow.pop %v3190
      %v3192 = vmul.f32 %v3150, 1.442695
      %v3193 = vpow.pop %v3192
      %v3194 = vmul.f32 %v3151, 1.442695
      %v3195 = vpow.pop %v3194
      %v3196 = vmul.f32 %v3152, 1.442695
      %v3197 = vpow.pop %v3196
      %v3198 = vmul.f32 %v3153, 1.442695
      %v3199 = vpow.pop %v3198
      %v3200 = vmul.f32 %v3154, 1.442695
      %v3201 = vpow.pop %v3200
      %v3202 = vmul.f32 %v3155, 1.442695
      %v3203 = vpow.pop %v3202
      %v3204 = vmul.f32 %v3156, 1.442695
      %v3205 = vpow.pop %v3204
      %v3206 = vmul.f32 %v3157, 1.442695
      %v3207 = vpow.pop %v3206
      %v3208 = vmul.f32 %v3158, 1.442695
      %v3209 = vpow.pop %v3208
      %v3210 = vmul.f32 %v3159, 1.442695
      %v3211 = vpow.pop %v3210
      %v3212 = vmul.f32 %v3160, 1.442695
      %v3213 = vpow.pop %v3212
      %v3214 = vmul.f32 %v3161, 1.442695
      %v3215 = vpow.pop %v3214
      %v3216 = vmul.f32 %v3162, 1.442695
      %v3217 = vpow.pop %v3216
      %v3218 = vmul.f32 %v3163, 1.442695
      %v3219 = vpow.pop %v3218
      %v3220 = vmul.f32 %v3164, 1.442695
      %v3221 = vpow.pop %v3220
      %v3222 = vmul.f32 %v3165, 1.442695
      %v3223 = vpow.pop %v3222
      %v3224 = vmul.f32 %v3166, 1.442695
      %v3225 = vpow.pop %v3224
      %v3226 = vmul.f32 %v3167, 1.442695
      %v3227 = vpow.pop %v3226
      %v3228 = vmul.f32 %v3168, 1.442695
      %v3229 = vpow.pop %v3228
      %v3230 = vmul.f32 %v3169, 1.442695
      %v3231 = vpow.pop %v3230
      %v3232 = vmul.f32 %v3170, 1.442695
      %v3233 = vpow.pop %v3232
      %v3234 = vmul.f32 %v3171, 1.442695
      %v3235 = vpow.pop %v3234
      %v3236 = vadd.f32 %v3173, 1.0
      %v3237 = vadd.f32 %v3175, 1.0
      %v3238 = vadd.f32 %v3177, 1.0
      %v3239 = vadd.f32 %v3179, 1.0
      %v3240 = vadd.f32 %v3181, 1.0
      %v3241 = vadd.f32 %v3183, 1.0
      %v3242 = vadd.f32 %v3185, 1.0
      %v3243 = vadd.f32 %v3187, 1.0
      %v3244 = vadd.f32 %v3189, 1.0
      %v3245 = vadd.f32 %v3191, 1.0
      %v3246 = vadd.f32 %v3193, 1.0
      %v3247 = vadd.f32 %v3195, 1.0
      %v3248 = vadd.f32 %v3197, 1.0
      %v3249 = vadd.f32 %v3199, 1.0
      %v3250 = vadd.f32 %v3201, 1.0
      %v3251 = vadd.f32 %v3203, 1.0
      %v3252 = vadd.f32 %v3205, 1.0
      %v3253 = vadd.f32 %v3207, 1.0
      %v3254 = vadd.f32 %v3209, 1.0
      %v3255 = vadd.f32 %v3211, 1.0
      %v3256 = vadd.f32 %v3213, 1.0
      %v3257 = vadd.f32 %v3215, 1.0
      %v3258 = vadd.f32 %v3217, 1.0
      %v3259 = vadd.f32 %v3219, 1.0
      %v3260 = vadd.f32 %v3221, 1.0
      %v3261 = vadd.f32 %v3223, 1.0
      %v3262 = vadd.f32 %v3225, 1.0
      %v3263 = vadd.f32 %v3227, 1.0
      %v3264 = vadd.f32 %v3229, 1.0
      %v3265 = vadd.f32 %v3231, 1.0
      %v3266 = vadd.f32 %v3233, 1.0
      %v3267 = vadd.f32 %v3235, 1.0
      %v3268 = vrcp.pop %v3236
      %v3269 = vrcp.pop %v3237
      %v3270 = vrcp.pop %v3238
      %v3271 = vrcp.pop %v3239
      %v3272 = vrcp.pop %v3240
      %v3273 = vrcp.pop %v3241
      %v3274 = vrcp.pop %v3242
      %v3275 = vrcp.pop %v3243
      %v3276 = vrcp.pop %v3244
      %v3277 = vrcp.pop %v3245
      %v3278 = vrcp.pop %v3246
      %v3279 = vrcp.pop %v3247
      %v3280 = vrcp.pop %v3248
      %v3281 = vrcp.pop %v3249
      %v3282 = vrcp.pop %v3250
      %v3283 = vrcp.pop %v3251
      %v3284 = vrcp.pop %v3252
      %v3285 = vrcp.pop %v3253
      %v3286 = vrcp.pop %v3254
      %v3287 = vrcp.pop %v3255
      %v3288 = vrcp.pop %v3256
      %v3289 = vrcp.pop %v3257
      %v3290 = vrcp.pop %v3258
      %v3291 = vrcp.pop %v3259
      %v3292 = vrcp.pop %v3260
      %v3293 = vrcp.pop %v3261
      %v3294 = vrcp.pop %v3262
      %v3295 = vrcp.pop %v3263
      %v3296 = vrcp.pop %v3264
      %v3297 = vrcp.pop %v3265
      %v3298 = vrcp.pop %v3266
      %v3299 = vrcp.pop %v3267
      %v3300 = vpack.c.bf16 %v3269, %v3268
      %v3301 = vpack.c.bf16 %v3271, %v3270
      %v3302 = vpack.c.bf16 %v3273, %v3272
      %v3303 = vpack.c.bf16 %v3275, %v3274
      %v3304 = vpack.c.bf16 %v3277, %v3276
      %v3305 = vpack.c.bf16 %v3279, %v3278
      %v3306 = vpack.c.bf16 %v3281, %v3280
      %v3307 = vpack.c.bf16 %v3283, %v3282
      %v3308 = vpack.c.bf16 %v3285, %v3284
      %v3309 = vpack.c.bf16 %v3287, %v3286
      %v3310 = vpack.c.bf16 %v3289, %v3288
      %v3311 = vpack.c.bf16 %v3291, %v3290
      %v3312 = vpack.c.bf16 %v3293, %v3292
      %v3313 = vpack.c.bf16 %v3295, %v3294
      %v3314 = vpack.c.bf16 %v3297, %v3296
      %v3315 = vpack.c.bf16 %v3299, %v3298
      %v3332 = vunpack.c.l.b16 %v3300
      %v3333 = vunpack.c.h.b16 %v3300
      %v3334 = vunpack.c.l.b16 %v3301
      %v3335 = vunpack.c.h.b16 %v3301
      %v3336 = vunpack.c.l.b16 %v3302
      %v3337 = vunpack.c.h.b16 %v3302
      %v3338 = vunpack.c.l.b16 %v3303
      %v3339 = vunpack.c.h.b16 %v3303
      %v3340 = vunpack.c.l.b16 %v3304
      %v3341 = vunpack.c.h.b16 %v3304
      %v3342 = vunpack.c.l.b16 %v3305
      %v3343 = vunpack.c.h.b16 %v3305
      %v3344 = vunpack.c.l.b16 %v3306
      %v3345 = vunpack.c.h.b16 %v3306
      %v3346 = vunpack.c.l.b16 %v3307
      %v3347 = vunpack.c.h.b16 %v3307
      %v3348 = vunpack.c.l.b16 %v3308
      %v3349 = vunpack.c.h.b16 %v3308
      %v3350 = vunpack.c.l.b16 %v3309
      %v3351 = vunpack.c.h.b16 %v3309
      %v3352 = vunpack.c.l.b16 %v3310
      %v3353 = vunpack.c.h.b16 %v3310
      %v3354 = vunpack.c.l.b16 %v3311
      %v3355 = vunpack.c.h.b16 %v3311
      %v3356 = vunpack.c.l.b16 %v3312
      %v3357 = vunpack.c.h.b16 %v3312
      %v3358 = vunpack.c.l.b16 %v3313
      %v3359 = vunpack.c.h.b16 %v3313
      %v3360 = vunpack.c.l.b16 %v3314
      %v3361 = vunpack.c.h.b16 %v3314
      %v3362 = vunpack.c.l.b16 %v3315
      %v3363 = vunpack.c.h.b16 %v3315
      %v3364 = vpack.c.b16 %v3332, %v3332
      %v3365 = vpack.c.b16 %v3333, %v3333
      %v3366 = vpack.c.b16 %v3334, %v3334
      %v3367 = vpack.c.b16 %v3335, %v3335
      %v3368 = vpack.c.b16 %v3336, %v3336
      %v3369 = vpack.c.b16 %v3337, %v3337
      %v3370 = vpack.c.b16 %v3338, %v3338
      %v3371 = vpack.c.b16 %v3339, %v3339
      %v3372 = vpack.c.b16 %v3340, %v3340
      %v3373 = vpack.c.b16 %v3341, %v3341
      %v3374 = vpack.c.b16 %v3342, %v3342
      %v3375 = vpack.c.b16 %v3343, %v3343
      %v3376 = vpack.c.b16 %v3344, %v3344
      %v3377 = vpack.c.b16 %v3345, %v3345
      %v3378 = vpack.c.b16 %v3346, %v3346
      %v3379 = vpack.c.b16 %v3347, %v3347
      %v3380 = vpack.c.b16 %v3348, %v3348
      %v3381 = vpack.c.b16 %v3349, %v3349
      %v3382 = vpack.c.b16 %v3350, %v3350
      %v3383 = vpack.c.b16 %v3351, %v3351
      %v3384 = vpack.c.b16 %v3352, %v3352
      %v3385 = vpack.c.b16 %v3353, %v3353
      %v3386 = vpack.c.b16 %v3354, %v3354
      %v3387 = vpack.c.b16 %v3355, %v3355
      %v3388 = vpack.c.b16 %v3356, %v3356
      %v3389 = vpack.c.b16 %v3357, %v3357
      %v3390 = vpack.c.b16 %v3358, %v3358
      %v3391 = vpack.c.b16 %v3359, %v3359
      %v3392 = vpack.c.b16 %v3360, %v3360
      %v3393 = vpack.c.b16 %v3361, %v3361
      %v3394 = vpack.c.b16 %v3362, %v3362
      %v3395 = vpack.c.b16 %v3363, %v3363
      %vm3428 = vcmask 519168
      %3429 = vst.msk [vmem:[%s334] sm:$0xf] %vm3428, %v3364
      %3430 = vst.msk [vmem:[%s334 + $0x4] sm:$0xf] %vm3428, %v3365
      %3431 = vst.msk [vmem:[%s334 + $0x8] sm:$0xf] %vm3428, %v3366
      %3432 = vst.msk [vmem:[%s334 + $0xc] sm:$0xf] %vm3428, %v3367
      %3433 = vst.msk [vmem:[%s334 + $0x10] sm:$0xf] %vm3428, %v3368
      %3434 = vst.msk [vmem:[%s334 + $0x14] sm:$0xf] %vm3428, %v3369
      %3435 = vst.msk [vmem:[%s334 + $0x18] sm:$0xf] %vm3428, %v3370
      %3436 = vst.msk [vmem:[%s334 + $0x1c] sm:$0xf] %vm3428, %v3371
      %3437 = vst.msk [vmem:[%s334 + $0x20] sm:$0xf] %vm3428, %v3372
      %3438 = vst.msk [vmem:[%s334 + $0x24] sm:$0xf] %vm3428, %v3373
      %3439 = vst.msk [vmem:[%s334 + $0x28] sm:$0xf] %vm3428, %v3374
      %3440 = vst.msk [vmem:[%s334 + $0x2c] sm:$0xf] %vm3428, %v3375
      %3441 = vst.msk [vmem:[%s334 + $0x30] sm:$0xf] %vm3428, %v3376
      %3442 = vst.msk [vmem:[%s334 + $0x34] sm:$0xf] %vm3428, %v3377
      %3443 = vst.msk [vmem:[%s334 + $0x38] sm:$0xf] %vm3428, %v3378
      %3444 = vst.msk [vmem:[%s334 + $0x3c] sm:$0xf] %vm3428, %v3379
      %3445 = vst.msk [vmem:[%s334 + $0x40] sm:$0xf] %vm3428, %v3380
      %3446 = vst.msk [vmem:[%s334 + $0x44] sm:$0xf] %vm3428, %v3381
      %3447 = vst.msk [vmem:[%s334 + $0x48] sm:$0xf] %vm3428, %v3382
      %3448 = vst.msk [vmem:[%s334 + $0x4c] sm:$0xf] %vm3428, %v3383
      %3449 = vst.msk [vmem:[%s334 + $0x50] sm:$0xf] %vm3428, %v3384
      %3450 = vst.msk [vmem:[%s334 + $0x54] sm:$0xf] %vm3428, %v3385
      %3451 = vst.msk [vmem:[%s334 + $0x58] sm:$0xf] %vm3428, %v3386
      %3452 = vst.msk [vmem:[%s334 + $0x5c] sm:$0xf] %vm3428, %v3387
      %3453 = vst.msk [vmem:[%s334 + $0x60] sm:$0xf] %vm3428, %v3388
      %3454 = vst.msk [vmem:[%s334 + $0x64] sm:$0xf] %vm3428, %v3389
      %3455 = vst.msk [vmem:[%s334 + $0x68] sm:$0xf] %vm3428, %v3390
      %3456 = vst.msk [vmem:[%s334 + $0x6c] sm:$0xf] %vm3428, %v3391
      %3457 = vst.msk [vmem:[%s334 + $0x70] sm:$0xf] %vm3428, %v3392
      %3458 = vst.msk [vmem:[%s334 + $0x74] sm:$0xf] %vm3428, %v3393
      %3459 = vst.msk [vmem:[%s334 + $0x78] sm:$0xf] %vm3428, %v3394
      %3460 = vst.msk [vmem:[%s334 + $0x7c] sm:$0xf] %vm3428, %v3395
      %s3461 = smul.u32 32, %s20
      %p3462 = scmp.lt.s32.totalorder %s3461, 63
      %s3463 = scalar_select %p3462, %s3461, 63
      %s3464 = smul.addr %s3463, 4
      %s3465 = scalar_lea.vmem %s9, %s3464
      // Predicated region
      $region57: #{autoencoder_forward.1} parent=55 // pred_check
        %p3466 = pneg %p232
      $region58: #{autoencoder_forward.1} parent=55 // pred_check_branch
        %3468 = sbr.rel (%p3466) target = $region60
      $region59: #{autoencoder_forward.1} parent=55 // pred_region
        %s3469 = smul.u32 32, %s20
      $region60: #{autoencoder_forward.1} parent=55 // pred_fallthru
        _
    $region56: #{autoencoder_forward.1} parent=5 // pred_fallthru
      _
    %p3470 = scmp.le.s32.totalorder 2, %s15
    // Predicated region
    $region61: #{autoencoder_forward.1} parent=5 // pred_check
      %p3471 = pneg %p3470
    $region62: #{autoencoder_forward.1} parent=5 // pred_check_branch
      %3473 = sbr.rel (%p3471) target = $region64
    $region63: #{autoencoder_forward.1} parent=5 // pred_region
      %s3474 = ssub.s32 %s15, 2
      // Predicated region
      $region65: #{autoencoder_forward.1} parent=63 // pred_check
        %p3475 = pneg %p238
      $region66: #{autoencoder_forward.1} parent=63 // pred_check_branch
        %3477 = sbr.rel (%p3475) target = $region68
      $region67: #{autoencoder_forward.1} parent=63 // pred_region
        %s3478 = smul.u32 32, %s21
        %p3479 = scmp.lt.s32.totalorder %s3478, 63
        %s3480 = scalar_select %p3479, %s3478, 63
        %s3481 = smul.addr %s3480, 4
        %s3482 = scalar_lea.vmem %s9, %s3481
      $region68: #{autoencoder_forward.1} parent=63 // pred_fallthru
        _
    $region64: #{autoencoder_forward.1} parent=5 // pred_fallthru
      _
  $region6: #{autoencoder_forward.1} parent=0 // loop_footer
    %s19 = sadd.s32 1, %s15
  $region7: #{autoencoder_forward.1} parent=0 // loop_footer_branch
    %14 = sbr.rel target = $region3
  $region8: #{autoencoder_forward.1} parent=0 // loop_exit
    _

</llo_original>
